<compile_context>
chip_gen: v7x
topology: tpu7x:2x2x1
jax: 0.10.0
libtpu: 0.0.40
codegen_flags: <defaults>
</compile_context>

<pallas_src>
import functools

import jax
import jax.numpy as jnp
from jax.experimental import pallas as pl
from jax.experimental.pallas import tpu as pltpu


def _round_up(x, m):
    return (x + m - 1) // m * m


# ----------------------------- Kernel 1: RPN head -----------------------------
def rpn_head_kernel(x_ref, wconv_ref, bconv_ref, whead_ref, bhead_ref,
                    out_ref, acc_ref, *, tap_slices, tm):
    i = pl.program_id(0)
    acc_ref[...] = jnp.zeros_like(acc_ref)

    # 3x3 conv == sum over 9 taps of (tm, C) x (C, C) matmuls on row-shifted views.
    for t, (astart, rem) in enumerate(tap_slices):
        start = pl.multiple_of(i * tm + astart, 8)          # 8-aligned dynamic start
        chunk = x_ref[pl.ds(start, tm + 8), :]               # (tm+8, C) bf16
        xt = chunk[rem:rem + tm, :]                          # static sub-slice
        acc_ref[...] += jnp.dot(xt, wconv_ref[t],
                                preferred_element_type=jnp.float32)

    h = jnp.maximum(acc_ref[...] + bconv_ref[...], 0.0)      # conv bias + ReLU (f32)
    # fused 1x1 cls + bbox heads: single lane-dense (C, 128) matmul
    out_ref[...] = (jnp.dot(h.astype(jnp.bfloat16), whead_ref[...],
                            preferred_element_type=jnp.float32)
                    + bhead_ref[...])


def rpn_head(x_nhwc, w_conv, b_conv, w_cls, b_cls, w_box, b_box, *, tm=128):
    """x_nhwc: (N,H,W,C). Returns (cls (N,H,W,A), box (N,H,W,4A)) in f32."""
    N, H, W, C = x_nhwc.shape
    Hp, Wp = H + 2, W + 2
    A = w_cls.shape[1]
    n_head = A + w_box.shape[1]                 # 2 + 8 = 10
    HEAD = _round_up(n_head, 128)               # pad head weights to 128 lanes

    M_data = N * Hp * Wp                        # outputs computed at all padded positions
    M_out = _round_up(M_data, tm)
    off = _round_up(Wp + 1, 8)                  # zero rows before the data block
    max_astart = ((off + Wp + 1) // 8) * 8
    R_total = M_out + max_astart + 8            # total flattened rows (zero padded)

    # flattened, zero-padded feature rows (bf16); one row per padded pixel
    x_pad = jnp.pad(x_nhwc.astype(jnp.bfloat16), ((0, 0), (1, 1), (1, 1), (0, 0)))
    x_flat = jnp.zeros((R_total, C), jnp.bfloat16).at[off:off + M_data].set(
        x_pad.reshape(M_data, C))

    w9 = w_conv.astype(jnp.bfloat16).reshape(9, C, C)        # tap-major (ky,kx) weights
    w_head = jnp.zeros((C, HEAD), jnp.bfloat16).at[:, :n_head].set(
        jnp.concatenate([w_cls, w_box], axis=1).astype(jnp.bfloat16))
    b_head = jnp.zeros((1, HEAD), jnp.float32).at[:, :n_head].set(
        jnp.concatenate([b_cls, b_box], axis=1).astype(jnp.float32))

    # per-tap (aligned_start, remainder) relative to the output row block
    tap_slices = []
    for t in range(9):
        ky, kx = t // 3, t % 3
        d = (ky - 1) * Wp + (kx - 1)
        start = off + d
        astart = (start // 8) * 8
        tap_slices.append((astart, start - astart))
    tap_slices = tuple(tap_slices)

    kernel = functools.partial(rpn_head_kernel, tap_slices=tap_slices, tm=tm)
    out = pl.pallas_call(
        kernel,
        out_shape=jax.ShapeDtypeStruct((M_out, HEAD), jnp.float32),
        grid_spec=pltpu.PrefetchScalarGridSpec(
            num_scalar_prefetch=0,
            grid=(M_out // tm,),
            in_specs=[
                pl.BlockSpec((R_total, C), lambda i: (0, 0)),     # resident feature rows
                pl.BlockSpec((9, C, C), lambda i: (0, 0, 0)),     # 9 tap weights
                pl.BlockSpec((1, C), lambda i: (0, 0)),
                pl.BlockSpec((C, HEAD), lambda i: (0, 0)),        # fused cls|box weight
                pl.BlockSpec((1, HEAD), lambda i: (0, 0)),
            ],
            out_specs=pl.BlockSpec((tm, HEAD), lambda i: (i, 0)),
            scratch_shapes=[pltpu.VMEM((tm, C), jnp.float32)],
        ),
        compiler_params=pltpu.CompilerParams(
            dimension_semantics=("parallel",),
            vmem_limit_bytes=16 << 20),
    )(x_flat, w9, b_conv.astype(jnp.float32), w_head, b_head)

    # crop the padded-position grid back to the valid HxW outputs, split fused heads
    full = out[:M_data].reshape(N, Hp, Wp, HEAD)[:, 1:1 + H, 1:1 + W, :]
    return full[..., :A], full[..., A:n_head]


# ------------------- Kernel 2: RoI box head + box predictor -------------------
def roi_head_kernel(pooled_ref, w6_ref, b6_ref, w7_ref, b7_ref,
                    whead_ref, bhead_ref, out_ref, acc_ref):
    k = pl.program_id(0)

    @pl.when(k == 0)
    def _():
        acc_ref[...] = jnp.zeros_like(acc_ref)

    # fc6 partial product over this K tile (bf16 x bf16 -> f32 accumulator)
    acc_ref[...] += jnp.dot(pooled_ref[...], w6_ref[...],
                            preferred_element_type=jnp.float32)

    @pl.when(k == pl.num_programs(0) - 1)
    def _():
        h6 = jnp.maximum(acc_ref[...] + b6_ref[...], 0.0)                      # fc6 + ReLU
        h7 = jnp.maximum(jnp.dot(h6.astype(jnp.bfloat16), w7_ref[...],
                                 preferred_element_type=jnp.float32)
                         + b7_ref[...], 0.0)                                   # fc7 + ReLU
        # fused cls_score | bbox_pred: one lane-dense (1024, 128) matmul
        out_ref[...] = (jnp.dot(h7.astype(jnp.bfloat16), whead_ref[...],
                                preferred_element_type=jnp.float32)
                        + bhead_ref[...])


def roi_heads(pooled, w6, b6, w7, b7, w_cls, b_cls, w_box, b_box, *, tk=1792):
    R, K = pooled.shape
    REP = w6.shape[1]
    nc = w_cls.shape[1]
    n_head = nc + w_box.shape[1]                # 13 + 52 = 65
    HEAD = _round_up(n_head, 128)
    assert K % tk == 0

    pooled_bf = pooled.astype(jnp.bfloat16)
    w6_bf = w6.astype(jnp.bfloat16)
    w7_bf = w7.astype(jnp.bfloat16)
    w_head = jnp.zeros((REP, HEAD), jnp.bfloat16).at[:, :n_head].set(
        jnp.concatenate([w_cls, w_box], axis=1).astype(jnp.bfloat16))
    b_head = jnp.zeros((1, HEAD), jnp.float32).at[:, :n_head].set(
        jnp.concatenate([b_cls, b_box], axis=1).astype(jnp.float32))

    const2d = lambda shape: pl.BlockSpec(shape, lambda k: (0, 0))
    out = pl.pallas_call(
        roi_head_kernel,
        out_shape=jax.ShapeDtypeStruct((R, HEAD), jnp.float32),
        grid_spec=pltpu.PrefetchScalarGridSpec(
            num_scalar_prefetch=0,
            grid=(K // tk,),
            in_specs=[pl.BlockSpec((R, tk), lambda k: (0, k)),     # pooled feats, K-tiled
                      pl.BlockSpec((tk, REP), lambda k: (k, 0)),   # fc6 weight, K-tiled
                      const2d((1, REP)),
                      const2d((REP, REP)), const2d((1, REP)),
                      const2d((REP, HEAD)), const2d((1, HEAD))],
            out_specs=const2d((R, HEAD)),
            scratch_shapes=[pltpu.VMEM((R, REP), jnp.float32)],
        ),
        compiler_params=pltpu.CompilerParams(
            dimension_semantics=("arbitrary",),
            vmem_limit_bytes=32 << 20),
    )(pooled_bf, w6_bf, b6.astype(jnp.float32), w7_bf, b7.astype(jnp.float32),
      w_head, b_head)

    return out[:, :nc], out[:, nc:n_head]


# --------------------------------- glue / demo ---------------------------------
def im2col_3x3(x_nhwc):
    """(N,H,W,C) -> (N*H*W, 9*C); REFERENCE ONLY (the kernel does not use im2col)."""
    N, H, W, C = x_nhwc.shape
    xp = jnp.pad(x_nhwc, ((0, 0), (1, 1), (1, 1), (0, 0)))
    cols = [xp[:, ky:ky + H, kx:kx + W, :] for ky in range(3) for kx in range(3)]
    return jnp.concatenate(cols, axis=-1).reshape(N * H * W, 9 * C)


if __name__ == "__main__":
    key = jax.random.PRNGKey(0)
    ks = jax.random.split(key, 16)

    # --- module-implied sizes ---
    NUM_CLASSES = 12 + 1          # 13
    MAX_OBJS = 32                 # box_detections_per_img -> R RoIs
    NUM_ANCHORS = 2               # aspect_ratios (0.5, 1.0) per location, 1 size per level
    FPN_C = 256                   # FPN channel width
    REP = 1024                    # TwoMLPHead representation size == predictor in_features
    POOL_FEAT = FPN_C * 7 * 7     # 12544, fc6 input width
    N, H, W = 2, 16, 16           # small FPN level feature map

    f32 = jnp.float32
    bf16 = jnp.bfloat16
    # RPN head (torch: Conv2d(256,256,3,pad=1); Conv2d(256,A,1); Conv2d(256,4A,1))
    w_rpn_conv = jax.random.normal(ks[0], (9 * FPN_C, FPN_C), f32) / jnp.sqrt(9.0 * FPN_C)
    b_rpn_conv = jax.random.normal(ks[1], (1, FPN_C), f32) * 0.01
    w_rpn_cls = jax.random.normal(ks[2], (FPN_C, NUM_ANCHORS), f32) / jnp.sqrt(1.0 * FPN_C)
    b_rpn_cls = jax.random.normal(ks[3], (1, NUM_ANCHORS), f32) * 0.01
    w_rpn_box = jax.random.normal(ks[4], (FPN_C, 4 * NUM_ANCHORS), f32) / jnp.sqrt(1.0 * FPN_C)
    b_rpn_box = jax.random.normal(ks[5], (1, 4 * NUM_ANCHORS), f32) * 0.01
    # RoI box head (fc6, fc7) + FastRCNNPredictor (cls_score, bbox_pred)
    w6 = jax.random.normal(ks[6], (POOL_FEAT, REP), f32) / jnp.sqrt(1.0 * POOL_FEAT)
    b6 = jax.random.normal(ks[7], (1, REP), f32) * 0.01
    w7 = jax.random.normal(ks[8], (REP, REP), f32) / jnp.sqrt(1.0 * REP)
    b7 = jax.random.normal(ks[9], (1, REP), f32) * 0.01
    w_cls = jax.random.normal(ks[10], (REP, NUM_CLASSES), f32) / jnp.sqrt(1.0 * REP)
    b_cls = jax.random.normal(ks[11], (1, NUM_CLASSES), f32) * 0.01
    w_box = jax.random.normal(ks[12], (REP, 4 * NUM_CLASSES), f32) / jnp.sqrt(1.0 * REP)
    b_box = jax.random.normal(ks[13], (1, 4 * NUM_CLASSES), f32) * 0.01

    # --- inputs ---
    x_nchw = jax.random.normal(ks[14], (N, FPN_C, H, W), f32)       # one FPN level (NCHW)
    pooled = jax.random.normal(ks[15], (MAX_OBJS, POOL_FEAT), f32)  # RoIAlign-pooled, flat
    # TODO(synk): in a real deployment batch more RoIs (R -> 128+) to amortize the
    # fc6 weight stream; R=32 kept here to match box_detections_per_img.

    # ---- RPN head via Pallas ----
    x_nhwc = jnp.transpose(x_nchw, (0, 2, 3, 1))
    rpn_cls_nhwc, rpn_box_nhwc = rpn_head(
        x_nhwc, w_rpn_conv, b_rpn_conv, w_rpn_cls, b_rpn_cls, w_rpn_box, b_rpn_box)
    rpn_cls = jnp.transpose(rpn_cls_nhwc, (0, 3, 1, 2))
    rpn_box = jnp.transpose(rpn_box_nhwc, (0, 3, 1, 2))

    # ---- RoI heads via Pallas ----
    cls_logits, bbox_deltas = roi_heads(pooled, w6, b6, w7, b7, w_cls, b_cls, w_box, b_box)

    jax.block_until_ready((rpn_cls, rpn_box, cls_logits, bbox_deltas))

    # ---- reference check (pure JAX, bf16 operands / f32 accumulation like the kernels) ----
    xb = x_nhwc.astype(bf16)
    patches_ref = im2col_3x3(xb)
    h_flat = jnp.maximum(
        jnp.dot(patches_ref, w_rpn_conv.astype(bf16), preferred_element_type=f32)
        + b_rpn_conv, 0.0)
    cls_flat_ref = jnp.dot(h_flat.astype(bf16), w_rpn_cls.astype(bf16),
                           preferred_element_type=f32) + b_rpn_cls
    box_flat_ref = jnp.dot(h_flat.astype(bf16), w_rpn_box.astype(bf16),
                           preferred_element_type=f32) + b_rpn_box
    rpn_cls_ref = jnp.transpose(cls_flat_ref.reshape(N, H, W, NUM_ANCHORS), (0, 3, 1, 2))
    rpn_box_ref = jnp.transpose(box_flat_ref.reshape(N, H, W, 4 * NUM_ANCHORS), (0, 3, 1, 2))

    pb = pooled.astype(bf16)
    h6_ref = jnp.maximum(jnp.dot(pb, w6.astype(bf16), preferred_element_type=f32) + b6, 0.0)
    h7_ref = jnp.maximum(jnp.dot(h6_ref.astype(bf16), w7.astype(bf16),
                                 preferred_element_type=f32) + b7, 0.0)
    cls_ref = jnp.dot(h7_ref.astype(bf16), w_cls.astype(bf16),
                      preferred_element_type=f32) + b_cls
    box_ref = jnp.dot(h7_ref.astype(bf16), w_box.astype(bf16),
                      preferred_element_type=f32) + b_box

    assert jnp.allclose(rpn_cls, rpn_cls_ref, rtol=2e-3, atol=2e-3)
    assert jnp.allclose(rpn_box, rpn_box_ref, rtol=2e-3, atol=2e-3)
    assert jnp.allclose(cls_logits, cls_ref, rtol=2e-3, atol=2e-3)
    assert jnp.allclose(bbox_deltas, box_ref, rtol=2e-3, atol=2e-3)

    print("KERNEL_OK")
</pallas_src>

<mosaic_0001>
module attributes {stable_mosaic.version = 11 : i64} {
  func.func @rpn_head_kernel(%arg0: i32, %arg1: memref<816x256xbf16, #tpu.memory_space<vmem>>, %arg2: memref<9x256x256xbf16, #tpu.memory_space<vmem>>, %arg3: memref<1x256xf32, #tpu.memory_space<vmem>>, %arg4: memref<256x128xbf16, #tpu.memory_space<vmem>>, %arg5: memref<1x128xf32, #tpu.memory_space<vmem>>, %arg6: memref<128x128xf32, #tpu.memory_space<vmem>>, %arg7: memref<128x256xf32, #tpu.memory_space<vmem>>) attributes {dimension_semantics = [#tpu.dimension_semantics<parallel>], iteration_bounds = array<i64: 6>, scalar_prefetch = 0 : i64, scratch_operands = 1 : i64, tpu.core_type = #tpu.core_type<tc>, window_params = [{pipeline_mode = #tpu.pipeline_mode<synchronous>, transform_indices = @transform_0, window_bounds = array<i64: 816, 256>}, {pipeline_mode = #tpu.pipeline_mode<synchronous>, transform_indices = @transform_1, window_bounds = array<i64: 9, 256, 256>}, {pipeline_mode = #tpu.pipeline_mode<synchronous>, transform_indices = @transform_2, window_bounds = array<i64: 1, 256>}, {pipeline_mode = #tpu.pipeline_mode<synchronous>, transform_indices = @transform_3, window_bounds = array<i64: 256, 128>}, {pipeline_mode = #tpu.pipeline_mode<synchronous>, transform_indices = @transform_4, window_bounds = array<i64: 1, 128>}, {transform_indices = @transform_5, window_bounds = array<i64: 128, 128>}]} {
    %cst = arith.constant 0.000000e+00 : f32
    %0 = vector.broadcast %cst : f32 to vector<128x256xf32>
    %c0 = arith.constant 0 : index
    %c0_0 = arith.constant 0 : index
    %1 = vector.load %arg7[%c0, %c0_0] : memref<128x256xf32, #tpu.memory_space<vmem>>, vector<128x256xf32>
    tpu.vector_store %arg7[%c0, %c0_0], %0 {strides = array<i32>} : memref<128x256xf32, #tpu.memory_space<vmem>>, vector<128x256xf32>,
    %c128_i32 = arith.constant 128 : i32
    %2 = arith.muli %arg0, %c128_i32 : i32
    %c0_i32 = arith.constant 0 : i32
    %3 = arith.addi %2, %c0_i32 : i32
    %4 = tpu.assume_multiple %3, 8 : i32
    %5 = arith.index_cast %4 : i32 to index
    %c0_1 = arith.constant 0 : index
    %6 = vector.load %arg1[%5, %c0_1] : memref<816x256xbf16, #tpu.memory_space<vmem>>, vector<136x256xbf16>
    %7 = vector.extract_strided_slice %6 {offsets = [5, 0], sizes = [128, 256], strides = [1, 1]} : vector<136x256xbf16> to vector<128x256xbf16>
    %c0_2 = arith.constant 0 : index
    %c0_3 = arith.constant 0 : index
    %8 = vector.load %arg7[%c0_2, %c0_3] : memref<128x256xf32, #tpu.memory_space<vmem>>, vector<128x256xf32>
    %c0_4 = arith.constant 0 : index
    %c0_5 = arith.constant 0 : index
    %c0_6 = arith.constant 0 : index
    %9 = vector.load %arg2[%c0_4, %c0_5, %c0_6] : memref<9x256x256xbf16, #tpu.memory_space<vmem>>, vector<1x256x256xbf16>
    %10 = vector.shape_cast %9 : vector<1x256x256xbf16> to vector<256x256xbf16>
    %cst_7 = arith.constant dense<0.000000e+00> : vector<128x256xf32>
    %11 = tpu.matmul %7, %10, %cst_7 {dimension_numbers = #tpu.dot_dimension_numbers<[1], [0], [0], [1], [0, 0, 1, 1], [], []>} : vector<128x256xbf16>, vector<256x256xbf16>, vector<128x256xf32> -> vector<128x256xf32>
    %12 = arith.addf %8, %11 : vector<128x256xf32>
    %c0_8 = arith.constant 0 : index
    %c0_9 = arith.constant 0 : index
    %13 = vector.load %arg7[%c0_8, %c0_9] : memref<128x256xf32, #tpu.memory_space<vmem>>, vector<128x256xf32>
    tpu.vector_store %arg7[%c0_8, %c0_9], %12 {strides = array<i32>} : memref<128x256xf32, #tpu.memory_space<vmem>>, vector<128x256xf32>,
    %c128_i32_10 = arith.constant 128 : i32
    %14 = arith.muli %arg0, %c128_i32_10 : i32
    %c0_i32_11 = arith.constant 0 : i32
    %15 = arith.addi %14, %c0_i32_11 : i32
    %16 = tpu.assume_multiple %15, 8 : i32
    %17 = arith.index_cast %16 : i32 to index
    %c0_12 = arith.constant 0 : index
    %18 = vector.load %arg1[%17, %c0_12] : memref<816x256xbf16, #tpu.memory_space<vmem>>, vector<136x256xbf16>
    %19 = vector.extract_strided_slice %18 {offsets = [6, 0], sizes = [128, 256], strides = [1, 1]} : vector<136x256xbf16> to vector<128x256xbf16>
    %c0_13 = arith.constant 0 : index
    %c0_14 = arith.constant 0 : index
    %20 = vector.load %arg7[%c0_13, %c0_14] : memref<128x256xf32, #tpu.memory_space<vmem>>, vector<128x256xf32>
    %c1 = arith.constant 1 : index
    %c0_15 = arith.constant 0 : index
    %c0_16 = arith.constant 0 : index
    %21 = vector.load %arg2[%c1, %c0_15, %c0_16] : memref<9x256x256xbf16, #tpu.memory_space<vmem>>, vector<1x256x256xbf16>
    %22 = vector.shape_cast %21 : vector<1x256x256xbf16> to vector<256x256xbf16>
    %cst_17 = arith.constant dense<0.000000e+00> : vector<128x256xf32>
    %23 = tpu.matmul %19, %22, %cst_17 {dimension_numbers = #tpu.dot_dimension_numbers<[1], [0], [0], [1], [0, 0, 1, 1], [], []>} : vector<128x256xbf16>, vector<256x256xbf16>, vector<128x256xf32> -> vector<128x256xf32>
    %24 = arith.addf %20, %23 : vector<128x256xf32>
    %c0_18 = arith.constant 0 : index
    %c0_19 = arith.constant 0 : index
    %25 = vector.load %arg7[%c0_18, %c0_19] : memref<128x256xf32, #tpu.memory_space<vmem>>, vector<128x256xf32>
    tpu.vector_store %arg7[%c0_18, %c0_19], %24 {strides = array<i32>} : memref<128x256xf32, #tpu.memory_space<vmem>>, vector<128x256xf32>,
    %c128_i32_20 = arith.constant 128 : i32
    %26 = arith.muli %arg0, %c128_i32_20 : i32
    %c0_i32_21 = arith.constant 0 : i32
    %27 = arith.addi %26, %c0_i32_21 : i32
    %28 = tpu.assume_multiple %27, 8 : i32
    %29 = arith.index_cast %28 : i32 to index
    %c0_22 = arith.constant 0 : index
    %30 = vector.load %arg1[%29, %c0_22] : memref<816x256xbf16, #tpu.memory_space<vmem>>, vector<136x256xbf16>
    %31 = vector.extract_strided_slice %30 {offsets = [7, 0], sizes = [128, 256], strides = [1, 1]} : vector<136x256xbf16> to vector<128x256xbf16>
    %c0_23 = arith.constant 0 : index
    %c0_24 = arith.constant 0 : index
    %32 = vector.load %arg7[%c0_23, %c0_24] : memref<128x256xf32, #tpu.memory_space<vmem>>, vector<128x256xf32>
    %c2 = arith.constant 2 : index
    %c0_25 = arith.constant 0 : index
    %c0_26 = arith.constant 0 : index
    %33 = vector.load %arg2[%c2, %c0_25, %c0_26] : memref<9x256x256xbf16, #tpu.memory_space<vmem>>, vector<1x256x256xbf16>
    %34 = vector.shape_cast %33 : vector<1x256x256xbf16> to vector<256x256xbf16>
    %cst_27 = arith.constant dense<0.000000e+00> : vector<128x256xf32>
    %35 = tpu.matmul %31, %34, %cst_27 {dimension_numbers = #tpu.dot_dimension_numbers<[1], [0], [0], [1], [0, 0, 1, 1], [], []>} : vector<128x256xbf16>, vector<256x256xbf16>, vector<128x256xf32> -> vector<128x256xf32>
    %36 = arith.addf %32, %35 : vector<128x256xf32>
    %c0_28 = arith.constant 0 : index
    %c0_29 = arith.constant 0 : index
    %37 = vector.load %arg7[%c0_28, %c0_29] : memref<128x256xf32, #tpu.memory_space<vmem>>, vector<128x256xf32>
    tpu.vector_store %arg7[%c0_28, %c0_29], %36 {strides = array<i32>} : memref<128x256xf32, #tpu.memory_space<vmem>>, vector<128x256xf32>,
    %c128_i32_30 = arith.constant 128 : i32
    %38 = arith.muli %arg0, %c128_i32_30 : i32
    %c16_i32 = arith.constant 16 : i32
    %39 = arith.addi %38, %c16_i32 : i32
    %40 = tpu.assume_multiple %39, 8 : i32
    %41 = arith.index_cast %40 : i32 to index
    %c0_31 = arith.constant 0 : index
    %42 = vector.load %arg1[%41, %c0_31] : memref<816x256xbf16, #tpu.memory_space<vmem>>, vector<136x256xbf16>
    %43 = vector.extract_strided_slice %42 {offsets = [7, 0], sizes = [128, 256], strides = [1, 1]} : vector<136x256xbf16> to vector<128x256xbf16>
    %c0_32 = arith.constant 0 : index
    %c0_33 = arith.constant 0 : index
    %44 = vector.load %arg7[%c0_32, %c0_33] : memref<128x256xf32, #tpu.memory_space<vmem>>, vector<128x256xf32>
    %c3 = arith.constant 3 : index
    %c0_34 = arith.constant 0 : index
    %c0_35 = arith.constant 0 : index
    %45 = vector.load %arg2[%c3, %c0_34, %c0_35] : memref<9x256x256xbf16, #tpu.memory_space<vmem>>, vector<1x256x256xbf16>
    %46 = vector.shape_cast %45 : vector<1x256x256xbf16> to vector<256x256xbf16>
    %cst_36 = arith.constant dense<0.000000e+00> : vector<128x256xf32>
    %47 = tpu.matmul %43, %46, %cst_36 {dimension_numbers = #tpu.dot_dimension_numbers<[1], [0], [0], [1], [0, 0, 1, 1], [], []>} : vector<128x256xbf16>, vector<256x256xbf16>, vector<128x256xf32> -> vector<128x256xf32>
    %48 = arith.addf %44, %47 : vector<128x256xf32>
    %c0_37 = arith.constant 0 : index
    %c0_38 = arith.constant 0 : index
    %49 = vector.load %arg7[%c0_37, %c0_38] : memref<128x256xf32, #tpu.memory_space<vmem>>, vector<128x256xf32>
    tpu.vector_store %arg7[%c0_37, %c0_38], %48 {strides = array<i32>} : memref<128x256xf32, #tpu.memory_space<vmem>>, vector<128x256xf32>,
    %c128_i32_39 = arith.constant 128 : i32
    %50 = arith.muli %arg0, %c128_i32_39 : i32
    %c24_i32 = arith.constant 24 : i32
    %51 = arith.addi %50, %c24_i32 : i32
    %52 = tpu.assume_multiple %51, 8 : i32
    %53 = arith.index_cast %52 : i32 to index
    %c0_40 = arith.constant 0 : index
    %54 = vector.load %arg1[%53, %c0_40] : memref<816x256xbf16, #tpu.memory_space<vmem>>, vector<136x256xbf16>
    %55 = vector.extract_strided_slice %54 {offsets = [0, 0], sizes = [128, 256], strides = [1, 1]} : vector<136x256xbf16> to vector<128x256xbf16>
    %c0_41 = arith.constant 0 : index
    %c0_42 = arith.constant 0 : index
    %56 = vector.load %arg7[%c0_41, %c0_42] : memref<128x256xf32, #tpu.memory_space<vmem>>, vector<128x256xf32>
    %c4 = arith.constant 4 : index
    %c0_43 = arith.constant 0 : index
    %c0_44 = arith.constant 0 : index
    %57 = vector.load %arg2[%c4, %c0_43, %c0_44] : memref<9x256x256xbf16, #tpu.memory_space<vmem>>, vector<1x256x256xbf16>
    %58 = vector.shape_cast %57 : vector<1x256x256xbf16> to vector<256x256xbf16>
    %cst_45 = arith.constant dense<0.000000e+00> : vector<128x256xf32>
    %59 = tpu.matmul %55, %58, %cst_45 {dimension_numbers = #tpu.dot_dimension_numbers<[1], [0], [0], [1], [0, 0, 1, 1], [], []>} : vector<128x256xbf16>, vector<256x256xbf16>, vector<128x256xf32> -> vector<128x256xf32>
    %60 = arith.addf %56, %59 : vector<128x256xf32>
    %c0_46 = arith.constant 0 : index
    %c0_47 = arith.constant 0 : index
    %61 = vector.load %arg7[%c0_46, %c0_47] : memref<128x256xf32, #tpu.memory_space<vmem>>, vector<128x256xf32>
    tpu.vector_store %arg7[%c0_46, %c0_47], %60 {strides = array<i32>} : memref<128x256xf32, #tpu.memory_space<vmem>>, vector<128x256xf32>,
    %c128_i32_48 = arith.constant 128 : i32
    %62 = arith.muli %arg0, %c128_i32_48 : i32
    %c24_i32_49 = arith.constant 24 : i32
    %63 = arith.addi %62, %c24_i32_49 : i32
    %64 = tpu.assume_multiple %63, 8 : i32
    %65 = arith.index_cast %64 : i32 to index
    %c0_50 = arith.constant 0 : index
    %66 = vector.load %arg1[%65, %c0_50] : memref<816x256xbf16, #tpu.memory_space<vmem>>, vector<136x256xbf16>
    %67 = vector.extract_strided_slice %66 {offsets = [1, 0], sizes = [128, 256], strides = [1, 1]} : vector<136x256xbf16> to vector<128x256xbf16>
    %c0_51 = arith.constant 0 : index
    %c0_52 = arith.constant 0 : index
    %68 = vector.load %arg7[%c0_51, %c0_52] : memref<128x256xf32, #tpu.memory_space<vmem>>, vector<128x256xf32>
    %c5 = arith.constant 5 : index
    %c0_53 = arith.constant 0 : index
    %c0_54 = arith.constant 0 : index
    %69 = vector.load %arg2[%c5, %c0_53, %c0_54] : memref<9x256x256xbf16, #tpu.memory_space<vmem>>, vector<1x256x256xbf16>
    %70 = vector.shape_cast %69 : vector<1x256x256xbf16> to vector<256x256xbf16>
    %cst_55 = arith.constant dense<0.000000e+00> : vector<128x256xf32>
    %71 = tpu.matmul %67, %70, %cst_55 {dimension_numbers = #tpu.dot_dimension_numbers<[1], [0], [0], [1], [0, 0, 1, 1], [], []>} : vector<128x256xbf16>, vector<256x256xbf16>, vector<128x256xf32> -> vector<128x256xf32>
    %72 = arith.addf %68, %71 : vector<128x256xf32>
    %c0_56 = arith.constant 0 : index
    %c0_57 = arith.constant 0 : index
    %73 = vector.load %arg7[%c0_56, %c0_57] : memref<128x256xf32, #tpu.memory_space<vmem>>, vector<128x256xf32>
    tpu.vector_store %arg7[%c0_56, %c0_57], %72 {strides = array<i32>} : memref<128x256xf32, #tpu.memory_space<vmem>>, vector<128x256xf32>,
    %c128_i32_58 = arith.constant 128 : i32
    %74 = arith.muli %arg0, %c128_i32_58 : i32
    %c40_i32 = arith.constant 40 : i32
    %75 = arith.addi %74, %c40_i32 : i32
    %76 = tpu.assume_multiple %75, 8 : i32
    %77 = arith.index_cast %76 : i32 to index
    %c0_59 = arith.constant 0 : index
    %78 = vector.load %arg1[%77, %c0_59] : memref<816x256xbf16, #tpu.memory_space<vmem>>, vector<136x256xbf16>
    %79 = vector.extract_strided_slice %78 {offsets = [1, 0], sizes = [128, 256], strides = [1, 1]} : vector<136x256xbf16> to vector<128x256xbf16>
    %c0_60 = arith.constant 0 : index
    %c0_61 = arith.constant 0 : index
    %80 = vector.load %arg7[%c0_60, %c0_61] : memref<128x256xf32, #tpu.memory_space<vmem>>, vector<128x256xf32>
    %c6 = arith.constant 6 : index
    %c0_62 = arith.constant 0 : index
    %c0_63 = arith.constant 0 : index
    %81 = vector.load %arg2[%c6, %c0_62, %c0_63] : memref<9x256x256xbf16, #tpu.memory_space<vmem>>, vector<1x256x256xbf16>
    %82 = vector.shape_cast %81 : vector<1x256x256xbf16> to vector<256x256xbf16>
    %cst_64 = arith.constant dense<0.000000e+00> : vector<128x256xf32>
    %83 = tpu.matmul %79, %82, %cst_64 {dimension_numbers = #tpu.dot_dimension_numbers<[1], [0], [0], [1], [0, 0, 1, 1], [], []>} : vector<128x256xbf16>, vector<256x256xbf16>, vector<128x256xf32> -> vector<128x256xf32>
    %84 = arith.addf %80, %83 : vector<128x256xf32>
    %c0_65 = arith.constant 0 : index
    %c0_66 = arith.constant 0 : index
    %85 = vector.load %arg7[%c0_65, %c0_66] : memref<128x256xf32, #tpu.memory_space<vmem>>, vector<128x256xf32>
    tpu.vector_store %arg7[%c0_65, %c0_66], %84 {strides = array<i32>} : memref<128x256xf32, #tpu.memory_space<vmem>>, vector<128x256xf32>,
    %c128_i32_67 = arith.constant 128 : i32
    %86 = arith.muli %arg0, %c128_i32_67 : i32
    %c40_i32_68 = arith.constant 40 : i32
    %87 = arith.addi %86, %c40_i32_68 : i32
    %88 = tpu.assume_multiple %87, 8 : i32
    %89 = arith.index_cast %88 : i32 to index
    %c0_69 = arith.constant 0 : index
    %90 = vector.load %arg1[%89, %c0_69] : memref<816x256xbf16, #tpu.memory_space<vmem>>, vector<136x256xbf16>
    %91 = vector.extract_strided_slice %90 {offsets = [2, 0], sizes = [128, 256], strides = [1, 1]} : vector<136x256xbf16> to vector<128x256xbf16>
    %c0_70 = arith.constant 0 : index
    %c0_71 = arith.constant 0 : index
    %92 = vector.load %arg7[%c0_70, %c0_71] : memref<128x256xf32, #tpu.memory_space<vmem>>, vector<128x256xf32>
    %c7 = arith.constant 7 : index
    %c0_72 = arith.constant 0 : index
    %c0_73 = arith.constant 0 : index
    %93 = vector.load %arg2[%c7, %c0_72, %c0_73] : memref<9x256x256xbf16, #tpu.memory_space<vmem>>, vector<1x256x256xbf16>
    %94 = vector.shape_cast %93 : vector<1x256x256xbf16> to vector<256x256xbf16>
    %cst_74 = arith.constant dense<0.000000e+00> : vector<128x256xf32>
    %95 = tpu.matmul %91, %94, %cst_74 {dimension_numbers = #tpu.dot_dimension_numbers<[1], [0], [0], [1], [0, 0, 1, 1], [], []>} : vector<128x256xbf16>, vector<256x256xbf16>, vector<128x256xf32> -> vector<128x256xf32>
    %96 = arith.addf %92, %95 : vector<128x256xf32>
    %c0_75 = arith.constant 0 : index
    %c0_76 = arith.constant 0 : index
    %97 = vector.load %arg7[%c0_75, %c0_76] : memref<128x256xf32, #tpu.memory_space<vmem>>, vector<128x256xf32>
    tpu.vector_store %arg7[%c0_75, %c0_76], %96 {strides = array<i32>} : memref<128x256xf32, #tpu.memory_space<vmem>>, vector<128x256xf32>,
    %c128_i32_77 = arith.constant 128 : i32
    %98 = arith.muli %arg0, %c128_i32_77 : i32
    %c40_i32_78 = arith.constant 40 : i32
    %99 = arith.addi %98, %c40_i32_78 : i32
    %100 = tpu.assume_multiple %99, 8 : i32
    %101 = arith.index_cast %100 : i32 to index
    %c0_79 = arith.constant 0 : index
    %102 = vector.load %arg1[%101, %c0_79] : memref<816x256xbf16, #tpu.memory_space<vmem>>, vector<136x256xbf16>
    %103 = vector.extract_strided_slice %102 {offsets = [3, 0], sizes = [128, 256], strides = [1, 1]} : vector<136x256xbf16> to vector<128x256xbf16>
    %c0_80 = arith.constant 0 : index
    %c0_81 = arith.constant 0 : index
    %104 = vector.load %arg7[%c0_80, %c0_81] : memref<128x256xf32, #tpu.memory_space<vmem>>, vector<128x256xf32>
    %c8 = arith.constant 8 : index
    %c0_82 = arith.constant 0 : index
    %c0_83 = arith.constant 0 : index
    %105 = vector.load %arg2[%c8, %c0_82, %c0_83] : memref<9x256x256xbf16, #tpu.memory_space<vmem>>, vector<1x256x256xbf16>
    %106 = vector.shape_cast %105 : vector<1x256x256xbf16> to vector<256x256xbf16>
    %cst_84 = arith.constant dense<0.000000e+00> : vector<128x256xf32>
    %107 = tpu.matmul %103, %106, %cst_84 {dimension_numbers = #tpu.dot_dimension_numbers<[1], [0], [0], [1], [0, 0, 1, 1], [], []>} : vector<128x256xbf16>, vector<256x256xbf16>, vector<128x256xf32> -> vector<128x256xf32>
    %108 = arith.addf %104, %107 : vector<128x256xf32>
    %c0_85 = arith.constant 0 : index
    %c0_86 = arith.constant 0 : index
    %109 = vector.load %arg7[%c0_85, %c0_86] : memref<128x256xf32, #tpu.memory_space<vmem>>, vector<128x256xf32>
    tpu.vector_store %arg7[%c0_85, %c0_86], %108 {strides = array<i32>} : memref<128x256xf32, #tpu.memory_space<vmem>>, vector<128x256xf32>,
    %c0_87 = arith.constant 0 : index
    %c0_88 = arith.constant 0 : index
    %110 = vector.load %arg7[%c0_87, %c0_88] : memref<128x256xf32, #tpu.memory_space<vmem>>, vector<128x256xf32>
    %c0_89 = arith.constant 0 : index
    %c0_90 = arith.constant 0 : index
    %111 = vector.load %arg3[%c0_89, %c0_90] : memref<1x256xf32, #tpu.memory_space<vmem>>, vector<1x256xf32>
    %112 = vector.broadcast %111 : vector<1x256xf32> to vector<128x256xf32>
    %113 = arith.addf %110, %112 : vector<128x256xf32>
    %cst_91 = arith.constant 0.000000e+00 : f32
    %114 = vector.broadcast %cst_91 : f32 to vector<128x256xf32>
    %115 = arith.maximumf %113, %114 : vector<128x256xf32>
    %116 = arith.truncf %115 : vector<128x256xf32> to vector<128x256xbf16>
    %c0_92 = arith.constant 0 : index
    %c0_93 = arith.constant 0 : index
    %117 = vector.load %arg4[%c0_92, %c0_93] : memref<256x128xbf16, #tpu.memory_space<vmem>>, vector<256x128xbf16>
    %cst_94 = arith.constant dense<0.000000e+00> : vector<128x128xf32>
    %118 = tpu.matmul %116, %117, %cst_94 {dimension_numbers = #tpu.dot_dimension_numbers<[1], [0], [0], [1], [0, 0, 1, 1], [], []>} : vector<128x256xbf16>, vector<256x128xbf16>, vector<128x128xf32> -> vector<128x128xf32>
    %c0_95 = arith.constant 0 : index
    %c0_96 = arith.constant 0 : index
    %119 = vector.load %arg5[%c0_95, %c0_96] : memref<1x128xf32, #tpu.memory_space<vmem>>, vector<1x128xf32>
    %120 = vector.broadcast %119 : vector<1x128xf32> to vector<128x128xf32>
    %121 = arith.addf %118, %120 : vector<128x128xf32>
    %c0_97 = arith.constant 0 : index
    %c0_98 = arith.constant 0 : index
    %122 = vector.load %arg6[%c0_97, %c0_98] : memref<128x128xf32, #tpu.memory_space<vmem>>, vector<128x128xf32>
    tpu.vector_store %arg6[%c0_97, %c0_98], %121 {strides = array<i32>} : memref<128x128xf32, #tpu.memory_space<vmem>>, vector<128x128xf32>,
    return
  }
  func.func @transform_0(%arg0: i32) -> (i32, i32) {
    %c0_i32 = arith.constant 0 : i32
    %c0_i32_0 = arith.constant 0 : i32
    %c0_i32_1 = arith.constant 0 : i32
    return %c0_i32, %c0_i32_0 : i32, i32
  }
  func.func @transform_1(%arg0: i32) -> (i32, i32, i32) {
    %c0_i32 = arith.constant 0 : i32
    %c0_i32_0 = arith.constant 0 : i32
    %c0_i32_1 = arith.constant 0 : i32
    %c0_i32_2 = arith.constant 0 : i32
    return %c0_i32, %c0_i32_0, %c0_i32_1 : i32, i32, i32
  }
  func.func @transform_2(%arg0: i32) -> (i32, i32) {
    %c0_i32 = arith.constant 0 : i32
    %c0_i32_0 = arith.constant 0 : i32
    %c0_i32_1 = arith.constant 0 : i32
    return %c0_i32, %c0_i32_0 : i32, i32
  }
  func.func @transform_3(%arg0: i32) -> (i32, i32) {
    %c0_i32 = arith.constant 0 : i32
    %c0_i32_0 = arith.constant 0 : i32
    %c0_i32_1 = arith.constant 0 : i32
    return %c0_i32, %c0_i32_0 : i32, i32
  }
  func.func @transform_4(%arg0: i32) -> (i32, i32) {
    %c0_i32 = arith.constant 0 : i32
    %c0_i32_0 = arith.constant 0 : i32
    %c0_i32_1 = arith.constant 0 : i32
    return %c0_i32, %c0_i32_0 : i32, i32
  }
  func.func @transform_5(%arg0: i32) -> (i32, i32) {
    %c0_i32 = arith.constant 0 : i32
    %c0_i32_0 = arith.constant 0 : i32
    return %arg0, %c0_i32 : i32, i32
  }
}

</mosaic_0001>

<llo_original>
// kernel: tpu_custom_call.1
$region0: #{tpu_custom_call.1}
  #allocation0 [shape = 'u32[]', space=smem, size = 0x4, offset = 0x4, fixed_abs, tag = 'smem constant byte address 0x4 - core index']
  #allocation1 [shape = 'u32[144,128]{1,0:T(1,128)}', space=vmem, size = 0x12000, scoped, tag = 'internal scratch']
  #allocation2 [shape = 'f32[128,256]{1,0:T(8,128)}', space=vmem, size = 0x20000, scoped, tag = 'scratch operand']
  %s0 = inlined_call_operand.hbm [shape: bf16[816,256], index: 0, kind: input, shape index: {}]
  %s1 = inlined_call_operand.hbm [shape: bf16[9,256,256], index: 1, kind: input, shape index: {}]
  %s2 = inlined_call_operand.hbm [shape: f32[1,256], index: 2, kind: input, shape index: {}]
  %s3 = inlined_call_operand.hbm [shape: bf16[256,128], index: 3, kind: input, shape index: {}]
  %s4 = inlined_call_operand.hbm [shape: f32[1,128], index: 4, kind: input, shape index: {}]
  %s5 = inlined_call_operand.hbm [shape: f32[768,128], index: 5, kind: output, shape index: {}]
  %s6 = sld [smem:[#allocation0]]
  $region73: #{tpu_custom_call.1} parent=0
    _
  %s8 = ssub.s32 1, %s6
  %s9 = scalar_select 0, %s8, %s6
  $region1: #{tpu_custom_call.1} parent=0
    #allocation3 [shape = 'u8[417792]{0}', space=vmem, size = 0x66000, scoped, tag = 'input window, operand 0, single buffered']
    #allocation4 [shape = 's32[2]{0}', space=sflag, size = 0x8, scoped, tag = 'scoped memory for tpu_custom_call.1']
    #allocation5 [shape = 's32[2]{0}', space=sflag, size = 0x8, scoped, tag = 'scoped memory for tpu_custom_call.1']
    #allocation6 [shape = 'u8[1179648]{0}', space=vmem, size = 0x120000, scoped, tag = 'input window, operand 1, single buffered']
    #allocation7 [shape = 's32[1]{0}', space=sflag, size = 0x4, scoped, tag = 'scoped memory for tpu_custom_call.1']
    #allocation8 [shape = 'u8[1024]{0}', space=vmem, size = 0x400, scoped, tag = 'input window, operand 2, single buffered']
    #allocation9 [shape = 'u8[65536]{0}', space=vmem, size = 0x10000, scoped, tag = 'input window, operand 3, single buffered']
    #allocation10 [shape = 's32[1]{0}', space=sflag, size = 0x4, scoped, tag = 'scoped memory for tpu_custom_call.1']
    #allocation11 [shape = 'u8[512]{0}', space=vmem, size = 0x400, scoped, tag = 'input window, operand 4, single buffered']
    #allocation12 [shape = 'u8[131072]{0}', space=vmem, size = 0x20000, scoped, tag = 'output window, operand 0']
    %10 = vsyncpa [#allocation4], 0
    %11 = vsyncpa [#allocation7], 0
    %12 = vsyncpa [#allocation10], 0
    %13 = vsyncpa [#allocation5], 0
    %s14 = scalar_lea.sflag [#allocation5], 1
    %15 = vsyncpa %s14, 0
    loop: start=0, step=1, limit=8
    $region2: #{tpu_custom_call.1} parent=1 // loop_pre_header
      _
    $region3: #{tpu_custom_call.1} parent=1 // loop_header
      %s17 = sphi 0, %s21
      %p18 = scmp.ge.s32.totalorder %s17, 8
      %s25 = sphi 0, %s25
      %s27 = sphi 0, %s25
      %s28 = sphi 0, %s27
      %s42 = sphi 0, %s28
      %s46 = sphi 0, %s46
      %s48 = sphi 0, %s46
      %s49 = sphi 0, %s48
      %s63 = sphi 0, %s49
      %s67 = sphi 0, %s67
      %s69 = sphi 0, %s67
      %s70 = sphi 0, %s69
      %s84 = sphi 0, %s70
      %s88 = sphi 0, %s88
      %s90 = sphi 0, %s88
      %s91 = sphi 0, %s90
      %s105 = sphi 0, %s91
      %s109 = sphi 0, %s109
      %s111 = sphi 0, %s109
      %s112 = sphi 0, %s111
      %s126 = sphi 0, %s112
      %s132 = sphi 0, %s134
      %s135 = sphi 0, %s132
      %s136 = sphi 0, %s135
      %s152 = sphi 0, %s136
    $region4: #{tpu_custom_call.1} parent=1 // loop_header_branch
      %20 = sbr.rel (%p18) target = $region8
    $region5: #{tpu_custom_call.1} parent=1 // loop_body
      %s22 = ssub.s32 %s17, 1
      %s23 = ssub.s32 %s17, 2
      %s24 = sadd.s32 %s17, 1
      %s26 = sadd.s32 %s25, 1
      %p29 = scmp.eq.s32.totalorder %s17, 5
      %p30 = scmp.ne.s32.totalorder %s25, %s27
      %p31 = scmp.eq.s32.totalorder %s17, 0
      %p32 = por %p30, %p31
      %p33 = scmp.ne.s32.totalorder %s25, %s27
      %p34 = scmp.eq.s32.totalorder %s22, 5
      %p35 = por %p33, %p34
      %p36 = scmp.ne.s32.totalorder %s27, %s28
      %p37 = scmp.eq.s32.totalorder %s22, 0
      %p38 = por %p36, %p37
      %p39 = scmp.ne.s32.totalorder %s27, %s28
      %p40 = scmp.eq.s32.totalorder %s23, 5
      %p41 = por %p39, %p40
      %p43 = scmp.ne.s32.totalorder %s28, %s42
      %p44 = scmp.eq.s32.totalorder %s23, 0
      %p45 = por %p43, %p44
      %s47 = sadd.s32 %s46, 1
      %p50 = scmp.eq.s32.totalorder %s17, 5
      %p51 = scmp.ne.s32.totalorder %s46, %s48
      %p52 = scmp.eq.s32.totalorder %s17, 0
      %p53 = por %p51, %p52
      %p54 = scmp.ne.s32.totalorder %s46, %s48
      %p55 = scmp.eq.s32.totalorder %s22, 5
      %p56 = por %p54, %p55
      %p57 = scmp.ne.s32.totalorder %s48, %s49
      %p58 = scmp.eq.s32.totalorder %s22, 0
      %p59 = por %p57, %p58
      %p60 = scmp.ne.s32.totalorder %s48, %s49
      %p61 = scmp.eq.s32.totalorder %s23, 5
      %p62 = por %p60, %p61
      %p64 = scmp.ne.s32.totalorder %s49, %s63
      %p65 = scmp.eq.s32.totalorder %s23, 0
      %p66 = por %p64, %p65
      %s68 = sadd.s32 %s67, 1
      %p71 = scmp.eq.s32.totalorder %s17, 5
      %p72 = scmp.ne.s32.totalorder %s67, %s69
      %p73 = scmp.eq.s32.totalorder %s17, 0
      %p74 = por %p72, %p73
      %p75 = scmp.ne.s32.totalorder %s67, %s69
      %p76 = scmp.eq.s32.totalorder %s22, 5
      %p77 = por %p75, %p76
      %p78 = scmp.ne.s32.totalorder %s69, %s70
      %p79 = scmp.eq.s32.totalorder %s22, 0
      %p80 = por %p78, %p79
      %p81 = scmp.ne.s32.totalorder %s69, %s70
      %p82 = scmp.eq.s32.totalorder %s23, 5
      %p83 = por %p81, %p82
      %p85 = scmp.ne.s32.totalorder %s70, %s84
      %p86 = scmp.eq.s32.totalorder %s23, 0
      %p87 = por %p85, %p86
      %s89 = sadd.s32 %s88, 1
      %p92 = scmp.eq.s32.totalorder %s17, 5
      %p93 = scmp.ne.s32.totalorder %s88, %s90
      %p94 = scmp.eq.s32.totalorder %s17, 0
      %p95 = por %p93, %p94
      %p96 = scmp.ne.s32.totalorder %s88, %s90
      %p97 = scmp.eq.s32.totalorder %s22, 5
      %p98 = por %p96, %p97
      %p99 = scmp.ne.s32.totalorder %s90, %s91
      %p100 = scmp.eq.s32.totalorder %s22, 0
      %p101 = por %p99, %p100
      %p102 = scmp.ne.s32.totalorder %s90, %s91
      %p103 = scmp.eq.s32.totalorder %s23, 5
      %p104 = por %p102, %p103
      %p106 = scmp.ne.s32.totalorder %s91, %s105
      %p107 = scmp.eq.s32.totalorder %s23, 0
      %p108 = por %p106, %p107
      %s110 = sadd.s32 %s109, 1
      %p113 = scmp.eq.s32.totalorder %s17, 5
      %p114 = scmp.ne.s32.totalorder %s109, %s111
      %p115 = scmp.eq.s32.totalorder %s17, 0
      %p116 = por %p114, %p115
      %p117 = scmp.ne.s32.totalorder %s109, %s111
      %p118 = scmp.eq.s32.totalorder %s22, 5
      %p119 = por %p117, %p118
      %p120 = scmp.ne.s32.totalorder %s111, %s112
      %p121 = scmp.eq.s32.totalorder %s22, 0
      %p122 = por %p120, %p121
      %p123 = scmp.ne.s32.totalorder %s111, %s112
      %p124 = scmp.eq.s32.totalorder %s23, 5
      %p125 = por %p123, %p124
      %p127 = scmp.ne.s32.totalorder %s112, %s126
      %p128 = scmp.eq.s32.totalorder %s23, 0
      %p129 = por %p127, %p128
      %s130 = ssub.s32 %s17, %s24
      %p131 = scmp.eq.s32.totalorder %s130, 0
      %s133 = sadd.s32 %s132, 1
      %s134 = scalar_select %p131, %s132, %s133
      %p137 = pneg %p131
      %p138 = scmp.eq.s32.totalorder %s17, 5
      %p139 = por %p137, %p138
      %p140 = scmp.ne.s32.totalorder %s132, %s135
      %p141 = scmp.eq.s32.totalorder %s17, 0
      %p142 = por %p140, %p141
      %p143 = scmp.ne.s32.totalorder %s132, %s135
      %p144 = scmp.eq.s32.totalorder %s22, 5
      %p145 = por %p143, %p144
      %p146 = scmp.ne.s32.totalorder %s135, %s136
      %p147 = scmp.eq.s32.totalorder %s22, 0
      %p148 = por %p146, %p147
      %p149 = scmp.ne.s32.totalorder %s135, %s136
      %p150 = scmp.eq.s32.totalorder %s23, 5
      %p151 = por %p149, %p150
      %p153 = scmp.ne.s32.totalorder %s136, %s152
      %p154 = scmp.eq.s32.totalorder %s23, 0
      %p155 = por %p153, %p154
      %p156 = scmp.le.s32.totalorder 1, %s17
      %p157 = scmp.lt.s32.totalorder %s17, 7
      %p158 = pnand %p156, %p157
      %p159 = pneg %p158
      // Predicated region
      $region9: #{tpu_custom_call.1} parent=5 // pred_check
        _
      $region10: #{tpu_custom_call.1} parent=5 // pred_check_branch
        %161 = sbr.rel (%p158) target = $region12
      $region11: #{tpu_custom_call.1} parent=5 // pred_region
        %s162 = ssub.s32 %s17, 1
        // Predicated region
        $region13: #{tpu_custom_call.1} parent=11 // pred_check
          %p163 = pneg %p38
        $region14: #{tpu_custom_call.1} parent=11 // pred_check_branch
          %165 = sbr.rel (%p163) target = $region16
        $region15: #{tpu_custom_call.1} parent=11 // pred_region
          %s167 = ssub.s32 13056, 13056
          %168 = vsyncadd [#allocation4], %s167
          %s169 = sshll.u32 [#allocation3], 4
          %s170 = int_to_ptr.vmem [resolvable:$true] %s169
          %175 = dma.hbm_to_vmem [thread:$0]  %s0, 13056, %s170, [#allocation4], 128, 128, 8
        $region16: #{tpu_custom_call.1} parent=11 // pred_fallthru
          _
        // Predicated region
        $region17: #{tpu_custom_call.1} parent=11 // pred_check
          %p176 = pneg %p59
        $region18: #{tpu_custom_call.1} parent=11 // pred_check_branch
          %178 = sbr.rel (%p176) target = $region20
        $region19: #{tpu_custom_call.1} parent=11 // pred_region
          %s180 = ssub.s32 36864, 36864
          %181 = vsyncadd [#allocation7], %s180
          %s182 = sshll.u32 [#allocation6], 4
          %s183 = int_to_ptr.vmem [resolvable:$true] %s182
          %188 = dma.hbm_to_vmem [thread:$0]  %s1, 36864, %s183, [#allocation7], 128, 128, 8
        $region20: #{tpu_custom_call.1} parent=11 // pred_fallthru
          _
        // Predicated region
        $region21: #{tpu_custom_call.1} parent=11 // pred_check
          %p189 = pneg %p80
        $region22: #{tpu_custom_call.1} parent=11 // pred_check_branch
          %191 = sbr.rel (%p189) target = $region24
        $region23: #{tpu_custom_call.1} parent=11 // pred_region
          %s193 = ssub.s32 32, 32
          %194 = vsyncadd [#allocation7], %s193
          %s196 = sshll.u32 [#allocation8], 4
          %s197 = int_to_ptr.vmem [resolvable:$true] %s196
          %199 = dma.hbm_to_vmem [thread:$0]  %s2, 32, %s197, [#allocation7]
        $region24: #{tpu_custom_call.1} parent=11 // pred_fallthru
          _
        // Predicated region
        $region25: #{tpu_custom_call.1} parent=11 // pred_check
          %p200 = pneg %p101
        $region26: #{tpu_custom_call.1} parent=11 // pred_check_branch
          %202 = sbr.rel (%p200) target = $region28
        $region27: #{tpu_custom_call.1} parent=11 // pred_region
          %s204 = ssub.s32 2048, 2048
          %205 = vsyncadd [#allocation10], %s204
          %s206 = sshll.u32 [#allocation9], 4
          %s207 = int_to_ptr.vmem [resolvable:$true] %s206
          %212 = dma.hbm_to_vmem [thread:$0]  %s3, 2048, %s207, [#allocation10], 64, 64, 4
        $region28: #{tpu_custom_call.1} parent=11 // pred_fallthru
          _
        // Predicated region
        $region29: #{tpu_custom_call.1} parent=11 // pred_check
          %p213 = pneg %p122
        $region30: #{tpu_custom_call.1} parent=11 // pred_check_branch
          %215 = sbr.rel (%p213) target = $region32
        $region31: #{tpu_custom_call.1} parent=11 // pred_region
          %s217 = ssub.s32 16, 16
          %218 = vsyncadd [#allocation10], %s217
          %s220 = sshll.u32 [#allocation11], 4
          %s221 = int_to_ptr.vmem [resolvable:$true] %s220
          %223 = dma.hbm_to_vmem [thread:$0]  %s4, 16, %s221, [#allocation10]
        $region32: #{tpu_custom_call.1} parent=11 // pred_fallthru
          _
      $region12: #{tpu_custom_call.1} parent=5 // pred_fallthru
        _
      %p224 = scmp.lt.s32.totalorder %s17, 6
      // Predicated region
      $region33: #{tpu_custom_call.1} parent=5 // pred_check
        %p225 = pneg %p224
      $region34: #{tpu_custom_call.1} parent=5 // pred_check_branch
        %227 = sbr.rel (%p225) target = $region36
      $region35: #{tpu_custom_call.1} parent=5 // pred_region
        _
      $region36: #{tpu_custom_call.1} parent=5 // pred_fallthru
        _
      %p228 = scmp.le.s32.totalorder 1, %s17
      %p229 = scmp.lt.s32.totalorder %s17, 7
      %p230 = pnand %p228, %p229
      %p231 = pneg %p230
      // Predicated region
      $region37: #{tpu_custom_call.1} parent=5 // pred_check
        _
      $region38: #{tpu_custom_call.1} parent=5 // pred_check_branch
        %233 = sbr.rel (%p230) target = $region40
      $region39: #{tpu_custom_call.1} parent=5 // pred_region
        %s234 = ssub.s32 %s17, 1
        // Predicated region
        $region41: #{tpu_custom_call.1} parent=39 // pred_check
          %p235 = pneg %p38
        $region42: #{tpu_custom_call.1} parent=39 // pred_check_branch
          %237 = sbr.rel (%p235) target = $region44
        $region43: #{tpu_custom_call.1} parent=39 // pred_region
          %238 = dma.done [#allocation4], 13056
        $region44: #{tpu_custom_call.1} parent=39 // pred_fallthru
          _
        // Predicated region
        $region45: #{tpu_custom_call.1} parent=39 // pred_check
          %p239 = pneg %p59
        $region46: #{tpu_custom_call.1} parent=39 // pred_check_branch
          %241 = sbr.rel (%p239) target = $region48
        $region47: #{tpu_custom_call.1} parent=39 // pred_region
          %242 = dma.done [#allocation7], 36864
        $region48: #{tpu_custom_call.1} parent=39 // pred_fallthru
          _
        // Predicated region
        $region49: #{tpu_custom_call.1} parent=39 // pred_check
          %p243 = pneg %p80
        $region50: #{tpu_custom_call.1} parent=39 // pred_check_branch
          %245 = sbr.rel (%p243) target = $region52
        $region51: #{tpu_custom_call.1} parent=39 // pred_region
          %246 = dma.done [#allocation7], 32
        $region52: #{tpu_custom_call.1} parent=39 // pred_fallthru
          _
        // Predicated region
        $region53: #{tpu_custom_call.1} parent=39 // pred_check
          %p247 = pneg %p101
        $region54: #{tpu_custom_call.1} parent=39 // pred_check_branch
          %249 = sbr.rel (%p247) target = $region56
        $region55: #{tpu_custom_call.1} parent=39 // pred_region
          %250 = dma.done [#allocation10], 2048
        $region56: #{tpu_custom_call.1} parent=39 // pred_fallthru
          _
        // Predicated region
        $region57: #{tpu_custom_call.1} parent=39 // pred_check
          %p251 = pneg %p122
        $region58: #{tpu_custom_call.1} parent=39 // pred_check_branch
          %253 = sbr.rel (%p251) target = $region60
        $region59: #{tpu_custom_call.1} parent=39 // pred_region
          %254 = dma.done [#allocation10], 16
        $region60: #{tpu_custom_call.1} parent=39 // pred_fallthru
          _
        %p255 = pneg %p38
        %p256 = pneg %p35
        %p257 = pneg %p59
        %p258 = pneg %p56
        %p259 = pneg %p80
        %p260 = pneg %p77
        %p261 = pneg %p101
        %p262 = pneg %p98
        %p263 = pneg %p122
        %p264 = pneg %p119
        %p265 = pneg %p148
        %p266 = pneg %p145
        %s267 = sand.u32 %s135, 1
        %s268 = scalar_lea.sflag [#allocation5], %s267
        %s269 = sand.u32 %s135, 1
        %s270 = smul.addr %s269, 128
        %s271 = scalar_lea.vmem [#allocation12], %s270
        %s272 = smul.u32 16, %s22
        %274 = vst [vmem:[#allocation2] sm:$0xff] 0.0
        %275 = vst [vmem:[#allocation2 + $0x8] sm:$0xff] 0.0
        %276 = vst [vmem:[#allocation2 + $0x10] sm:$0xff] 0.0
        %277 = vst [vmem:[#allocation2 + $0x18] sm:$0xff] 0.0
        %278 = vst [vmem:[#allocation2 + $0x20] sm:$0xff] 0.0
        %279 = vst [vmem:[#allocation2 + $0x28] sm:$0xff] 0.0
        %280 = vst [vmem:[#allocation2 + $0x30] sm:$0xff] 0.0
        %281 = vst [vmem:[#allocation2 + $0x38] sm:$0xff] 0.0
        %282 = vst [vmem:[#allocation2 + $0x40] sm:$0xff] 0.0
        %283 = vst [vmem:[#allocation2 + $0x48] sm:$0xff] 0.0
        %284 = vst [vmem:[#allocation2 + $0x50] sm:$0xff] 0.0
        %285 = vst [vmem:[#allocation2 + $0x58] sm:$0xff] 0.0
        %286 = vst [vmem:[#allocation2 + $0x60] sm:$0xff] 0.0
        %287 = vst [vmem:[#allocation2 + $0x68] sm:$0xff] 0.0
        %288 = vst [vmem:[#allocation2 + $0x70] sm:$0xff] 0.0
        %289 = vst [vmem:[#allocation2 + $0x78] sm:$0xff] 0.0
        %290 = vst [vmem:[#allocation2 + $0x80] sm:$0xff] 0.0
        %291 = vst [vmem:[#allocation2 + $0x88] sm:$0xff] 0.0
        %292 = vst [vmem:[#allocation2 + $0x90] sm:$0xff] 0.0
        %293 = vst [vmem:[#allocation2 + $0x98] sm:$0xff] 0.0
        %294 = vst [vmem:[#allocation2 + $0xa0] sm:$0xff] 0.0
        %295 = vst [vmem:[#allocation2 + $0xa8] sm:$0xff] 0.0
        %296 = vst [vmem:[#allocation2 + $0xb0] sm:$0xff] 0.0
        %297 = vst [vmem:[#allocation2 + $0xb8] sm:$0xff] 0.0
        %298 = vst [vmem:[#allocation2 + $0xc0] sm:$0xff] 0.0
        %299 = vst [vmem:[#allocation2 + $0xc8] sm:$0xff] 0.0
        %300 = vst [vmem:[#allocation2 + $0xd0] sm:$0xff] 0.0
        %301 = vst [vmem:[#allocation2 + $0xd8] sm:$0xff] 0.0
        %302 = vst [vmem:[#allocation2 + $0xe0] sm:$0xff] 0.0
        %303 = vst [vmem:[#allocation2 + $0xe8] sm:$0xff] 0.0
        %304 = vst [vmem:[#allocation2 + $0xf0] sm:$0xff] 0.0
        %305 = vst [vmem:[#allocation2 + $0xf8] sm:$0xff] 0.0
        %s306 = smul.u32 %s22, 128
        %s307 = sshra.s32 %s306, 3
        %s308 = sand.u32 %s306, 7
        %s309 = smul.u32 %s307, 2
        %s310 = smul.addr %s309, 4
        %s311 = scalar_lea.vmem [#allocation3], %s310
        %v312 = vld [vmem:[%s311] sm:$0xff]
        %v313 = vld [vmem:[%s311 + $0x8] sm:$0xff]
        %v314 = vld [vmem:[%s311 + $0x10] sm:$0xff]
        %v315 = vld [vmem:[%s311 + $0x18] sm:$0xff]
        %v316 = vld [vmem:[%s311 + $0x20] sm:$0xff]
        %v317 = vld [vmem:[%s311 + $0x28] sm:$0xff]
        %v318 = vld [vmem:[%s311 + $0x30] sm:$0xff]
        %v319 = vld [vmem:[%s311 + $0x38] sm:$0xff]
        %v320 = vld [vmem:[%s311 + $0x40] sm:$0xff]
        %v321 = vld [vmem:[%s311 + $0x48] sm:$0xff]
        %v322 = vld [vmem:[%s311 + $0x50] sm:$0xff]
        %v323 = vld [vmem:[%s311 + $0x58] sm:$0xff]
        %v324 = vld [vmem:[%s311 + $0x60] sm:$0xff]
        %v325 = vld [vmem:[%s311 + $0x68] sm:$0xff]
        %v326 = vld [vmem:[%s311 + $0x70] sm:$0xff]
        %v327 = vld [vmem:[%s311 + $0x78] sm:$0xff]
        %v328 = vld [vmem:[%s311 + $0x80] sm:$0xff]
        %v329 = vld [vmem:[#allocation2] sm:$0xff]
        %v330 = vld [vmem:[#allocation2 + $0x8] sm:$0xff]
        %v331 = vld [vmem:[#allocation2 + $0x10] sm:$0xff]
        %v332 = vld [vmem:[#allocation2 + $0x18] sm:$0xff]
        %v333 = vld [vmem:[#allocation2 + $0x20] sm:$0xff]
        %v334 = vld [vmem:[#allocation2 + $0x28] sm:$0xff]
        %v335 = vld [vmem:[#allocation2 + $0x30] sm:$0xff]
        %v336 = vld [vmem:[#allocation2 + $0x38] sm:$0xff]
        %v337 = vld [vmem:[#allocation2 + $0x40] sm:$0xff]
        %v338 = vld [vmem:[#allocation2 + $0x48] sm:$0xff]
        %v339 = vld [vmem:[#allocation2 + $0x50] sm:$0xff]
        %v340 = vld [vmem:[#allocation2 + $0x58] sm:$0xff]
        %v341 = vld [vmem:[#allocation2 + $0x60] sm:$0xff]
        %v342 = vld [vmem:[#allocation2 + $0x68] sm:$0xff]
        %v343 = vld [vmem:[#allocation2 + $0x70] sm:$0xff]
        %v344 = vld [vmem:[#allocation2 + $0x78] sm:$0xff]
        %v345 = vld [vmem:[#allocation2 + $0x80] sm:$0xff]
        %v346 = vld [vmem:[#allocation2 + $0x88] sm:$0xff]
        %v347 = vld [vmem:[#allocation2 + $0x90] sm:$0xff]
        %v348 = vld [vmem:[#allocation2 + $0x98] sm:$0xff]
        %v349 = vld [vmem:[#allocation2 + $0xa0] sm:$0xff]
        %v350 = vld [vmem:[#allocation2 + $0xa8] sm:$0xff]
        %v351 = vld [vmem:[#allocation2 + $0xb0] sm:$0xff]
        %v352 = vld [vmem:[#allocation2 + $0xb8] sm:$0xff]
        %v353 = vld [vmem:[#allocation2 + $0xc0] sm:$0xff]
        %v354 = vld [vmem:[#allocation2 + $0xc8] sm:$0xff]
        %v355 = vld [vmem:[#allocation2 + $0xd0] sm:$0xff]
        %v356 = vld [vmem:[#allocation2 + $0xd8] sm:$0xff]
        %v357 = vld [vmem:[#allocation2 + $0xe0] sm:$0xff]
        %v358 = vld [vmem:[#allocation2 + $0xe8] sm:$0xff]
        %v359 = vld [vmem:[#allocation2 + $0xf0] sm:$0xff]
        %v360 = vld [vmem:[#allocation2 + $0xf8] sm:$0xff]
        %v361 = vld [vmem:[#allocation6] sm:$0xff]
        %v362 = vld [vmem:[#allocation6 + $0x8] sm:$0xff]
        %v363 = vld [vmem:[#allocation6 + $0x10] sm:$0xff]
        %v364 = vld [vmem:[#allocation6 + $0x18] sm:$0xff]
        %v365 = vld [vmem:[#allocation6 + $0x20] sm:$0xff]
        %v366 = vld [vmem:[#allocation6 + $0x28] sm:$0xff]
        %v367 = vld [vmem:[#allocation6 + $0x30] sm:$0xff]
        %v368 = vld [vmem:[#allocation6 + $0x38] sm:$0xff]
        %v369 = vld [vmem:[#allocation6 + $0x40] sm:$0xff]
        %v370 = vld [vmem:[#allocation6 + $0x48] sm:$0xff]
        %v371 = vld [vmem:[#allocation6 + $0x50] sm:$0xff]
        %v372 = vld [vmem:[#allocation6 + $0x58] sm:$0xff]
        %v373 = vld [vmem:[#allocation6 + $0x60] sm:$0xff]
        %v374 = vld [vmem:[#allocation6 + $0x68] sm:$0xff]
        %v375 = vld [vmem:[#allocation6 + $0x70] sm:$0xff]
        %v376 = vld [vmem:[#allocation6 + $0x78] sm:$0xff]
        %v377 = vld [vmem:[#allocation6 + $0x80] sm:$0xff]
        %v378 = vld [vmem:[#allocation6 + $0x88] sm:$0xff]
        %v379 = vld [vmem:[#allocation6 + $0x90] sm:$0xff]
        %v380 = vld [vmem:[#allocation6 + $0x98] sm:$0xff]
        %v381 = vld [vmem:[#allocation6 + $0xa0] sm:$0xff]
        %v382 = vld [vmem:[#allocation6 + $0xa8] sm:$0xff]
        %v383 = vld [vmem:[#allocation6 + $0xb0] sm:$0xff]
        %v384 = vld [vmem:[#allocation6 + $0xb8] sm:$0xff]
        %v385 = vld [vmem:[#allocation6 + $0xc0] sm:$0xff]
        %v386 = vld [vmem:[#allocation6 + $0xc8] sm:$0xff]
        %v387 = vld [vmem:[#allocation6 + $0xd0] sm:$0xff]
        %v388 = vld [vmem:[#allocation6 + $0xd8] sm:$0xff]
        %v389 = vld [vmem:[#allocation6 + $0xe0] sm:$0xff]
        %v390 = vld [vmem:[#allocation6 + $0xe8] sm:$0xff]
        %v391 = vld [vmem:[#allocation6 + $0xf0] sm:$0xff]
        %v392 = vld [vmem:[#allocation6 + $0xf8] sm:$0xff]
        %v410 = vunpack.c.l.b16 %v312
        %v411 = vunpack.c.h.b16 %v312
        %v412 = vunpack.c.l.b16 %v313
        %v413 = vunpack.c.h.b16 %v313
        %v414 = vunpack.c.l.b16 %v314
        %v415 = vunpack.c.h.b16 %v314
        %v416 = vunpack.c.l.b16 %v315
        %v417 = vunpack.c.h.b16 %v315
        %v418 = vunpack.c.l.b16 %v316
        %v419 = vunpack.c.h.b16 %v316
        %v420 = vunpack.c.l.b16 %v317
        %v421 = vunpack.c.h.b16 %v317
        %v422 = vunpack.c.l.b16 %v318
        %v423 = vunpack.c.h.b16 %v318
        %v424 = vunpack.c.l.b16 %v319
        %v425 = vunpack.c.h.b16 %v319
        %v426 = vunpack.c.l.b16 %v320
        %v427 = vunpack.c.h.b16 %v320
        %v428 = vunpack.c.l.b16 %v321
        %v429 = vunpack.c.h.b16 %v321
        %v430 = vunpack.c.l.b16 %v322
        %v431 = vunpack.c.h.b16 %v322
        %v432 = vunpack.c.l.b16 %v323
        %v433 = vunpack.c.h.b16 %v323
        %v434 = vunpack.c.l.b16 %v324
        %v435 = vunpack.c.h.b16 %v324
        %v436 = vunpack.c.l.b16 %v325
        %v437 = vunpack.c.h.b16 %v325
        %v438 = vunpack.c.l.b16 %v326
        %v439 = vunpack.c.h.b16 %v326
        %v440 = vunpack.c.l.b16 %v327
        %v441 = vunpack.c.h.b16 %v327
        %v442 = vunpack.c.l.b16 %v328
        %v443 = vunpack.c.h.b16 %v328
        %v444 = vpack.c.b16 %v412, %v410
        %v445 = vpack.c.b16 %v413, %v411
        %v446 = vpack.c.b16 %v416, %v414
        %v447 = vpack.c.b16 %v417, %v415
        %v448 = vpack.c.b16 %v420, %v418
        %v449 = vpack.c.b16 %v421, %v419
        %v450 = vpack.c.b16 %v424, %v422
        %v451 = vpack.c.b16 %v425, %v423
        %v452 = vpack.c.b16 %v428, %v426
        %v453 = vpack.c.b16 %v429, %v427
        %v454 = vpack.c.b16 %v432, %v430
        %v455 = vpack.c.b16 %v433, %v431
        %v456 = vpack.c.b16 %v436, %v434
        %v457 = vpack.c.b16 %v437, %v435
        %v458 = vpack.c.b16 %v440, %v438
        %v459 = vpack.c.b16 %v441, %v439
        %v460 = vpack.c.b16 %v442, %v442
        %v461 = vpack.c.b16 %v443, %v443
        %vm462 = vsmask.f32 5376
        %v464 = vshrl.u32 %v444, 16
        %v466 = vrot.slane %v464, 2
        %v467 = vshll.u32 %v444, 16
        %v469 = vrot.slane %v467, 3
        %v470 = vor.u32 %v466, %v469
        %v472 = vshrl.u32 %v446, 16
        %v474 = vrot.slane %v472, 2
        %v475 = vshll.u32 %v446, 16
        %v477 = vrot.slane %v475, 3
        %v478 = vor.u32 %v474, %v477
        %v479 = vsel %vm462, %v470, %v478
        %v481 = vshrl.u32 %v445, 16
        %v483 = vrot.slane %v481, 2
        %v484 = vshll.u32 %v445, 16
        %v486 = vrot.slane %v484, 3
        %v487 = vor.u32 %v483, %v486
        %v489 = vshrl.u32 %v447, 16
        %v491 = vrot.slane %v489, 2
        %v492 = vshll.u32 %v447, 16
        %v494 = vrot.slane %v492, 3
        %v495 = vor.u32 %v491, %v494
        %v496 = vsel %vm462, %v487, %v495
        %v498 = vshrl.u32 %v448, 16
        %v500 = vrot.slane %v498, 2
        %v501 = vshll.u32 %v448, 16
        %v503 = vrot.slane %v501, 3
        %v504 = vor.u32 %v500, %v503
        %v505 = vsel %vm462, %v478, %v504
        %v507 = vshrl.u32 %v449, 16
        %v509 = vrot.slane %v507, 2
        %v510 = vshll.u32 %v449, 16
        %v512 = vrot.slane %v510, 3
        %v513 = vor.u32 %v509, %v512
        %v514 = vsel %vm462, %v495, %v513
        %v516 = vshrl.u32 %v450, 16
        %v518 = vrot.slane %v516, 2
        %v519 = vshll.u32 %v450, 16
        %v521 = vrot.slane %v519, 3
        %v522 = vor.u32 %v518, %v521
        %v523 = vsel %vm462, %v504, %v522
        %v525 = vshrl.u32 %v451, 16
        %v527 = vrot.slane %v525, 2
        %v528 = vshll.u32 %v451, 16
        %v530 = vrot.slane %v528, 3
        %v531 = vor.u32 %v527, %v530
        %v532 = vsel %vm462, %v513, %v531
        %v534 = vshrl.u32 %v452, 16
        %v536 = vrot.slane %v534, 2
        %v537 = vshll.u32 %v452, 16
        %v539 = vrot.slane %v537, 3
        %v540 = vor.u32 %v536, %v539
        %v541 = vsel %vm462, %v522, %v540
        %v543 = vshrl.u32 %v453, 16
        %v545 = vrot.slane %v543, 2
        %v546 = vshll.u32 %v453, 16
        %v548 = vrot.slane %v546, 3
        %v549 = vor.u32 %v545, %v548
        %v550 = vsel %vm462, %v531, %v549
        %v552 = vshrl.u32 %v454, 16
        %v554 = vrot.slane %v552, 2
        %v555 = vshll.u32 %v454, 16
        %v557 = vrot.slane %v555, 3
        %v558 = vor.u32 %v554, %v557
        %v559 = vsel %vm462, %v540, %v558
        %v561 = vshrl.u32 %v455, 16
        %v563 = vrot.slane %v561, 2
        %v564 = vshll.u32 %v455, 16
        %v566 = vrot.slane %v564, 3
        %v567 = vor.u32 %v563, %v566
        %v568 = vsel %vm462, %v549, %v567
        %v570 = vshrl.u32 %v456, 16
        %v572 = vrot.slane %v570, 2
        %v573 = vshll.u32 %v456, 16
        %v575 = vrot.slane %v573, 3
        %v576 = vor.u32 %v572, %v575
        %v577 = vsel %vm462, %v558, %v576
        %v579 = vshrl.u32 %v457, 16
        %v581 = vrot.slane %v579, 2
        %v582 = vshll.u32 %v457, 16
        %v584 = vrot.slane %v582, 3
        %v585 = vor.u32 %v581, %v584
        %v586 = vsel %vm462, %v567, %v585
        %v588 = vshrl.u32 %v458, 16
        %v590 = vrot.slane %v588, 2
        %v591 = vshll.u32 %v458, 16
        %v593 = vrot.slane %v591, 3
        %v594 = vor.u32 %v590, %v593
        %v595 = vsel %vm462, %v576, %v594
        %v597 = vshrl.u32 %v459, 16
        %v599 = vrot.slane %v597, 2
        %v600 = vshll.u32 %v459, 16
        %v602 = vrot.slane %v600, 3
        %v603 = vor.u32 %v599, %v602
        %v604 = vsel %vm462, %v585, %v603
        %v606 = vshrl.u32 %v460, 16
        %v608 = vrot.slane %v606, 2
        %v609 = vshll.u32 %v460, 16
        %v611 = vrot.slane %v609, 3
        %v612 = vor.u32 %v608, %v611
        %v613 = vsel %vm462, %v594, %v612
        %v615 = vshrl.u32 %v461, 16
        %v617 = vrot.slane %v615, 2
        %v618 = vshll.u32 %v461, 16
        %v620 = vrot.slane %v618, 3
        %v621 = vor.u32 %v617, %v620
        %v622 = vsel %vm462, %v603, %v621
        %v671 = vunpack.c.l.b16 %v361
        %v672 = vunpack.c.h.b16 %v361
        %v673 = vunpack.c.l.b16 %v362
        %v674 = vunpack.c.h.b16 %v362
        %v675 = vunpack.c.l.b16 %v363
        %v676 = vunpack.c.h.b16 %v363
        %v677 = vunpack.c.l.b16 %v364
        %v678 = vunpack.c.h.b16 %v364
        %v679 = vunpack.c.l.b16 %v365
        %v680 = vunpack.c.h.b16 %v365
        %v681 = vunpack.c.l.b16 %v366
        %v682 = vunpack.c.h.b16 %v366
        %v683 = vunpack.c.l.b16 %v367
        %v684 = vunpack.c.h.b16 %v367
        %v685 = vunpack.c.l.b16 %v368
        %v686 = vunpack.c.h.b16 %v368
        %v687 = vunpack.c.l.b16 %v369
        %v688 = vunpack.c.h.b16 %v369
        %v689 = vunpack.c.l.b16 %v370
        %v690 = vunpack.c.h.b16 %v370
        %v691 = vunpack.c.l.b16 %v371
        %v692 = vunpack.c.h.b16 %v371
        %v693 = vunpack.c.l.b16 %v372
        %v694 = vunpack.c.h.b16 %v372
        %v695 = vunpack.c.l.b16 %v373
        %v696 = vunpack.c.h.b16 %v373
        %v697 = vunpack.c.l.b16 %v374
        %v698 = vunpack.c.h.b16 %v374
        %v699 = vunpack.c.l.b16 %v375
        %v700 = vunpack.c.h.b16 %v375
        %v701 = vunpack.c.l.b16 %v376
        %v702 = vunpack.c.h.b16 %v376
        %v703 = vunpack.c.l.b16 %v377
        %v704 = vunpack.c.h.b16 %v377
        %v705 = vunpack.c.l.b16 %v378
        %v706 = vunpack.c.h.b16 %v378
        %v707 = vunpack.c.l.b16 %v379
        %v708 = vunpack.c.h.b16 %v379
        %v709 = vunpack.c.l.b16 %v380
        %v710 = vunpack.c.h.b16 %v380
        %v711 = vunpack.c.l.b16 %v381
        %v712 = vunpack.c.h.b16 %v381
        %v713 = vunpack.c.l.b16 %v382
        %v714 = vunpack.c.h.b16 %v382
        %v715 = vunpack.c.l.b16 %v383
        %v716 = vunpack.c.h.b16 %v383
        %v717 = vunpack.c.l.b16 %v384
        %v718 = vunpack.c.h.b16 %v384
        %v719 = vunpack.c.l.b16 %v385
        %v720 = vunpack.c.h.b16 %v385
        %v721 = vunpack.c.l.b16 %v386
        %v722 = vunpack.c.h.b16 %v386
        %v723 = vunpack.c.l.b16 %v387
        %v724 = vunpack.c.h.b16 %v387
        %v725 = vunpack.c.l.b16 %v388
        %v726 = vunpack.c.h.b16 %v388
        %v727 = vunpack.c.l.b16 %v389
        %v728 = vunpack.c.h.b16 %v389
        %v729 = vunpack.c.l.b16 %v390
        %v730 = vunpack.c.h.b16 %v390
        %v731 = vunpack.c.l.b16 %v391
        %v732 = vunpack.c.h.b16 %v391
        %v733 = vunpack.c.l.b16 %v392
        %v734 = vunpack.c.h.b16 %v392
        %v735 = vpack.c.b16 %v673, %v671
        %v736 = vpack.c.b16 %v674, %v672
        %v737 = vpack.c.b16 %v677, %v675
        %v738 = vpack.c.b16 %v678, %v676
        %v739 = vpack.c.b16 %v681, %v679
        %v740 = vpack.c.b16 %v682, %v680
        %v741 = vpack.c.b16 %v685, %v683
        %v742 = vpack.c.b16 %v686, %v684
        %v743 = vpack.c.b16 %v689, %v687
        %v744 = vpack.c.b16 %v690, %v688
        %v745 = vpack.c.b16 %v693, %v691
        %v746 = vpack.c.b16 %v694, %v692
        %v747 = vpack.c.b16 %v697, %v695
        %v748 = vpack.c.b16 %v698, %v696
        %v749 = vpack.c.b16 %v701, %v699
        %v750 = vpack.c.b16 %v702, %v700
        %v751 = vpack.c.b16 %v705, %v703
        %v752 = vpack.c.b16 %v706, %v704
        %v753 = vpack.c.b16 %v709, %v707
        %v754 = vpack.c.b16 %v710, %v708
        %v755 = vpack.c.b16 %v713, %v711
        %v756 = vpack.c.b16 %v714, %v712
        %v757 = vpack.c.b16 %v717, %v715
        %v758 = vpack.c.b16 %v718, %v716
        %v759 = vpack.c.b16 %v721, %v719
        %v760 = vpack.c.b16 %v722, %v720
        %v761 = vpack.c.b16 %v725, %v723
        %v762 = vpack.c.b16 %v726, %v724
        %v763 = vpack.c.b16 %v729, %v727
        %v764 = vpack.c.b16 %v730, %v728
        %v765 = vpack.c.b16 %v733, %v731
        %v766 = vpack.c.b16 %v734, %v732
        %799 = vmatprep.subr.bf16.mxu0 %v736
        %800 = vmatpush1.bf16.msra.mxu0 %v735
        %801 = vmatprep.subr.bf16.mxu0 %v738
        %802 = vmatpush1.bf16.msra.mxu0 %v737
        %803 = vmatprep.subr.bf16.mxu0 %v740
        %804 = vmatpush1.bf16.msra.mxu0 %v739
        %805 = vmatprep.subr.bf16.mxu0 %v742
        %806 = vmatpush1.bf16.msra.mxu0 %v741
        %807 = vmatprep.subr.bf16.mxu0 %v744
        %808 = vmatpush1.bf16.msra.mxu0 %v743
        %809 = vmatprep.subr.bf16.mxu0 %v746
        %810 = vmatpush1.bf16.msra.mxu0 %v745
        %811 = vmatprep.subr.bf16.mxu0 %v748
        %812 = vmatpush1.bf16.msra.mxu0 %v747
        %813 = vmatprep.subr.bf16.mxu0 %v750
        %814 = vmatpush1.bf16.msra.mxu0 %v749
        %815 = vmatprep.subr.bf16.mxu0 %v752
        %816 = vmatpush1.bf16.msra.mxu0 %v751
        %817 = vmatprep.subr.bf16.mxu0 %v754
        %818 = vmatpush1.bf16.msra.mxu0 %v753
        %819 = vmatprep.subr.bf16.mxu0 %v756
        %820 = vmatpush1.bf16.msra.mxu0 %v755
        %821 = vmatprep.subr.bf16.mxu0 %v758
        %822 = vmatpush1.bf16.msra.mxu0 %v757
        %823 = vmatprep.subr.bf16.mxu0 %v760
        %824 = vmatpush1.bf16.msra.mxu0 %v759
        %825 = vmatprep.subr.bf16.mxu0 %v762
        %826 = vmatpush1.bf16.msra.mxu0 %v761
        %827 = vmatprep.subr.bf16.mxu0 %v764
        %828 = vmatpush1.bf16.msra.mxu0 %v763
        %829 = vmatprep.subr.bf16.mxu0 %v766
        %830 = vmatpush1.bf16.msra.mxu0 %v765
        %831 = vmatprep.mubr.bf16.mxu0 %v496
        %832 = vmatmul.mubr.bf16.gmra.mrb[0].mxu0 %v479
        %v833 = vpop.f32.mrb[0].mxu0
        %v834 = vadd.f32 0.0, %v833
        %v835 = vpop.f32.mrb[0].mxu0
        %v836 = vadd.f32 0.0, %v835
        %v837 = vpop.f32.mrb[0].mxu0
        %v838 = vadd.f32 0.0, %v837
        %v839 = vpop.f32.mrb[0].mxu0
        %v840 = vadd.f32 0.0, %v839
        %841 = vmatprep.mubr.bf16.mxu0 %v514
        %842 = vmatmul.mubr.bf16.gmra.mrb[0].mxu0 %v505
        %v843 = vpop.f32.mrb[0].mxu0
        %v844 = vadd.f32 0.0, %v843
        %v845 = vpop.f32.mrb[0].mxu0
        %v846 = vadd.f32 0.0, %v845
        %v847 = vpop.f32.mrb[0].mxu0
        %v848 = vadd.f32 0.0, %v847
        %v849 = vpop.f32.mrb[0].mxu0
        %v850 = vadd.f32 0.0, %v849
        %851 = vmatprep.mubr.bf16.mxu0 %v532
        %852 = vmatmul.mubr.bf16.gmra.mrb[0].mxu0 %v523
        %v853 = vpop.f32.mrb[0].mxu0
        %v854 = vadd.f32 0.0, %v853
        %v855 = vpop.f32.mrb[0].mxu0
        %v856 = vadd.f32 0.0, %v855
        %v857 = vpop.f32.mrb[0].mxu0
        %v858 = vadd.f32 0.0, %v857
        %v859 = vpop.f32.mrb[0].mxu0
        %v860 = vadd.f32 0.0, %v859
        %861 = vmatprep.mubr.bf16.mxu0 %v550
        %862 = vmatmul.mubr.bf16.gmra.mrb[0].mxu0 %v541
        %v863 = vpop.f32.mrb[0].mxu0
        %v864 = vadd.f32 0.0, %v863
        %v865 = vpop.f32.mrb[0].mxu0
        %v866 = vadd.f32 0.0, %v865
        %v867 = vpop.f32.mrb[0].mxu0
        %v868 = vadd.f32 0.0, %v867
        %v869 = vpop.f32.mrb[0].mxu0
        %v870 = vadd.f32 0.0, %v869
        %871 = vmatprep.mubr.bf16.mxu0 %v568
        %872 = vmatmul.mubr.bf16.gmra.mrb[0].mxu0 %v559
        %v873 = vpop.f32.mrb[0].mxu0
        %v874 = vadd.f32 0.0, %v873
        %v875 = vpop.f32.mrb[0].mxu0
        %v876 = vadd.f32 0.0, %v875
        %v877 = vpop.f32.mrb[0].mxu0
        %v878 = vadd.f32 0.0, %v877
        %v879 = vpop.f32.mrb[0].mxu0
        %v880 = vadd.f32 0.0, %v879
        %881 = vmatprep.mubr.bf16.mxu0 %v586
        %882 = vmatmul.mubr.bf16.gmra.mrb[0].mxu0 %v577
        %v883 = vpop.f32.mrb[0].mxu0
        %v884 = vadd.f32 0.0, %v883
        %v885 = vpop.f32.mrb[0].mxu0
        %v886 = vadd.f32 0.0, %v885
        %v887 = vpop.f32.mrb[0].mxu0
        %v888 = vadd.f32 0.0, %v887
        %v889 = vpop.f32.mrb[0].mxu0
        %v890 = vadd.f32 0.0, %v889
        %891 = vmatprep.mubr.bf16.mxu0 %v604
        %892 = vmatmul.mubr.bf16.gmra.mrb[0].mxu0 %v595
        %v893 = vpop.f32.mrb[0].mxu0
        %v894 = vadd.f32 0.0, %v893
        %v895 = vpop.f32.mrb[0].mxu0
        %v896 = vadd.f32 0.0, %v895
        %v897 = vpop.f32.mrb[0].mxu0
        %v898 = vadd.f32 0.0, %v897
        %v899 = vpop.f32.mrb[0].mxu0
        %v900 = vadd.f32 0.0, %v899
        %901 = vmatprep.mubr.bf16.mxu0 %v622
        %902 = vmatmul.mubr.bf16.gmra.mrb[0].mxu0 %v613
        %v903 = vpop.f32.mrb[0].mxu0
        %v904 = vadd.f32 0.0, %v903
        %v905 = vpop.f32.mrb[0].mxu0
        %v906 = vadd.f32 0.0, %v905
        %v907 = vpop.f32.mrb[0].mxu0
        %v908 = vadd.f32 0.0, %v907
        %v909 = vpop.f32.mrb[0].mxu0
        %v910 = vadd.f32 0.0, %v909
        %911 = vdwg.mxu0
        %v912 = vadd.f32 %v329, %v834
        %v913 = vadd.f32 %v330, %v836
        %v914 = vadd.f32 %v331, %v838
        %v915 = vadd.f32 %v332, %v840
        %v916 = vadd.f32 %v333, %v844
        %v917 = vadd.f32 %v334, %v846
        %v918 = vadd.f32 %v335, %v848
        %v919 = vadd.f32 %v336, %v850
        %v920 = vadd.f32 %v337, %v854
        %v921 = vadd.f32 %v338, %v856
        %v922 = vadd.f32 %v339, %v858
        %v923 = vadd.f32 %v340, %v860
        %v924 = vadd.f32 %v341, %v864
        %v925 = vadd.f32 %v342, %v866
        %v926 = vadd.f32 %v343, %v868
        %v927 = vadd.f32 %v344, %v870
        %v928 = vadd.f32 %v345, %v874
        %v929 = vadd.f32 %v346, %v876
        %v930 = vadd.f32 %v347, %v878
        %v931 = vadd.f32 %v348, %v880
        %v932 = vadd.f32 %v349, %v884
        %v933 = vadd.f32 %v350, %v886
        %v934 = vadd.f32 %v351, %v888
        %v935 = vadd.f32 %v352, %v890
        %v936 = vadd.f32 %v353, %v894
        %v937 = vadd.f32 %v354, %v896
        %v938 = vadd.f32 %v355, %v898
        %v939 = vadd.f32 %v356, %v900
        %v940 = vadd.f32 %v357, %v904
        %v941 = vadd.f32 %v358, %v906
        %v942 = vadd.f32 %v359, %v908
        %v943 = vadd.f32 %v360, %v910
        %944 = vst [vmem:[#allocation2] sm:$0xff] %v912
        %945 = vst [vmem:[#allocation2 + $0x8] sm:$0xff] %v913
        %946 = vst [vmem:[#allocation2 + $0x10] sm:$0xff] %v914
        %947 = vst [vmem:[#allocation2 + $0x18] sm:$0xff] %v915
        %948 = vst [vmem:[#allocation2 + $0x20] sm:$0xff] %v916
        %949 = vst [vmem:[#allocation2 + $0x28] sm:$0xff] %v917
        %950 = vst [vmem:[#allocation2 + $0x30] sm:$0xff] %v918
        %951 = vst [vmem:[#allocation2 + $0x38] sm:$0xff] %v919
        %952 = vst [vmem:[#allocation2 + $0x40] sm:$0xff] %v920
        %953 = vst [vmem:[#allocation2 + $0x48] sm:$0xff] %v921
        %954 = vst [vmem:[#allocation2 + $0x50] sm:$0xff] %v922
        %955 = vst [vmem:[#allocation2 + $0x58] sm:$0xff] %v923
        %956 = vst [vmem:[#allocation2 + $0x60] sm:$0xff] %v924
        %957 = vst [vmem:[#allocation2 + $0x68] sm:$0xff] %v925
        %958 = vst [vmem:[#allocation2 + $0x70] sm:$0xff] %v926
        %959 = vst [vmem:[#allocation2 + $0x78] sm:$0xff] %v927
        %960 = vst [vmem:[#allocation2 + $0x80] sm:$0xff] %v928
        %961 = vst [vmem:[#allocation2 + $0x88] sm:$0xff] %v929
        %962 = vst [vmem:[#allocation2 + $0x90] sm:$0xff] %v930
        %963 = vst [vmem:[#allocation2 + $0x98] sm:$0xff] %v931
        %964 = vst [vmem:[#allocation2 + $0xa0] sm:$0xff] %v932
        %965 = vst [vmem:[#allocation2 + $0xa8] sm:$0xff] %v933
        %966 = vst [vmem:[#allocation2 + $0xb0] sm:$0xff] %v934
        %967 = vst [vmem:[#allocation2 + $0xb8] sm:$0xff] %v935
        %968 = vst [vmem:[#allocation2 + $0xc0] sm:$0xff] %v936
        %969 = vst [vmem:[#allocation2 + $0xc8] sm:$0xff] %v937
        %970 = vst [vmem:[#allocation2 + $0xd0] sm:$0xff] %v938
        %971 = vst [vmem:[#allocation2 + $0xd8] sm:$0xff] %v939
        %972 = vst [vmem:[#allocation2 + $0xe0] sm:$0xff] %v940
        %973 = vst [vmem:[#allocation2 + $0xe8] sm:$0xff] %v941
        %974 = vst [vmem:[#allocation2 + $0xf0] sm:$0xff] %v942
        %975 = vst [vmem:[#allocation2 + $0xf8] sm:$0xff] %v943
        %v976 = vld [vmem:[%s311] sm:$0xff]
        %v977 = vld [vmem:[%s311 + $0x8] sm:$0xff]
        %v978 = vld [vmem:[%s311 + $0x10] sm:$0xff]
        %v979 = vld [vmem:[%s311 + $0x18] sm:$0xff]
        %v980 = vld [vmem:[%s311 + $0x20] sm:$0xff]
        %v981 = vld [vmem:[%s311 + $0x28] sm:$0xff]
        %v982 = vld [vmem:[%s311 + $0x30] sm:$0xff]
        %v983 = vld [vmem:[%s311 + $0x38] sm:$0xff]
        %v984 = vld [vmem:[%s311 + $0x40] sm:$0xff]
        %v985 = vld [vmem:[%s311 + $0x48] sm:$0xff]
        %v986 = vld [vmem:[%s311 + $0x50] sm:$0xff]
        %v987 = vld [vmem:[%s311 + $0x58] sm:$0xff]
        %v988 = vld [vmem:[%s311 + $0x60] sm:$0xff]
        %v989 = vld [vmem:[%s311 + $0x68] sm:$0xff]
        %v990 = vld [vmem:[%s311 + $0x70] sm:$0xff]
        %v991 = vld [vmem:[%s311 + $0x78] sm:$0xff]
        %v992 = vld [vmem:[%s311 + $0x80] sm:$0xff]
        %v993 = vld [vmem:[#allocation2] sm:$0xff]
        %v994 = vld [vmem:[#allocation2 + $0x8] sm:$0xff]
        %v995 = vld [vmem:[#allocation2 + $0x10] sm:$0xff]
        %v996 = vld [vmem:[#allocation2 + $0x18] sm:$0xff]
        %v997 = vld [vmem:[#allocation2 + $0x20] sm:$0xff]
        %v998 = vld [vmem:[#allocation2 + $0x28] sm:$0xff]
        %v999 = vld [vmem:[#allocation2 + $0x30] sm:$0xff]
        %v1000 = vld [vmem:[#allocation2 + $0x38] sm:$0xff]
        %v1001 = vld [vmem:[#allocation2 + $0x40] sm:$0xff]
        %v1002 = vld [vmem:[#allocation2 + $0x48] sm:$0xff]
        %v1003 = vld [vmem:[#allocation2 + $0x50] sm:$0xff]
        %v1004 = vld [vmem:[#allocation2 + $0x58] sm:$0xff]
        %v1005 = vld [vmem:[#allocation2 + $0x60] sm:$0xff]
        %v1006 = vld [vmem:[#allocation2 + $0x68] sm:$0xff]
        %v1007 = vld [vmem:[#allocation2 + $0x70] sm:$0xff]
        %v1008 = vld [vmem:[#allocation2 + $0x78] sm:$0xff]
        %v1009 = vld [vmem:[#allocation2 + $0x80] sm:$0xff]
        %v1010 = vld [vmem:[#allocation2 + $0x88] sm:$0xff]
        %v1011 = vld [vmem:[#allocation2 + $0x90] sm:$0xff]
        %v1012 = vld [vmem:[#allocation2 + $0x98] sm:$0xff]
        %v1013 = vld [vmem:[#allocation2 + $0xa0] sm:$0xff]
        %v1014 = vld [vmem:[#allocation2 + $0xa8] sm:$0xff]
        %v1015 = vld [vmem:[#allocation2 + $0xb0] sm:$0xff]
        %v1016 = vld [vmem:[#allocation2 + $0xb8] sm:$0xff]
        %v1017 = vld [vmem:[#allocation2 + $0xc0] sm:$0xff]
        %v1018 = vld [vmem:[#allocation2 + $0xc8] sm:$0xff]
        %v1019 = vld [vmem:[#allocation2 + $0xd0] sm:$0xff]
        %v1020 = vld [vmem:[#allocation2 + $0xd8] sm:$0xff]
        %v1021 = vld [vmem:[#allocation2 + $0xe0] sm:$0xff]
        %v1022 = vld [vmem:[#allocation2 + $0xe8] sm:$0xff]
        %v1023 = vld [vmem:[#allocation2 + $0xf0] sm:$0xff]
        %v1024 = vld [vmem:[#allocation2 + $0xf8] sm:$0xff]
        %s1025 = scalar_lea.vmem [#allocation6], 256
        %v1026 = vld [vmem:[%s1025] sm:$0xff]
        %v1027 = vld [vmem:[%s1025 + $0x8] sm:$0xff]
        %v1028 = vld [vmem:[%s1025 + $0x10] sm:$0xff]
        %v1029 = vld [vmem:[%s1025 + $0x18] sm:$0xff]
        %v1030 = vld [vmem:[%s1025 + $0x20] sm:$0xff]
        %v1031 = vld [vmem:[%s1025 + $0x28] sm:$0xff]
        %v1032 = vld [vmem:[%s1025 + $0x30] sm:$0xff]
        %v1033 = vld [vmem:[%s1025 + $0x38] sm:$0xff]
        %v1034 = vld [vmem:[%s1025 + $0x40] sm:$0xff]
        %v1035 = vld [vmem:[%s1025 + $0x48] sm:$0xff]
        %v1036 = vld [vmem:[%s1025 + $0x50] sm:$0xff]
        %v1037 = vld [vmem:[%s1025 + $0x58] sm:$0xff]
        %v1038 = vld [vmem:[%s1025 + $0x60] sm:$0xff]
        %v1039 = vld [vmem:[%s1025 + $0x68] sm:$0xff]
        %v1040 = vld [vmem:[%s1025 + $0x70] sm:$0xff]
        %v1041 = vld [vmem:[%s1025 + $0x78] sm:$0xff]
        %v1042 = vld [vmem:[%s1025 + $0x80] sm:$0xff]
        %v1043 = vld [vmem:[%s1025 + $0x88] sm:$0xff]
        %v1044 = vld [vmem:[%s1025 + $0x90] sm:$0xff]
        %v1045 = vld [vmem:[%s1025 + $0x98] sm:$0xff]
        %v1046 = vld [vmem:[%s1025 + $0xa0] sm:$0xff]
        %v1047 = vld [vmem:[%s1025 + $0xa8] sm:$0xff]
        %v1048 = vld [vmem:[%s1025 + $0xb0] sm:$0xff]
        %v1049 = vld [vmem:[%s1025 + $0xb8] sm:$0xff]
        %v1050 = vld [vmem:[%s1025 + $0xc0] sm:$0xff]
        %v1051 = vld [vmem:[%s1025 + $0xc8] sm:$0xff]
        %v1052 = vld [vmem:[%s1025 + $0xd0] sm:$0xff]
        %v1053 = vld [vmem:[%s1025 + $0xd8] sm:$0xff]
        %v1054 = vld [vmem:[%s1025 + $0xe0] sm:$0xff]
        %v1055 = vld [vmem:[%s1025 + $0xe8] sm:$0xff]
        %v1056 = vld [vmem:[%s1025 + $0xf0] sm:$0xff]
        %v1057 = vld [vmem:[%s1025 + $0xf8] sm:$0xff]
        %v1075 = vunpack.c.l.b16 %v976
        %v1076 = vunpack.c.h.b16 %v976
        %v1077 = vunpack.c.l.b16 %v977
        %v1078 = vunpack.c.h.b16 %v977
        %v1079 = vunpack.c.l.b16 %v978
        %v1080 = vunpack.c.h.b16 %v978
        %v1081 = vunpack.c.l.b16 %v979
        %v1082 = vunpack.c.h.b16 %v979
        %v1083 = vunpack.c.l.b16 %v980
        %v1084 = vunpack.c.h.b16 %v980
        %v1085 = vunpack.c.l.b16 %v981
        %v1086 = vunpack.c.h.b16 %v981
        %v1087 = vunpack.c.l.b16 %v982
        %v1088 = vunpack.c.h.b16 %v982
        %v1089 = vunpack.c.l.b16 %v983
        %v1090 = vunpack.c.h.b16 %v983
        %v1091 = vunpack.c.l.b16 %v984
        %v1092 = vunpack.c.h.b16 %v984
        %v1093 = vunpack.c.l.b16 %v985
        %v1094 = vunpack.c.h.b16 %v985
        %v1095 = vunpack.c.l.b16 %v986
        %v1096 = vunpack.c.h.b16 %v986
        %v1097 = vunpack.c.l.b16 %v987
        %v1098 = vunpack.c.h.b16 %v987
        %v1099 = vunpack.c.l.b16 %v988
        %v1100 = vunpack.c.h.b16 %v988
        %v1101 = vunpack.c.l.b16 %v989
        %v1102 = vunpack.c.h.b16 %v989
        %v1103 = vunpack.c.l.b16 %v990
        %v1104 = vunpack.c.h.b16 %v990
        %v1105 = vunpack.c.l.b16 %v991
        %v1106 = vunpack.c.h.b16 %v991
        %v1107 = vunpack.c.l.b16 %v992
        %v1108 = vunpack.c.h.b16 %v992
        %v1109 = vpack.c.b16 %v1077, %v1075
        %v1110 = vpack.c.b16 %v1078, %v1076
        %v1111 = vpack.c.b16 %v1081, %v1079
        %v1112 = vpack.c.b16 %v1082, %v1080
        %v1113 = vpack.c.b16 %v1085, %v1083
        %v1114 = vpack.c.b16 %v1086, %v1084
        %v1115 = vpack.c.b16 %v1089, %v1087
        %v1116 = vpack.c.b16 %v1090, %v1088
        %v1117 = vpack.c.b16 %v1093, %v1091
        %v1118 = vpack.c.b16 %v1094, %v1092
        %v1119 = vpack.c.b16 %v1097, %v1095
        %v1120 = vpack.c.b16 %v1098, %v1096
        %v1121 = vpack.c.b16 %v1101, %v1099
        %v1122 = vpack.c.b16 %v1102, %v1100
        %v1123 = vpack.c.b16 %v1105, %v1103
        %v1124 = vpack.c.b16 %v1106, %v1104
        %v1125 = vpack.c.b16 %v1107, %v1107
        %v1126 = vpack.c.b16 %v1108, %v1108
        %vm1127 = vcmask 1044480
        %v1128 = vrot.slane %v1109, 3
        %v1129 = vrot.slane %v1111, 3
        %v1130 = vsel %vm1127, %v1128, %v1129
        %v1131 = vrot.slane %v1110, 3
        %v1132 = vrot.slane %v1112, 3
        %v1133 = vsel %vm1127, %v1131, %v1132
        %v1134 = vrot.slane %v1113, 3
        %v1135 = vsel %vm1127, %v1129, %v1134
        %v1136 = vrot.slane %v1114, 3
        %v1137 = vsel %vm1127, %v1132, %v1136
        %v1138 = vrot.slane %v1115, 3
        %v1139 = vsel %vm1127, %v1134, %v1138
        %v1140 = vrot.slane %v1116, 3
        %v1141 = vsel %vm1127, %v1136, %v1140
        %v1142 = vrot.slane %v1117, 3
        %v1143 = vsel %vm1127, %v1138, %v1142
        %v1144 = vrot.slane %v1118, 3
        %v1145 = vsel %vm1127, %v1140, %v1144
        %v1146 = vrot.slane %v1119, 3
        %v1147 = vsel %vm1127, %v1142, %v1146
        %v1148 = vrot.slane %v1120, 3
        %v1149 = vsel %vm1127, %v1144, %v1148
        %v1150 = vrot.slane %v1121, 3
        %v1151 = vsel %vm1127, %v1146, %v1150
        %v1152 = vrot.slane %v1122, 3
        %v1153 = vsel %vm1127, %v1148, %v1152
        %v1154 = vrot.slane %v1123, 3
        %v1155 = vsel %vm1127, %v1150, %v1154
        %v1156 = vrot.slane %v1124, 3
        %v1157 = vsel %vm1127, %v1152, %v1156
        %v1158 = vrot.slane %v1125, 3
        %v1159 = vsel %vm1127, %v1154, %v1158
        %v1160 = vrot.slane %v1126, 3
        %v1161 = vsel %vm1127, %v1156, %v1160
        %v1210 = vunpack.c.l.b16 %v1026
        %v1211 = vunpack.c.h.b16 %v1026
        %v1212 = vunpack.c.l.b16 %v1027
        %v1213 = vunpack.c.h.b16 %v1027
        %v1214 = vunpack.c.l.b16 %v1028
        %v1215 = vunpack.c.h.b16 %v1028
        %v1216 = vunpack.c.l.b16 %v1029
        %v1217 = vunpack.c.h.b16 %v1029
        %v1218 = vunpack.c.l.b16 %v1030
        %v1219 = vunpack.c.h.b16 %v1030
        %v1220 = vunpack.c.l.b16 %v1031
        %v1221 = vunpack.c.h.b16 %v1031
        %v1222 = vunpack.c.l.b16 %v1032
        %v1223 = vunpack.c.h.b16 %v1032
        %v1224 = vunpack.c.l.b16 %v1033
        %v1225 = vunpack.c.h.b16 %v1033
        %v1226 = vunpack.c.l.b16 %v1034
        %v1227 = vunpack.c.h.b16 %v1034
        %v1228 = vunpack.c.l.b16 %v1035
        %v1229 = vunpack.c.h.b16 %v1035
        %v1230 = vunpack.c.l.b16 %v1036
        %v1231 = vunpack.c.h.b16 %v1036
        %v1232 = vunpack.c.l.b16 %v1037
        %v1233 = vunpack.c.h.b16 %v1037
        %v1234 = vunpack.c.l.b16 %v1038
        %v1235 = vunpack.c.h.b16 %v1038
        %v1236 = vunpack.c.l.b16 %v1039
        %v1237 = vunpack.c.h.b16 %v1039
        %v1238 = vunpack.c.l.b16 %v1040
        %v1239 = vunpack.c.h.b16 %v1040
        %v1240 = vunpack.c.l.b16 %v1041
        %v1241 = vunpack.c.h.b16 %v1041
        %v1242 = vunpack.c.l.b16 %v1042
        %v1243 = vunpack.c.h.b16 %v1042
        %v1244 = vunpack.c.l.b16 %v1043
        %v1245 = vunpack.c.h.b16 %v1043
        %v1246 = vunpack.c.l.b16 %v1044
        %v1247 = vunpack.c.h.b16 %v1044
        %v1248 = vunpack.c.l.b16 %v1045
        %v1249 = vunpack.c.h.b16 %v1045
        %v1250 = vunpack.c.l.b16 %v1046
        %v1251 = vunpack.c.h.b16 %v1046
        %v1252 = vunpack.c.l.b16 %v1047
        %v1253 = vunpack.c.h.b16 %v1047
        %v1254 = vunpack.c.l.b16 %v1048
        %v1255 = vunpack.c.h.b16 %v1048
        %v1256 = vunpack.c.l.b16 %v1049
        %v1257 = vunpack.c.h.b16 %v1049
        %v1258 = vunpack.c.l.b16 %v1050
        %v1259 = vunpack.c.h.b16 %v1050
        %v1260 = vunpack.c.l.b16 %v1051
        %v1261 = vunpack.c.h.b16 %v1051
        %v1262 = vunpack.c.l.b16 %v1052
        %v1263 = vunpack.c.h.b16 %v1052
        %v1264 = vunpack.c.l.b16 %v1053
        %v1265 = vunpack.c.h.b16 %v1053
        %v1266 = vunpack.c.l.b16 %v1054
        %v1267 = vunpack.c.h.b16 %v1054
        %v1268 = vunpack.c.l.b16 %v1055
        %v1269 = vunpack.c.h.b16 %v1055
        %v1270 = vunpack.c.l.b16 %v1056
        %v1271 = vunpack.c.h.b16 %v1056
        %v1272 = vunpack.c.l.b16 %v1057
        %v1273 = vunpack.c.h.b16 %v1057
        %v1274 = vpack.c.b16 %v1212, %v1210
        %v1275 = vpack.c.b16 %v1213, %v1211
        %v1276 = vpack.c.b16 %v1216, %v1214
        %v1277 = vpack.c.b16 %v1217, %v1215
        %v1278 = vpack.c.b16 %v1220, %v1218
        %v1279 = vpack.c.b16 %v1221, %v1219
        %v1280 = vpack.c.b16 %v1224, %v1222
        %v1281 = vpack.c.b16 %v1225, %v1223
        %v1282 = vpack.c.b16 %v1228, %v1226
        %v1283 = vpack.c.b16 %v1229, %v1227
        %v1284 = vpack.c.b16 %v1232, %v1230
        %v1285 = vpack.c.b16 %v1233, %v1231
        %v1286 = vpack.c.b16 %v1236, %v1234
        %v1287 = vpack.c.b16 %v1237, %v1235
        %v1288 = vpack.c.b16 %v1240, %v1238
        %v1289 = vpack.c.b16 %v1241, %v1239
        %v1290 = vpack.c.b16 %v1244, %v1242
        %v1291 = vpack.c.b16 %v1245, %v1243
        %v1292 = vpack.c.b16 %v1248, %v1246
        %v1293 = vpack.c.b16 %v1249, %v1247
        %v1294 = vpack.c.b16 %v1252, %v1250
        %v1295 = vpack.c.b16 %v1253, %v1251
        %v1296 = vpack.c.b16 %v1256, %v1254
        %v1297 = vpack.c.b16 %v1257, %v1255
        %v1298 = vpack.c.b16 %v1260, %v1258
        %v1299 = vpack.c.b16 %v1261, %v1259
        %v1300 = vpack.c.b16 %v1264, %v1262
        %v1301 = vpack.c.b16 %v1265, %v1263
        %v1302 = vpack.c.b16 %v1268, %v1266
        %v1303 = vpack.c.b16 %v1269, %v1267
        %v1304 = vpack.c.b16 %v1272, %v1270
        %v1305 = vpack.c.b16 %v1273, %v1271
        %1338 = vmatprep.subr.bf16.mxu0 %v1275
        %1339 = vmatpush1.bf16.msra.mxu0 %v1274
        %1340 = vmatprep.subr.bf16.mxu0 %v1277
        %1341 = vmatpush1.bf16.msra.mxu0 %v1276
        %1342 = vmatprep.subr.bf16.mxu0 %v1279
        %1343 = vmatpush1.bf16.msra.mxu0 %v1278
        %1344 = vmatprep.subr.bf16.mxu0 %v1281
        %1345 = vmatpush1.bf16.msra.mxu0 %v1280
        %1346 = vmatprep.subr.bf16.mxu0 %v1283
        %1347 = vmatpush1.bf16.msra.mxu0 %v1282
        %1348 = vmatprep.subr.bf16.mxu0 %v1285
        %1349 = vmatpush1.bf16.msra.mxu0 %v1284
        %1350 = vmatprep.subr.bf16.mxu0 %v1287
        %1351 = vmatpush1.bf16.msra.mxu0 %v1286
        %1352 = vmatprep.subr.bf16.mxu0 %v1289
        %1353 = vmatpush1.bf16.msra.mxu0 %v1288
        %1354 = vmatprep.subr.bf16.mxu0 %v1291
        %1355 = vmatpush1.bf16.msra.mxu0 %v1290
        %1356 = vmatprep.subr.bf16.mxu0 %v1293
        %1357 = vmatpush1.bf16.msra.mxu0 %v1292
        %1358 = vmatprep.subr.bf16.mxu0 %v1295
        %1359 = vmatpush1.bf16.msra.mxu0 %v1294
        %1360 = vmatprep.subr.bf16.mxu0 %v1297
        %1361 = vmatpush1.bf16.msra.mxu0 %v1296
        %1362 = vmatprep.subr.bf16.mxu0 %v1299
        %1363 = vmatpush1.bf16.msra.mxu0 %v1298
        %1364 = vmatprep.subr.bf16.mxu0 %v1301
        %1365 = vmatpush1.bf16.msra.mxu0 %v1300
        %1366 = vmatprep.subr.bf16.mxu0 %v1303
        %1367 = vmatpush1.bf16.msra.mxu0 %v1302
        %1368 = vmatprep.subr.bf16.mxu0 %v1305
        %1369 = vmatpush1.bf16.msra.mxu0 %v1304
        %1370 = vmatprep.mubr.bf16.mxu0 %v1133
        %1371 = vmatmul.mubr.bf16.gmra.mrb[0].mxu0 %v1130
        %v1372 = vpop.f32.mrb[0].mxu0
        %v1373 = vadd.f32 0.0, %v1372
        %v1374 = vpop.f32.mrb[0].mxu0
        %v1375 = vadd.f32 0.0, %v1374
        %v1376 = vpop.f32.mrb[0].mxu0
        %v1377 = vadd.f32 0.0, %v1376
        %v1378 = vpop.f32.mrb[0].mxu0
        %v1379 = vadd.f32 0.0, %v1378
        %1380 = vmatprep.mubr.bf16.mxu0 %v1137
        %1381 = vmatmul.mubr.bf16.gmra.mrb[0].mxu0 %v1135
        %v1382 = vpop.f32.mrb[0].mxu0
        %v1383 = vadd.f32 0.0, %v1382
        %v1384 = vpop.f32.mrb[0].mxu0
        %v1385 = vadd.f32 0.0, %v1384
        %v1386 = vpop.f32.mrb[0].mxu0
        %v1387 = vadd.f32 0.0, %v1386
        %v1388 = vpop.f32.mrb[0].mxu0
        %v1389 = vadd.f32 0.0, %v1388
        %1390 = vmatprep.mubr.bf16.mxu0 %v1141
        %1391 = vmatmul.mubr.bf16.gmra.mrb[0].mxu0 %v1139
        %v1392 = vpop.f32.mrb[0].mxu0
        %v1393 = vadd.f32 0.0, %v1392
        %v1394 = vpop.f32.mrb[0].mxu0
        %v1395 = vadd.f32 0.0, %v1394
        %v1396 = vpop.f32.mrb[0].mxu0
        %v1397 = vadd.f32 0.0, %v1396
        %v1398 = vpop.f32.mrb[0].mxu0
        %v1399 = vadd.f32 0.0, %v1398
        %1400 = vmatprep.mubr.bf16.mxu0 %v1145
        %1401 = vmatmul.mubr.bf16.gmra.mrb[0].mxu0 %v1143
        %v1402 = vpop.f32.mrb[0].mxu0
        %v1403 = vadd.f32 0.0, %v1402
        %v1404 = vpop.f32.mrb[0].mxu0
        %v1405 = vadd.f32 0.0, %v1404
        %v1406 = vpop.f32.mrb[0].mxu0
        %v1407 = vadd.f32 0.0, %v1406
        %v1408 = vpop.f32.mrb[0].mxu0
        %v1409 = vadd.f32 0.0, %v1408
        %1410 = vmatprep.mubr.bf16.mxu0 %v1149
        %1411 = vmatmul.mubr.bf16.gmra.mrb[0].mxu0 %v1147
        %v1412 = vpop.f32.mrb[0].mxu0
        %v1413 = vadd.f32 0.0, %v1412
        %v1414 = vpop.f32.mrb[0].mxu0
        %v1415 = vadd.f32 0.0, %v1414
        %v1416 = vpop.f32.mrb[0].mxu0
        %v1417 = vadd.f32 0.0, %v1416
        %v1418 = vpop.f32.mrb[0].mxu0
        %v1419 = vadd.f32 0.0, %v1418
        %1420 = vmatprep.mubr.bf16.mxu0 %v1153
        %1421 = vmatmul.mubr.bf16.gmra.mrb[0].mxu0 %v1151
        %v1422 = vpop.f32.mrb[0].mxu0
        %v1423 = vadd.f32 0.0, %v1422
        %v1424 = vpop.f32.mrb[0].mxu0
        %v1425 = vadd.f32 0.0, %v1424
        %v1426 = vpop.f32.mrb[0].mxu0
        %v1427 = vadd.f32 0.0, %v1426
        %v1428 = vpop.f32.mrb[0].mxu0
        %v1429 = vadd.f32 0.0, %v1428
        %1430 = vmatprep.mubr.bf16.mxu0 %v1157
        %1431 = vmatmul.mubr.bf16.gmra.mrb[0].mxu0 %v1155
        %v1432 = vpop.f32.mrb[0].mxu0
        %v1433 = vadd.f32 0.0, %v1432
        %v1434 = vpop.f32.mrb[0].mxu0
        %v1435 = vadd.f32 0.0, %v1434
        %v1436 = vpop.f32.mrb[0].mxu0
        %v1437 = vadd.f32 0.0, %v1436
        %v1438 = vpop.f32.mrb[0].mxu0
        %v1439 = vadd.f32 0.0, %v1438
        %1440 = vmatprep.mubr.bf16.mxu0 %v1161
        %1441 = vmatmul.mubr.bf16.gmra.mrb[0].mxu0 %v1159
        %v1442 = vpop.f32.mrb[0].mxu0
        %v1443 = vadd.f32 0.0, %v1442
        %v1444 = vpop.f32.mrb[0].mxu0
        %v1445 = vadd.f32 0.0, %v1444
        %v1446 = vpop.f32.mrb[0].mxu0
        %v1447 = vadd.f32 0.0, %v1446
        %v1448 = vpop.f32.mrb[0].mxu0
        %v1449 = vadd.f32 0.0, %v1448
        %1450 = vdwg.mxu0
        %v1451 = vadd.f32 %v993, %v1373
        %v1452 = vadd.f32 %v994, %v1375
        %v1453 = vadd.f32 %v995, %v1377
        %v1454 = vadd.f32 %v996, %v1379
        %v1455 = vadd.f32 %v997, %v1383
        %v1456 = vadd.f32 %v998, %v1385
        %v1457 = vadd.f32 %v999, %v1387
        %v1458 = vadd.f32 %v1000, %v1389
        %v1459 = vadd.f32 %v1001, %v1393
        %v1460 = vadd.f32 %v1002, %v1395
        %v1461 = vadd.f32 %v1003, %v1397
        %v1462 = vadd.f32 %v1004, %v1399
        %v1463 = vadd.f32 %v1005, %v1403
        %v1464 = vadd.f32 %v1006, %v1405
        %v1465 = vadd.f32 %v1007, %v1407
        %v1466 = vadd.f32 %v1008, %v1409
        %v1467 = vadd.f32 %v1009, %v1413
        %v1468 = vadd.f32 %v1010, %v1415
        %v1469 = vadd.f32 %v1011, %v1417
        %v1470 = vadd.f32 %v1012, %v1419
        %v1471 = vadd.f32 %v1013, %v1423
        %v1472 = vadd.f32 %v1014, %v1425
        %v1473 = vadd.f32 %v1015, %v1427
        %v1474 = vadd.f32 %v1016, %v1429
        %v1475 = vadd.f32 %v1017, %v1433
        %v1476 = vadd.f32 %v1018, %v1435
        %v1477 = vadd.f32 %v1019, %v1437
        %v1478 = vadd.f32 %v1020, %v1439
        %v1479 = vadd.f32 %v1021, %v1443
        %v1480 = vadd.f32 %v1022, %v1445
        %v1481 = vadd.f32 %v1023, %v1447
        %v1482 = vadd.f32 %v1024, %v1449
        %1483 = vst [vmem:[#allocation2] sm:$0xff] %v1451
        %1484 = vst [vmem:[#allocation2 + $0x8] sm:$0xff] %v1452
        %1485 = vst [vmem:[#allocation2 + $0x10] sm:$0xff] %v1453
        %1486 = vst [vmem:[#allocation2 + $0x18] sm:$0xff] %v1454
        %1487 = vst [vmem:[#allocation2 + $0x20] sm:$0xff] %v1455
        %1488 = vst [vmem:[#allocation2 + $0x28] sm:$0xff] %v1456
        %1489 = vst [vmem:[#allocation2 + $0x30] sm:$0xff] %v1457
        %1490 = vst [vmem:[#allocation2 + $0x38] sm:$0xff] %v1458
        %1491 = vst [vmem:[#allocation2 + $0x40] sm:$0xff] %v1459
        %1492 = vst [vmem:[#allocation2 + $0x48] sm:$0xff] %v1460
        %1493 = vst [vmem:[#allocation2 + $0x50] sm:$0xff] %v1461
        %1494 = vst [vmem:[#allocation2 + $0x58] sm:$0xff] %v1462
        %1495 = vst [vmem:[#allocation2 + $0x60] sm:$0xff] %v1463
        %1496 = vst [vmem:[#allocation2 + $0x68] sm:$0xff] %v1464
        %1497 = vst [vmem:[#allocation2 + $0x70] sm:$0xff] %v1465
        %1498 = vst [vmem:[#allocation2 + $0x78] sm:$0xff] %v1466
        %1499 = vst [vmem:[#allocation2 + $0x80] sm:$0xff] %v1467
        %1500 = vst [vmem:[#allocation2 + $0x88] sm:$0xff] %v1468
        %1501 = vst [vmem:[#allocation2 + $0x90] sm:$0xff] %v1469
        %1502 = vst [vmem:[#allocation2 + $0x98] sm:$0xff] %v1470
        %1503 = vst [vmem:[#allocation2 + $0xa0] sm:$0xff] %v1471
        %1504 = vst [vmem:[#allocation2 + $0xa8] sm:$0xff] %v1472
        %1505 = vst [vmem:[#allocation2 + $0xb0] sm:$0xff] %v1473
        %1506 = vst [vmem:[#allocation2 + $0xb8] sm:$0xff] %v1474
        %1507 = vst [vmem:[#allocation2 + $0xc0] sm:$0xff] %v1475
        %1508 = vst [vmem:[#allocation2 + $0xc8] sm:$0xff] %v1476
        %1509 = vst [vmem:[#allocation2 + $0xd0] sm:$0xff] %v1477
        %1510 = vst [vmem:[#allocation2 + $0xd8] sm:$0xff] %v1478
        %1511 = vst [vmem:[#allocation2 + $0xe0] sm:$0xff] %v1479
        %1512 = vst [vmem:[#allocation2 + $0xe8] sm:$0xff] %v1480
        %1513 = vst [vmem:[#allocation2 + $0xf0] sm:$0xff] %v1481
        %1514 = vst [vmem:[#allocation2 + $0xf8] sm:$0xff] %v1482
        %v1515 = vld [vmem:[%s311] sm:$0xff]
        %v1516 = vld [vmem:[%s311 + $0x8] sm:$0xff]
        %v1517 = vld [vmem:[%s311 + $0x10] sm:$0xff]
        %v1518 = vld [vmem:[%s311 + $0x18] sm:$0xff]
        %v1519 = vld [vmem:[%s311 + $0x20] sm:$0xff]
        %v1520 = vld [vmem:[%s311 + $0x28] sm:$0xff]
        %v1521 = vld [vmem:[%s311 + $0x30] sm:$0xff]
        %v1522 = vld [vmem:[%s311 + $0x38] sm:$0xff]
        %v1523 = vld [vmem:[%s311 + $0x40] sm:$0xff]
        %v1524 = vld [vmem:[%s311 + $0x48] sm:$0xff]
        %v1525 = vld [vmem:[%s311 + $0x50] sm:$0xff]
        %v1526 = vld [vmem:[%s311 + $0x58] sm:$0xff]
        %v1527 = vld [vmem:[%s311 + $0x60] sm:$0xff]
        %v1528 = vld [vmem:[%s311 + $0x68] sm:$0xff]
        %v1529 = vld [vmem:[%s311 + $0x70] sm:$0xff]
        %v1530 = vld [vmem:[%s311 + $0x78] sm:$0xff]
        %v1531 = vld [vmem:[%s311 + $0x80] sm:$0xff]
        %v1532 = vld [vmem:[#allocation2] sm:$0xff]
        %v1533 = vld [vmem:[#allocation2 + $0x8] sm:$0xff]
        %v1534 = vld [vmem:[#allocation2 + $0x10] sm:$0xff]
        %v1535 = vld [vmem:[#allocation2 + $0x18] sm:$0xff]
        %v1536 = vld [vmem:[#allocation2 + $0x20] sm:$0xff]
        %v1537 = vld [vmem:[#allocation2 + $0x28] sm:$0xff]
        %v1538 = vld [vmem:[#allocation2 + $0x30] sm:$0xff]
        %v1539 = vld [vmem:[#allocation2 + $0x38] sm:$0xff]
        %v1540 = vld [vmem:[#allocation2 + $0x40] sm:$0xff]
        %v1541 = vld [vmem:[#allocation2 + $0x48] sm:$0xff]
        %v1542 = vld [vmem:[#allocation2 + $0x50] sm:$0xff]
        %v1543 = vld [vmem:[#allocation2 + $0x58] sm:$0xff]
        %v1544 = vld [vmem:[#allocation2 + $0x60] sm:$0xff]
        %v1545 = vld [vmem:[#allocation2 + $0x68] sm:$0xff]
        %v1546 = vld [vmem:[#allocation2 + $0x70] sm:$0xff]
        %v1547 = vld [vmem:[#allocation2 + $0x78] sm:$0xff]
        %v1548 = vld [vmem:[#allocation2 + $0x80] sm:$0xff]
        %v1549 = vld [vmem:[#allocation2 + $0x88] sm:$0xff]
        %v1550 = vld [vmem:[#allocation2 + $0x90] sm:$0xff]
        %v1551 = vld [vmem:[#allocation2 + $0x98] sm:$0xff]
        %v1552 = vld [vmem:[#allocation2 + $0xa0] sm:$0xff]
        %v1553 = vld [vmem:[#allocation2 + $0xa8] sm:$0xff]
        %v1554 = vld [vmem:[#allocation2 + $0xb0] sm:$0xff]
        %v1555 = vld [vmem:[#allocation2 + $0xb8] sm:$0xff]
        %v1556 = vld [vmem:[#allocation2 + $0xc0] sm:$0xff]
        %v1557 = vld [vmem:[#allocation2 + $0xc8] sm:$0xff]
        %v1558 = vld [vmem:[#allocation2 + $0xd0] sm:$0xff]
        %v1559 = vld [vmem:[#allocation2 + $0xd8] sm:$0xff]
        %v1560 = vld [vmem:[#allocation2 + $0xe0] sm:$0xff]
        %v1561 = vld [vmem:[#allocation2 + $0xe8] sm:$0xff]
        %v1562 = vld [vmem:[#allocation2 + $0xf0] sm:$0xff]
        %v1563 = vld [vmem:[#allocation2 + $0xf8] sm:$0xff]
        %s1564 = scalar_lea.vmem [#allocation6], 512
        %v1565 = vld [vmem:[%s1564] sm:$0xff]
        %v1566 = vld [vmem:[%s1564 + $0x8] sm:$0xff]
        %v1567 = vld [vmem:[%s1564 + $0x10] sm:$0xff]
        %v1568 = vld [vmem:[%s1564 + $0x18] sm:$0xff]
        %v1569 = vld [vmem:[%s1564 + $0x20] sm:$0xff]
        %v1570 = vld [vmem:[%s1564 + $0x28] sm:$0xff]
        %v1571 = vld [vmem:[%s1564 + $0x30] sm:$0xff]
        %v1572 = vld [vmem:[%s1564 + $0x38] sm:$0xff]
        %v1573 = vld [vmem:[%s1564 + $0x40] sm:$0xff]
        %v1574 = vld [vmem:[%s1564 + $0x48] sm:$0xff]
        %v1575 = vld [vmem:[%s1564 + $0x50] sm:$0xff]
        %v1576 = vld [vmem:[%s1564 + $0x58] sm:$0xff]
        %v1577 = vld [vmem:[%s1564 + $0x60] sm:$0xff]
        %v1578 = vld [vmem:[%s1564 + $0x68] sm:$0xff]
        %v1579 = vld [vmem:[%s1564 + $0x70] sm:$0xff]
        %v1580 = vld [vmem:[%s1564 + $0x78] sm:$0xff]
        %v1581 = vld [vmem:[%s1564 + $0x80] sm:$0xff]
        %v1582 = vld [vmem:[%s1564 + $0x88] sm:$0xff]
        %v1583 = vld [vmem:[%s1564 + $0x90] sm:$0xff]
        %v1584 = vld [vmem:[%s1564 + $0x98] sm:$0xff]
        %v1585 = vld [vmem:[%s1564 + $0xa0] sm:$0xff]
        %v1586 = vld [vmem:[%s1564 + $0xa8] sm:$0xff]
        %v1587 = vld [vmem:[%s1564 + $0xb0] sm:$0xff]
        %v1588 = vld [vmem:[%s1564 + $0xb8] sm:$0xff]
        %v1589 = vld [vmem:[%s1564 + $0xc0] sm:$0xff]
        %v1590 = vld [vmem:[%s1564 + $0xc8] sm:$0xff]
        %v1591 = vld [vmem:[%s1564 + $0xd0] sm:$0xff]
        %v1592 = vld [vmem:[%s1564 + $0xd8] sm:$0xff]
        %v1593 = vld [vmem:[%s1564 + $0xe0] sm:$0xff]
        %v1594 = vld [vmem:[%s1564 + $0xe8] sm:$0xff]
        %v1595 = vld [vmem:[%s1564 + $0xf0] sm:$0xff]
        %v1596 = vld [vmem:[%s1564 + $0xf8] sm:$0xff]
        %v1614 = vunpack.c.l.b16 %v1515
        %v1615 = vunpack.c.h.b16 %v1515
        %v1616 = vunpack.c.l.b16 %v1516
        %v1617 = vunpack.c.h.b16 %v1516
        %v1618 = vunpack.c.l.b16 %v1517
        %v1619 = vunpack.c.h.b16 %v1517
        %v1620 = vunpack.c.l.b16 %v1518
        %v1621 = vunpack.c.h.b16 %v1518
        %v1622 = vunpack.c.l.b16 %v1519
        %v1623 = vunpack.c.h.b16 %v1519
        %v1624 = vunpack.c.l.b16 %v1520
        %v1625 = vunpack.c.h.b16 %v1520
        %v1626 = vunpack.c.l.b16 %v1521
        %v1627 = vunpack.c.h.b16 %v1521
        %v1628 = vunpack.c.l.b16 %v1522
        %v1629 = vunpack.c.h.b16 %v1522
        %v1630 = vunpack.c.l.b16 %v1523
        %v1631 = vunpack.c.h.b16 %v1523
        %v1632 = vunpack.c.l.b16 %v1524
        %v1633 = vunpack.c.h.b16 %v1524
        %v1634 = vunpack.c.l.b16 %v1525
        %v1635 = vunpack.c.h.b16 %v1525
        %v1636 = vunpack.c.l.b16 %v1526
        %v1637 = vunpack.c.h.b16 %v1526
        %v1638 = vunpack.c.l.b16 %v1527
        %v1639 = vunpack.c.h.b16 %v1527
        %v1640 = vunpack.c.l.b16 %v1528
        %v1641 = vunpack.c.h.b16 %v1528
        %v1642 = vunpack.c.l.b16 %v1529
        %v1643 = vunpack.c.h.b16 %v1529
        %v1644 = vunpack.c.l.b16 %v1530
        %v1645 = vunpack.c.h.b16 %v1530
        %v1646 = vunpack.c.l.b16 %v1531
        %v1647 = vunpack.c.h.b16 %v1531
        %v1648 = vpack.c.b16 %v1616, %v1614
        %v1649 = vpack.c.b16 %v1617, %v1615
        %v1650 = vpack.c.b16 %v1620, %v1618
        %v1651 = vpack.c.b16 %v1621, %v1619
        %v1652 = vpack.c.b16 %v1624, %v1622
        %v1653 = vpack.c.b16 %v1625, %v1623
        %v1654 = vpack.c.b16 %v1628, %v1626
        %v1655 = vpack.c.b16 %v1629, %v1627
        %v1656 = vpack.c.b16 %v1632, %v1630
        %v1657 = vpack.c.b16 %v1633, %v1631
        %v1658 = vpack.c.b16 %v1636, %v1634
        %v1659 = vpack.c.b16 %v1637, %v1635
        %v1660 = vpack.c.b16 %v1640, %v1638
        %v1661 = vpack.c.b16 %v1641, %v1639
        %v1662 = vpack.c.b16 %v1644, %v1642
        %v1663 = vpack.c.b16 %v1645, %v1643
        %v1664 = vpack.c.b16 %v1646, %v1646
        %v1665 = vpack.c.b16 %v1647, %v1647
        %vm1666 = vsmask.f32 4352
        %v1668 = vshrl.u32 %v1648, 16
        %v1670 = vrot.slane %v1668, 3
        %v1671 = vshll.u32 %v1648, 16
        %v1673 = vrot.slane %v1671, 4
        %v1674 = vor.u32 %v1670, %v1673
        %v1676 = vshrl.u32 %v1650, 16
        %v1678 = vrot.slane %v1676, 3
        %v1679 = vshll.u32 %v1650, 16
        %v1681 = vrot.slane %v1679, 4
        %v1682 = vor.u32 %v1678, %v1681
        %v1683 = vsel %vm1666, %v1674, %v1682
        %v1685 = vshrl.u32 %v1649, 16
        %v1687 = vrot.slane %v1685, 3
        %v1688 = vshll.u32 %v1649, 16
        %v1690 = vrot.slane %v1688, 4
        %v1691 = vor.u32 %v1687, %v1690
        %v1693 = vshrl.u32 %v1651, 16
        %v1695 = vrot.slane %v1693, 3
        %v1696 = vshll.u32 %v1651, 16
        %v1698 = vrot.slane %v1696, 4
        %v1699 = vor.u32 %v1695, %v1698
        %v1700 = vsel %vm1666, %v1691, %v1699
        %v1702 = vshrl.u32 %v1652, 16
        %v1704 = vrot.slane %v1702, 3
        %v1705 = vshll.u32 %v1652, 16
        %v1707 = vrot.slane %v1705, 4
        %v1708 = vor.u32 %v1704, %v1707
        %v1709 = vsel %vm1666, %v1682, %v1708
        %v1711 = vshrl.u32 %v1653, 16
        %v1713 = vrot.slane %v1711, 3
        %v1714 = vshll.u32 %v1653, 16
        %v1716 = vrot.slane %v1714, 4
        %v1717 = vor.u32 %v1713, %v1716
        %v1718 = vsel %vm1666, %v1699, %v1717
        %v1720 = vshrl.u32 %v1654, 16
        %v1722 = vrot.slane %v1720, 3
        %v1723 = vshll.u32 %v1654, 16
        %v1725 = vrot.slane %v1723, 4
        %v1726 = vor.u32 %v1722, %v1725
        %v1727 = vsel %vm1666, %v1708, %v1726
        %v1729 = vshrl.u32 %v1655, 16
        %v1731 = vrot.slane %v1729, 3
        %v1732 = vshll.u32 %v1655, 16
        %v1734 = vrot.slane %v1732, 4
        %v1735 = vor.u32 %v1731, %v1734
        %v1736 = vsel %vm1666, %v1717, %v1735
        %v1738 = vshrl.u32 %v1656, 16
        %v1740 = vrot.slane %v1738, 3
        %v1741 = vshll.u32 %v1656, 16
        %v1743 = vrot.slane %v1741, 4
        %v1744 = vor.u32 %v1740, %v1743
        %v1745 = vsel %vm1666, %v1726, %v1744
        %v1747 = vshrl.u32 %v1657, 16
        %v1749 = vrot.slane %v1747, 3
        %v1750 = vshll.u32 %v1657, 16
        %v1752 = vrot.slane %v1750, 4
        %v1753 = vor.u32 %v1749, %v1752
        %v1754 = vsel %vm1666, %v1735, %v1753
        %v1756 = vshrl.u32 %v1658, 16
        %v1758 = vrot.slane %v1756, 3
        %v1759 = vshll.u32 %v1658, 16
        %v1761 = vrot.slane %v1759, 4
        %v1762 = vor.u32 %v1758, %v1761
        %v1763 = vsel %vm1666, %v1744, %v1762
        %v1765 = vshrl.u32 %v1659, 16
        %v1767 = vrot.slane %v1765, 3
        %v1768 = vshll.u32 %v1659, 16
        %v1770 = vrot.slane %v1768, 4
        %v1771 = vor.u32 %v1767, %v1770
        %v1772 = vsel %vm1666, %v1753, %v1771
        %v1774 = vshrl.u32 %v1660, 16
        %v1776 = vrot.slane %v1774, 3
        %v1777 = vshll.u32 %v1660, 16
        %v1779 = vrot.slane %v1777, 4
        %v1780 = vor.u32 %v1776, %v1779
        %v1781 = vsel %vm1666, %v1762, %v1780
        %v1783 = vshrl.u32 %v1661, 16
        %v1785 = vrot.slane %v1783, 3
        %v1786 = vshll.u32 %v1661, 16
        %v1788 = vrot.slane %v1786, 4
        %v1789 = vor.u32 %v1785, %v1788
        %v1790 = vsel %vm1666, %v1771, %v1789
        %v1792 = vshrl.u32 %v1662, 16
        %v1794 = vrot.slane %v1792, 3
        %v1795 = vshll.u32 %v1662, 16
        %v1797 = vrot.slane %v1795, 4
        %v1798 = vor.u32 %v1794, %v1797
        %v1799 = vsel %vm1666, %v1780, %v1798
        %v1801 = vshrl.u32 %v1663, 16
        %v1803 = vrot.slane %v1801, 3
        %v1804 = vshll.u32 %v1663, 16
        %v1806 = vrot.slane %v1804, 4
        %v1807 = vor.u32 %v1803, %v1806
        %v1808 = vsel %vm1666, %v1789, %v1807
        %v1810 = vshrl.u32 %v1664, 16
        %v1812 = vrot.slane %v1810, 3
        %v1813 = vshll.u32 %v1664, 16
        %v1815 = vrot.slane %v1813, 4
        %v1816 = vor.u32 %v1812, %v1815
        %v1817 = vsel %vm1666, %v1798, %v1816
        %v1819 = vshrl.u32 %v1665, 16
        %v1821 = vrot.slane %v1819, 3
        %v1822 = vshll.u32 %v1665, 16
        %v1824 = vrot.slane %v1822, 4
        %v1825 = vor.u32 %v1821, %v1824
        %v1826 = vsel %vm1666, %v1807, %v1825
        %v1875 = vunpack.c.l.b16 %v1565
        %v1876 = vunpack.c.h.b16 %v1565
        %v1877 = vunpack.c.l.b16 %v1566
        %v1878 = vunpack.c.h.b16 %v1566
        %v1879 = vunpack.c.l.b16 %v1567
        %v1880 = vunpack.c.h.b16 %v1567
        %v1881 = vunpack.c.l.b16 %v1568
        %v1882 = vunpack.c.h.b16 %v1568
        %v1883 = vunpack.c.l.b16 %v1569
        %v1884 = vunpack.c.h.b16 %v1569
        %v1885 = vunpack.c.l.b16 %v1570
        %v1886 = vunpack.c.h.b16 %v1570
        %v1887 = vunpack.c.l.b16 %v1571
        %v1888 = vunpack.c.h.b16 %v1571
        %v1889 = vunpack.c.l.b16 %v1572
        %v1890 = vunpack.c.h.b16 %v1572
        %v1891 = vunpack.c.l.b16 %v1573
        %v1892 = vunpack.c.h.b16 %v1573
        %v1893 = vunpack.c.l.b16 %v1574
        %v1894 = vunpack.c.h.b16 %v1574
        %v1895 = vunpack.c.l.b16 %v1575
        %v1896 = vunpack.c.h.b16 %v1575
        %v1897 = vunpack.c.l.b16 %v1576
        %v1898 = vunpack.c.h.b16 %v1576
        %v1899 = vunpack.c.l.b16 %v1577
        %v1900 = vunpack.c.h.b16 %v1577
        %v1901 = vunpack.c.l.b16 %v1578
        %v1902 = vunpack.c.h.b16 %v1578
        %v1903 = vunpack.c.l.b16 %v1579
        %v1904 = vunpack.c.h.b16 %v1579
        %v1905 = vunpack.c.l.b16 %v1580
        %v1906 = vunpack.c.h.b16 %v1580
        %v1907 = vunpack.c.l.b16 %v1581
        %v1908 = vunpack.c.h.b16 %v1581
        %v1909 = vunpack.c.l.b16 %v1582
        %v1910 = vunpack.c.h.b16 %v1582
        %v1911 = vunpack.c.l.b16 %v1583
        %v1912 = vunpack.c.h.b16 %v1583
        %v1913 = vunpack.c.l.b16 %v1584
        %v1914 = vunpack.c.h.b16 %v1584
        %v1915 = vunpack.c.l.b16 %v1585
        %v1916 = vunpack.c.h.b16 %v1585
        %v1917 = vunpack.c.l.b16 %v1586
        %v1918 = vunpack.c.h.b16 %v1586
        %v1919 = vunpack.c.l.b16 %v1587
        %v1920 = vunpack.c.h.b16 %v1587
        %v1921 = vunpack.c.l.b16 %v1588
        %v1922 = vunpack.c.h.b16 %v1588
        %v1923 = vunpack.c.l.b16 %v1589
        %v1924 = vunpack.c.h.b16 %v1589
        %v1925 = vunpack.c.l.b16 %v1590
        %v1926 = vunpack.c.h.b16 %v1590
        %v1927 = vunpack.c.l.b16 %v1591
        %v1928 = vunpack.c.h.b16 %v1591
        %v1929 = vunpack.c.l.b16 %v1592
        %v1930 = vunpack.c.h.b16 %v1592
        %v1931 = vunpack.c.l.b16 %v1593
        %v1932 = vunpack.c.h.b16 %v1593
        %v1933 = vunpack.c.l.b16 %v1594
        %v1934 = vunpack.c.h.b16 %v1594
        %v1935 = vunpack.c.l.b16 %v1595
        %v1936 = vunpack.c.h.b16 %v1595
        %v1937 = vunpack.c.l.b16 %v1596
        %v1938 = vunpack.c.h.b16 %v1596
        %v1939 = vpack.c.b16 %v1877, %v1875
        %v1940 = vpack.c.b16 %v1878, %v1876
        %v1941 = vpack.c.b16 %v1881, %v1879
        %v1942 = vpack.c.b16 %v1882, %v1880
        %v1943 = vpack.c.b16 %v1885, %v1883
        %v1944 = vpack.c.b16 %v1886, %v1884
        %v1945 = vpack.c.b16 %v1889, %v1887
        %v1946 = vpack.c.b16 %v1890, %v1888
        %v1947 = vpack.c.b16 %v1893, %v1891
        %v1948 = vpack.c.b16 %v1894, %v1892
        %v1949 = vpack.c.b16 %v1897, %v1895
        %v1950 = vpack.c.b16 %v1898, %v1896
        %v1951 = vpack.c.b16 %v1901, %v1899
        %v1952 = vpack.c.b16 %v1902, %v1900
        %v1953 = vpack.c.b16 %v1905, %v1903
        %v1954 = vpack.c.b16 %v1906, %v1904
        %v1955 = vpack.c.b16 %v1909, %v1907
        %v1956 = vpack.c.b16 %v1910, %v1908
        %v1957 = vpack.c.b16 %v1913, %v1911
        %v1958 = vpack.c.b16 %v1914, %v1912
        %v1959 = vpack.c.b16 %v1917, %v1915
        %v1960 = vpack.c.b16 %v1918, %v1916
        %v1961 = vpack.c.b16 %v1921, %v1919
        %v1962 = vpack.c.b16 %v1922, %v1920
        %v1963 = vpack.c.b16 %v1925, %v1923
        %v1964 = vpack.c.b16 %v1926, %v1924
        %v1965 = vpack.c.b16 %v1929, %v1927
        %v1966 = vpack.c.b16 %v1930, %v1928
        %v1967 = vpack.c.b16 %v1933, %v1931
        %v1968 = vpack.c.b16 %v1934, %v1932
        %v1969 = vpack.c.b16 %v1937, %v1935
        %v1970 = vpack.c.b16 %v1938, %v1936
        %2003 = vmatprep.subr.bf16.mxu0 %v1940
        %2004 = vmatpush1.bf16.msra.mxu0 %v1939
        %2005 = vmatprep.subr.bf16.mxu0 %v1942
        %2006 = vmatpush1.bf16.msra.mxu0 %v1941
        %2007 = vmatprep.subr.bf16.mxu0 %v1944
        %2008 = vmatpush1.bf16.msra.mxu0 %v1943
        %2009 = vmatprep.subr.bf16.mxu0 %v1946
        %2010 = vmatpush1.bf16.msra.mxu0 %v1945
        %2011 = vmatprep.subr.bf16.mxu0 %v1948
        %2012 = vmatpush1.bf16.msra.mxu0 %v1947
        %2013 = vmatprep.subr.bf16.mxu0 %v1950
        %2014 = vmatpush1.bf16.msra.mxu0 %v1949
        %2015 = vmatprep.subr.bf16.mxu0 %v1952
        %2016 = vmatpush1.bf16.msra.mxu0 %v1951
        %2017 = vmatprep.subr.bf16.mxu0 %v1954
        %2018 = vmatpush1.bf16.msra.mxu0 %v1953
        %2019 = vmatprep.subr.bf16.mxu0 %v1956
        %2020 = vmatpush1.bf16.msra.mxu0 %v1955
        %2021 = vmatprep.subr.bf16.mxu0 %v1958
        %2022 = vmatpush1.bf16.msra.mxu0 %v1957
        %2023 = vmatprep.subr.bf16.mxu0 %v1960
        %2024 = vmatpush1.bf16.msra.mxu0 %v1959
        %2025 = vmatprep.subr.bf16.mxu0 %v1962
        %2026 = vmatpush1.bf16.msra.mxu0 %v1961
        %2027 = vmatprep.subr.bf16.mxu0 %v1964
        %2028 = vmatpush1.bf16.msra.mxu0 %v1963
        %2029 = vmatprep.subr.bf16.mxu0 %v1966
        %2030 = vmatpush1.bf16.msra.mxu0 %v1965
        %2031 = vmatprep.subr.bf16.mxu0 %v1968
        %2032 = vmatpush1.bf16.msra.mxu0 %v1967
        %2033 = vmatprep.subr.bf16.mxu0 %v1970
        %2034 = vmatpush1.bf16.msra.mxu0 %v1969
        %2035 = vmatprep.mubr.bf16.mxu0 %v1700
        %2036 = vmatmul.mubr.bf16.gmra.mrb[0].mxu0 %v1683
        %v2037 = vpop.f32.mrb[0].mxu0
        %v2038 = vadd.f32 0.0, %v2037
        %v2039 = vpop.f32.mrb[0].mxu0
        %v2040 = vadd.f32 0.0, %v2039
        %v2041 = vpop.f32.mrb[0].mxu0
        %v2042 = vadd.f32 0.0, %v2041
        %v2043 = vpop.f32.mrb[0].mxu0
        %v2044 = vadd.f32 0.0, %v2043
        %2045 = vmatprep.mubr.bf16.mxu0 %v1718
        %2046 = vmatmul.mubr.bf16.gmra.mrb[0].mxu0 %v1709
        %v2047 = vpop.f32.mrb[0].mxu0
        %v2048 = vadd.f32 0.0, %v2047
        %v2049 = vpop.f32.mrb[0].mxu0
        %v2050 = vadd.f32 0.0, %v2049
        %v2051 = vpop.f32.mrb[0].mxu0
        %v2052 = vadd.f32 0.0, %v2051
        %v2053 = vpop.f32.mrb[0].mxu0
        %v2054 = vadd.f32 0.0, %v2053
        %2055 = vmatprep.mubr.bf16.mxu0 %v1736
        %2056 = vmatmul.mubr.bf16.gmra.mrb[0].mxu0 %v1727
        %v2057 = vpop.f32.mrb[0].mxu0
        %v2058 = vadd.f32 0.0, %v2057
        %v2059 = vpop.f32.mrb[0].mxu0
        %v2060 = vadd.f32 0.0, %v2059
        %v2061 = vpop.f32.mrb[0].mxu0
        %v2062 = vadd.f32 0.0, %v2061
        %v2063 = vpop.f32.mrb[0].mxu0
        %v2064 = vadd.f32 0.0, %v2063
        %2065 = vmatprep.mubr.bf16.mxu0 %v1754
        %2066 = vmatmul.mubr.bf16.gmra.mrb[0].mxu0 %v1745
        %v2067 = vpop.f32.mrb[0].mxu0
        %v2068 = vadd.f32 0.0, %v2067
        %v2069 = vpop.f32.mrb[0].mxu0
        %v2070 = vadd.f32 0.0, %v2069
        %v2071 = vpop.f32.mrb[0].mxu0
        %v2072 = vadd.f32 0.0, %v2071
        %v2073 = vpop.f32.mrb[0].mxu0
        %v2074 = vadd.f32 0.0, %v2073
        %2075 = vmatprep.mubr.bf16.mxu0 %v1772
        %2076 = vmatmul.mubr.bf16.gmra.mrb[0].mxu0 %v1763
        %v2077 = vpop.f32.mrb[0].mxu0
        %v2078 = vadd.f32 0.0, %v2077
        %v2079 = vpop.f32.mrb[0].mxu0
        %v2080 = vadd.f32 0.0, %v2079
        %v2081 = vpop.f32.mrb[0].mxu0
        %v2082 = vadd.f32 0.0, %v2081
        %v2083 = vpop.f32.mrb[0].mxu0
        %v2084 = vadd.f32 0.0, %v2083
        %2085 = vmatprep.mubr.bf16.mxu0 %v1790
        %2086 = vmatmul.mubr.bf16.gmra.mrb[0].mxu0 %v1781
        %v2087 = vpop.f32.mrb[0].mxu0
        %v2088 = vadd.f32 0.0, %v2087
        %v2089 = vpop.f32.mrb[0].mxu0
        %v2090 = vadd.f32 0.0, %v2089
        %v2091 = vpop.f32.mrb[0].mxu0
        %v2092 = vadd.f32 0.0, %v2091
        %v2093 = vpop.f32.mrb[0].mxu0
        %v2094 = vadd.f32 0.0, %v2093
        %2095 = vmatprep.mubr.bf16.mxu0 %v1808
        %2096 = vmatmul.mubr.bf16.gmra.mrb[0].mxu0 %v1799
        %v2097 = vpop.f32.mrb[0].mxu0
        %v2098 = vadd.f32 0.0, %v2097
        %v2099 = vpop.f32.mrb[0].mxu0
        %v2100 = vadd.f32 0.0, %v2099
        %v2101 = vpop.f32.mrb[0].mxu0
        %v2102 = vadd.f32 0.0, %v2101
        %v2103 = vpop.f32.mrb[0].mxu0
        %v2104 = vadd.f32 0.0, %v2103
        %2105 = vmatprep.mubr.bf16.mxu0 %v1826
        %2106 = vmatmul.mubr.bf16.gmra.mrb[0].mxu0 %v1817
        %v2107 = vpop.f32.mrb[0].mxu0
        %v2108 = vadd.f32 0.0, %v2107
        %v2109 = vpop.f32.mrb[0].mxu0
        %v2110 = vadd.f32 0.0, %v2109
        %v2111 = vpop.f32.mrb[0].mxu0
        %v2112 = vadd.f32 0.0, %v2111
        %v2113 = vpop.f32.mrb[0].mxu0
        %v2114 = vadd.f32 0.0, %v2113
        %2115 = vdwg.mxu0
        %v2116 = vadd.f32 %v1532, %v2038
        %v2117 = vadd.f32 %v1533, %v2040
        %v2118 = vadd.f32 %v1534, %v2042
        %v2119 = vadd.f32 %v1535, %v2044
        %v2120 = vadd.f32 %v1536, %v2048
        %v2121 = vadd.f32 %v1537, %v2050
        %v2122 = vadd.f32 %v1538, %v2052
        %v2123 = vadd.f32 %v1539, %v2054
        %v2124 = vadd.f32 %v1540, %v2058
        %v2125 = vadd.f32 %v1541, %v2060
        %v2126 = vadd.f32 %v1542, %v2062
        %v2127 = vadd.f32 %v1543, %v2064
        %v2128 = vadd.f32 %v1544, %v2068
        %v2129 = vadd.f32 %v1545, %v2070
        %v2130 = vadd.f32 %v1546, %v2072
        %v2131 = vadd.f32 %v1547, %v2074
        %v2132 = vadd.f32 %v1548, %v2078
        %v2133 = vadd.f32 %v1549, %v2080
        %v2134 = vadd.f32 %v1550, %v2082
        %v2135 = vadd.f32 %v1551, %v2084
        %v2136 = vadd.f32 %v1552, %v2088
        %v2137 = vadd.f32 %v1553, %v2090
        %v2138 = vadd.f32 %v1554, %v2092
        %v2139 = vadd.f32 %v1555, %v2094
        %v2140 = vadd.f32 %v1556, %v2098
        %v2141 = vadd.f32 %v1557, %v2100
        %v2142 = vadd.f32 %v1558, %v2102
        %v2143 = vadd.f32 %v1559, %v2104
        %v2144 = vadd.f32 %v1560, %v2108
        %v2145 = vadd.f32 %v1561, %v2110
        %v2146 = vadd.f32 %v1562, %v2112
        %v2147 = vadd.f32 %v1563, %v2114
        %2148 = vst [vmem:[#allocation2] sm:$0xff] %v2116
        %2149 = vst [vmem:[#allocation2 + $0x8] sm:$0xff] %v2117
        %2150 = vst [vmem:[#allocation2 + $0x10] sm:$0xff] %v2118
        %2151 = vst [vmem:[#allocation2 + $0x18] sm:$0xff] %v2119
        %2152 = vst [vmem:[#allocation2 + $0x20] sm:$0xff] %v2120
        %2153 = vst [vmem:[#allocation2 + $0x28] sm:$0xff] %v2121
        %2154 = vst [vmem:[#allocation2 + $0x30] sm:$0xff] %v2122
        %2155 = vst [vmem:[#allocation2 + $0x38] sm:$0xff] %v2123
        %2156 = vst [vmem:[#allocation2 + $0x40] sm:$0xff] %v2124
        %2157 = vst [vmem:[#allocation2 + $0x48] sm:$0xff] %v2125
        %2158 = vst [vmem:[#allocation2 + $0x50] sm:$0xff] %v2126
        %2159 = vst [vmem:[#allocation2 + $0x58] sm:$0xff] %v2127
        %2160 = vst [vmem:[#allocation2 + $0x60] sm:$0xff] %v2128
        %2161 = vst [vmem:[#allocation2 + $0x68] sm:$0xff] %v2129
        %2162 = vst [vmem:[#allocation2 + $0x70] sm:$0xff] %v2130
        %2163 = vst [vmem:[#allocation2 + $0x78] sm:$0xff] %v2131
        %2164 = vst [vmem:[#allocation2 + $0x80] sm:$0xff] %v2132
        %2165 = vst [vmem:[#allocation2 + $0x88] sm:$0xff] %v2133
        %2166 = vst [vmem:[#allocation2 + $0x90] sm:$0xff] %v2134
        %2167 = vst [vmem:[#allocation2 + $0x98] sm:$0xff] %v2135
        %2168 = vst [vmem:[#allocation2 + $0xa0] sm:$0xff] %v2136
        %2169 = vst [vmem:[#allocation2 + $0xa8] sm:$0xff] %v2137
        %2170 = vst [vmem:[#allocation2 + $0xb0] sm:$0xff] %v2138
        %2171 = vst [vmem:[#allocation2 + $0xb8] sm:$0xff] %v2139
        %2172 = vst [vmem:[#allocation2 + $0xc0] sm:$0xff] %v2140
        %2173 = vst [vmem:[#allocation2 + $0xc8] sm:$0xff] %v2141
        %2174 = vst [vmem:[#allocation2 + $0xd0] sm:$0xff] %v2142
        %2175 = vst [vmem:[#allocation2 + $0xd8] sm:$0xff] %v2143
        %2176 = vst [vmem:[#allocation2 + $0xe0] sm:$0xff] %v2144
        %2177 = vst [vmem:[#allocation2 + $0xe8] sm:$0xff] %v2145
        %2178 = vst [vmem:[#allocation2 + $0xf0] sm:$0xff] %v2146
        %2179 = vst [vmem:[#allocation2 + $0xf8] sm:$0xff] %v2147
        %s2180 = sadd.s32 %s306, 16
        %s2181 = sshra.s32 %s2180, 3
        %s2182 = sand.u32 %s2180, 7
        %s2183 = smul.u32 %s2181, 2
        %s2184 = smul.addr %s2183, 4
        %s2185 = scalar_lea.vmem [#allocation3], %s2184
        %v2186 = vld [vmem:[%s2185] sm:$0xff]
        %v2187 = vld [vmem:[%s2185 + $0x8] sm:$0xff]
        %v2188 = vld [vmem:[%s2185 + $0x10] sm:$0xff]
        %v2189 = vld [vmem:[%s2185 + $0x18] sm:$0xff]
        %v2190 = vld [vmem:[%s2185 + $0x20] sm:$0xff]
        %v2191 = vld [vmem:[%s2185 + $0x28] sm:$0xff]
        %v2192 = vld [vmem:[%s2185 + $0x30] sm:$0xff]
        %v2193 = vld [vmem:[%s2185 + $0x38] sm:$0xff]
        %v2194 = vld [vmem:[%s2185 + $0x40] sm:$0xff]
        %v2195 = vld [vmem:[%s2185 + $0x48] sm:$0xff]
        %v2196 = vld [vmem:[%s2185 + $0x50] sm:$0xff]
        %v2197 = vld [vmem:[%s2185 + $0x58] sm:$0xff]
        %v2198 = vld [vmem:[%s2185 + $0x60] sm:$0xff]
        %v2199 = vld [vmem:[%s2185 + $0x68] sm:$0xff]
        %v2200 = vld [vmem:[%s2185 + $0x70] sm:$0xff]
        %v2201 = vld [vmem:[%s2185 + $0x78] sm:$0xff]
        %v2202 = vld [vmem:[%s2185 + $0x80] sm:$0xff]
        %v2203 = vld [vmem:[#allocation2] sm:$0xff]
        %v2204 = vld [vmem:[#allocation2 + $0x8] sm:$0xff]
        %v2205 = vld [vmem:[#allocation2 + $0x10] sm:$0xff]
        %v2206 = vld [vmem:[#allocation2 + $0x18] sm:$0xff]
        %v2207 = vld [vmem:[#allocation2 + $0x20] sm:$0xff]
        %v2208 = vld [vmem:[#allocation2 + $0x28] sm:$0xff]
        %v2209 = vld [vmem:[#allocation2 + $0x30] sm:$0xff]
        %v2210 = vld [vmem:[#allocation2 + $0x38] sm:$0xff]
        %v2211 = vld [vmem:[#allocation2 + $0x40] sm:$0xff]
        %v2212 = vld [vmem:[#allocation2 + $0x48] sm:$0xff]
        %v2213 = vld [vmem:[#allocation2 + $0x50] sm:$0xff]
        %v2214 = vld [vmem:[#allocation2 + $0x58] sm:$0xff]
        %v2215 = vld [vmem:[#allocation2 + $0x60] sm:$0xff]
        %v2216 = vld [vmem:[#allocation2 + $0x68] sm:$0xff]
        %v2217 = vld [vmem:[#allocation2 + $0x70] sm:$0xff]
        %v2218 = vld [vmem:[#allocation2 + $0x78] sm:$0xff]
        %v2219 = vld [vmem:[#allocation2 + $0x80] sm:$0xff]
        %v2220 = vld [vmem:[#allocation2 + $0x88] sm:$0xff]
        %v2221 = vld [vmem:[#allocation2 + $0x90] sm:$0xff]
        %v2222 = vld [vmem:[#allocation2 + $0x98] sm:$0xff]
        %v2223 = vld [vmem:[#allocation2 + $0xa0] sm:$0xff]
        %v2224 = vld [vmem:[#allocation2 + $0xa8] sm:$0xff]
        %v2225 = vld [vmem:[#allocation2 + $0xb0] sm:$0xff]
        %v2226 = vld [vmem:[#allocation2 + $0xb8] sm:$0xff]
        %v2227 = vld [vmem:[#allocation2 + $0xc0] sm:$0xff]
        %v2228 = vld [vmem:[#allocation2 + $0xc8] sm:$0xff]
        %v2229 = vld [vmem:[#allocation2 + $0xd0] sm:$0xff]
        %v2230 = vld [vmem:[#allocation2 + $0xd8] sm:$0xff]
        %v2231 = vld [vmem:[#allocation2 + $0xe0] sm:$0xff]
        %v2232 = vld [vmem:[#allocation2 + $0xe8] sm:$0xff]
        %v2233 = vld [vmem:[#allocation2 + $0xf0] sm:$0xff]
        %v2234 = vld [vmem:[#allocation2 + $0xf8] sm:$0xff]
        %s2235 = scalar_lea.vmem [#allocation6], 768
        %v2236 = vld [vmem:[%s2235] sm:$0xff]
        %v2237 = vld [vmem:[%s2235 + $0x8] sm:$0xff]
        %v2238 = vld [vmem:[%s2235 + $0x10] sm:$0xff]
        %v2239 = vld [vmem:[%s2235 + $0x18] sm:$0xff]
        %v2240 = vld [vmem:[%s2235 + $0x20] sm:$0xff]
        %v2241 = vld [vmem:[%s2235 + $0x28] sm:$0xff]
        %v2242 = vld [vmem:[%s2235 + $0x30] sm:$0xff]
        %v2243 = vld [vmem:[%s2235 + $0x38] sm:$0xff]
        %v2244 = vld [vmem:[%s2235 + $0x40] sm:$0xff]
        %v2245 = vld [vmem:[%s2235 + $0x48] sm:$0xff]
        %v2246 = vld [vmem:[%s2235 + $0x50] sm:$0xff]
        %v2247 = vld [vmem:[%s2235 + $0x58] sm:$0xff]
        %v2248 = vld [vmem:[%s2235 + $0x60] sm:$0xff]
        %v2249 = vld [vmem:[%s2235 + $0x68] sm:$0xff]
        %v2250 = vld [vmem:[%s2235 + $0x70] sm:$0xff]
        %v2251 = vld [vmem:[%s2235 + $0x78] sm:$0xff]
        %v2252 = vld [vmem:[%s2235 + $0x80] sm:$0xff]
        %v2253 = vld [vmem:[%s2235 + $0x88] sm:$0xff]
        %v2254 = vld [vmem:[%s2235 + $0x90] sm:$0xff]
        %v2255 = vld [vmem:[%s2235 + $0x98] sm:$0xff]
        %v2256 = vld [vmem:[%s2235 + $0xa0] sm:$0xff]
        %v2257 = vld [vmem:[%s2235 + $0xa8] sm:$0xff]
        %v2258 = vld [vmem:[%s2235 + $0xb0] sm:$0xff]
        %v2259 = vld [vmem:[%s2235 + $0xb8] sm:$0xff]
        %v2260 = vld [vmem:[%s2235 + $0xc0] sm:$0xff]
        %v2261 = vld [vmem:[%s2235 + $0xc8] sm:$0xff]
        %v2262 = vld [vmem:[%s2235 + $0xd0] sm:$0xff]
        %v2263 = vld [vmem:[%s2235 + $0xd8] sm:$0xff]
        %v2264 = vld [vmem:[%s2235 + $0xe0] sm:$0xff]
        %v2265 = vld [vmem:[%s2235 + $0xe8] sm:$0xff]
        %v2266 = vld [vmem:[%s2235 + $0xf0] sm:$0xff]
        %v2267 = vld [vmem:[%s2235 + $0xf8] sm:$0xff]
        %v2285 = vunpack.c.l.b16 %v2186
        %v2286 = vunpack.c.h.b16 %v2186
        %v2287 = vunpack.c.l.b16 %v2187
        %v2288 = vunpack.c.h.b16 %v2187
        %v2289 = vunpack.c.l.b16 %v2188
        %v2290 = vunpack.c.h.b16 %v2188
        %v2291 = vunpack.c.l.b16 %v2189
        %v2292 = vunpack.c.h.b16 %v2189
        %v2293 = vunpack.c.l.b16 %v2190
        %v2294 = vunpack.c.h.b16 %v2190
        %v2295 = vunpack.c.l.b16 %v2191
        %v2296 = vunpack.c.h.b16 %v2191
        %v2297 = vunpack.c.l.b16 %v2192
        %v2298 = vunpack.c.h.b16 %v2192
        %v2299 = vunpack.c.l.b16 %v2193
        %v2300 = vunpack.c.h.b16 %v2193
        %v2301 = vunpack.c.l.b16 %v2194
        %v2302 = vunpack.c.h.b16 %v2194
        %v2303 = vunpack.c.l.b16 %v2195
        %v2304 = vunpack.c.h.b16 %v2195
        %v2305 = vunpack.c.l.b16 %v2196
        %v2306 = vunpack.c.h.b16 %v2196
        %v2307 = vunpack.c.l.b16 %v2197
        %v2308 = vunpack.c.h.b16 %v2197
        %v2309 = vunpack.c.l.b16 %v2198
        %v2310 = vunpack.c.h.b16 %v2198
        %v2311 = vunpack.c.l.b16 %v2199
        %v2312 = vunpack.c.h.b16 %v2199
        %v2313 = vunpack.c.l.b16 %v2200
        %v2314 = vunpack.c.h.b16 %v2200
        %v2315 = vunpack.c.l.b16 %v2201
        %v2316 = vunpack.c.h.b16 %v2201
        %v2317 = vunpack.c.l.b16 %v2202
        %v2318 = vunpack.c.h.b16 %v2202
        %v2319 = vpack.c.b16 %v2287, %v2285
        %v2320 = vpack.c.b16 %v2288, %v2286
        %v2321 = vpack.c.b16 %v2291, %v2289
        %v2322 = vpack.c.b16 %v2292, %v2290
        %v2323 = vpack.c.b16 %v2295, %v2293
        %v2324 = vpack.c.b16 %v2296, %v2294
        %v2325 = vpack.c.b16 %v2299, %v2297
        %v2326 = vpack.c.b16 %v2300, %v2298
        %v2327 = vpack.c.b16 %v2303, %v2301
        %v2328 = vpack.c.b16 %v2304, %v2302
        %v2329 = vpack.c.b16 %v2307, %v2305
        %v2330 = vpack.c.b16 %v2308, %v2306
        %v2331 = vpack.c.b16 %v2311, %v2309
        %v2332 = vpack.c.b16 %v2312, %v2310
        %v2333 = vpack.c.b16 %v2315, %v2313
        %v2334 = vpack.c.b16 %v2316, %v2314
        %v2335 = vpack.c.b16 %v2317, %v2317
        %v2336 = vpack.c.b16 %v2318, %v2318
        %v2338 = vshrl.u32 %v2319, 16
        %v2340 = vrot.slane %v2338, 3
        %v2341 = vshll.u32 %v2319, 16
        %v2343 = vrot.slane %v2341, 4
        %v2344 = vor.u32 %v2340, %v2343
        %v2346 = vshrl.u32 %v2321, 16
        %v2348 = vrot.slane %v2346, 3
        %v2349 = vshll.u32 %v2321, 16
        %v2351 = vrot.slane %v2349, 4
        %v2352 = vor.u32 %v2348, %v2351
        %v2353 = vsel %vm1666, %v2344, %v2352
        %v2355 = vshrl.u32 %v2320, 16
        %v2357 = vrot.slane %v2355, 3
        %v2358 = vshll.u32 %v2320, 16
        %v2360 = vrot.slane %v2358, 4
        %v2361 = vor.u32 %v2357, %v2360
        %v2363 = vshrl.u32 %v2322, 16
        %v2365 = vrot.slane %v2363, 3
        %v2366 = vshll.u32 %v2322, 16
        %v2368 = vrot.slane %v2366, 4
        %v2369 = vor.u32 %v2365, %v2368
        %v2370 = vsel %vm1666, %v2361, %v2369
        %v2372 = vshrl.u32 %v2323, 16
        %v2374 = vrot.slane %v2372, 3
        %v2375 = vshll.u32 %v2323, 16
        %v2377 = vrot.slane %v2375, 4
        %v2378 = vor.u32 %v2374, %v2377
        %v2379 = vsel %vm1666, %v2352, %v2378
        %v2381 = vshrl.u32 %v2324, 16
        %v2383 = vrot.slane %v2381, 3
        %v2384 = vshll.u32 %v2324, 16
        %v2386 = vrot.slane %v2384, 4
        %v2387 = vor.u32 %v2383, %v2386
        %v2388 = vsel %vm1666, %v2369, %v2387
        %v2390 = vshrl.u32 %v2325, 16
        %v2392 = vrot.slane %v2390, 3
        %v2393 = vshll.u32 %v2325, 16
        %v2395 = vrot.slane %v2393, 4
        %v2396 = vor.u32 %v2392, %v2395
        %v2397 = vsel %vm1666, %v2378, %v2396
        %v2399 = vshrl.u32 %v2326, 16
        %v2401 = vrot.slane %v2399, 3
        %v2402 = vshll.u32 %v2326, 16
        %v2404 = vrot.slane %v2402, 4
        %v2405 = vor.u32 %v2401, %v2404
        %v2406 = vsel %vm1666, %v2387, %v2405
        %v2408 = vshrl.u32 %v2327, 16
        %v2410 = vrot.slane %v2408, 3
        %v2411 = vshll.u32 %v2327, 16
        %v2413 = vrot.slane %v2411, 4
        %v2414 = vor.u32 %v2410, %v2413
        %v2415 = vsel %vm1666, %v2396, %v2414
        %v2417 = vshrl.u32 %v2328, 16
        %v2419 = vrot.slane %v2417, 3
        %v2420 = vshll.u32 %v2328, 16
        %v2422 = vrot.slane %v2420, 4
        %v2423 = vor.u32 %v2419, %v2422
        %v2424 = vsel %vm1666, %v2405, %v2423
        %v2426 = vshrl.u32 %v2329, 16
        %v2428 = vrot.slane %v2426, 3
        %v2429 = vshll.u32 %v2329, 16
        %v2431 = vrot.slane %v2429, 4
        %v2432 = vor.u32 %v2428, %v2431
        %v2433 = vsel %vm1666, %v2414, %v2432
        %v2435 = vshrl.u32 %v2330, 16
        %v2437 = vrot.slane %v2435, 3
        %v2438 = vshll.u32 %v2330, 16
        %v2440 = vrot.slane %v2438, 4
        %v2441 = vor.u32 %v2437, %v2440
        %v2442 = vsel %vm1666, %v2423, %v2441
        %v2444 = vshrl.u32 %v2331, 16
        %v2446 = vrot.slane %v2444, 3
        %v2447 = vshll.u32 %v2331, 16
        %v2449 = vrot.slane %v2447, 4
        %v2450 = vor.u32 %v2446, %v2449
        %v2451 = vsel %vm1666, %v2432, %v2450
        %v2453 = vshrl.u32 %v2332, 16
        %v2455 = vrot.slane %v2453, 3
        %v2456 = vshll.u32 %v2332, 16
        %v2458 = vrot.slane %v2456, 4
        %v2459 = vor.u32 %v2455, %v2458
        %v2460 = vsel %vm1666, %v2441, %v2459
        %v2462 = vshrl.u32 %v2333, 16
        %v2464 = vrot.slane %v2462, 3
        %v2465 = vshll.u32 %v2333, 16
        %v2467 = vrot.slane %v2465, 4
        %v2468 = vor.u32 %v2464, %v2467
        %v2469 = vsel %vm1666, %v2450, %v2468
        %v2471 = vshrl.u32 %v2334, 16
        %v2473 = vrot.slane %v2471, 3
        %v2474 = vshll.u32 %v2334, 16
        %v2476 = vrot.slane %v2474, 4
        %v2477 = vor.u32 %v2473, %v2476
        %v2478 = vsel %vm1666, %v2459, %v2477
        %v2480 = vshrl.u32 %v2335, 16
        %v2482 = vrot.slane %v2480, 3
        %v2483 = vshll.u32 %v2335, 16
        %v2485 = vrot.slane %v2483, 4
        %v2486 = vor.u32 %v2482, %v2485
        %v2487 = vsel %vm1666, %v2468, %v2486
        %v2489 = vshrl.u32 %v2336, 16
        %v2491 = vrot.slane %v2489, 3
        %v2492 = vshll.u32 %v2336, 16
        %v2494 = vrot.slane %v2492, 4
        %v2495 = vor.u32 %v2491, %v2494
        %v2496 = vsel %vm1666, %v2477, %v2495
        %v2545 = vunpack.c.l.b16 %v2236
        %v2546 = vunpack.c.h.b16 %v2236
        %v2547 = vunpack.c.l.b16 %v2237
        %v2548 = vunpack.c.h.b16 %v2237
        %v2549 = vunpack.c.l.b16 %v2238
        %v2550 = vunpack.c.h.b16 %v2238
        %v2551 = vunpack.c.l.b16 %v2239
        %v2552 = vunpack.c.h.b16 %v2239
        %v2553 = vunpack.c.l.b16 %v2240
        %v2554 = vunpack.c.h.b16 %v2240
        %v2555 = vunpack.c.l.b16 %v2241
        %v2556 = vunpack.c.h.b16 %v2241
        %v2557 = vunpack.c.l.b16 %v2242
        %v2558 = vunpack.c.h.b16 %v2242
        %v2559 = vunpack.c.l.b16 %v2243
        %v2560 = vunpack.c.h.b16 %v2243
        %v2561 = vunpack.c.l.b16 %v2244
        %v2562 = vunpack.c.h.b16 %v2244
        %v2563 = vunpack.c.l.b16 %v2245
        %v2564 = vunpack.c.h.b16 %v2245
        %v2565 = vunpack.c.l.b16 %v2246
        %v2566 = vunpack.c.h.b16 %v2246
        %v2567 = vunpack.c.l.b16 %v2247
        %v2568 = vunpack.c.h.b16 %v2247
        %v2569 = vunpack.c.l.b16 %v2248
        %v2570 = vunpack.c.h.b16 %v2248
        %v2571 = vunpack.c.l.b16 %v2249
        %v2572 = vunpack.c.h.b16 %v2249
        %v2573 = vunpack.c.l.b16 %v2250
        %v2574 = vunpack.c.h.b16 %v2250
        %v2575 = vunpack.c.l.b16 %v2251
        %v2576 = vunpack.c.h.b16 %v2251
        %v2577 = vunpack.c.l.b16 %v2252
        %v2578 = vunpack.c.h.b16 %v2252
        %v2579 = vunpack.c.l.b16 %v2253
        %v2580 = vunpack.c.h.b16 %v2253
        %v2581 = vunpack.c.l.b16 %v2254
        %v2582 = vunpack.c.h.b16 %v2254
        %v2583 = vunpack.c.l.b16 %v2255
        %v2584 = vunpack.c.h.b16 %v2255
        %v2585 = vunpack.c.l.b16 %v2256
        %v2586 = vunpack.c.h.b16 %v2256
        %v2587 = vunpack.c.l.b16 %v2257
        %v2588 = vunpack.c.h.b16 %v2257
        %v2589 = vunpack.c.l.b16 %v2258
        %v2590 = vunpack.c.h.b16 %v2258
        %v2591 = vunpack.c.l.b16 %v2259
        %v2592 = vunpack.c.h.b16 %v2259
        %v2593 = vunpack.c.l.b16 %v2260
        %v2594 = vunpack.c.h.b16 %v2260
        %v2595 = vunpack.c.l.b16 %v2261
        %v2596 = vunpack.c.h.b16 %v2261
        %v2597 = vunpack.c.l.b16 %v2262
        %v2598 = vunpack.c.h.b16 %v2262
        %v2599 = vunpack.c.l.b16 %v2263
        %v2600 = vunpack.c.h.b16 %v2263
        %v2601 = vunpack.c.l.b16 %v2264
        %v2602 = vunpack.c.h.b16 %v2264
        %v2603 = vunpack.c.l.b16 %v2265
        %v2604 = vunpack.c.h.b16 %v2265
        %v2605 = vunpack.c.l.b16 %v2266
        %v2606 = vunpack.c.h.b16 %v2266
        %v2607 = vunpack.c.l.b16 %v2267
        %v2608 = vunpack.c.h.b16 %v2267
        %v2609 = vpack.c.b16 %v2547, %v2545
        %v2610 = vpack.c.b16 %v2548, %v2546
        %v2611 = vpack.c.b16 %v2551, %v2549
        %v2612 = vpack.c.b16 %v2552, %v2550
        %v2613 = vpack.c.b16 %v2555, %v2553
        %v2614 = vpack.c.b16 %v2556, %v2554
        %v2615 = vpack.c.b16 %v2559, %v2557
        %v2616 = vpack.c.b16 %v2560, %v2558
        %v2617 = vpack.c.b16 %v2563, %v2561
        %v2618 = vpack.c.b16 %v2564, %v2562
        %v2619 = vpack.c.b16 %v2567, %v2565
        %v2620 = vpack.c.b16 %v2568, %v2566
        %v2621 = vpack.c.b16 %v2571, %v2569
        %v2622 = vpack.c.b16 %v2572, %v2570
        %v2623 = vpack.c.b16 %v2575, %v2573
        %v2624 = vpack.c.b16 %v2576, %v2574
        %v2625 = vpack.c.b16 %v2579, %v2577
        %v2626 = vpack.c.b16 %v2580, %v2578
        %v2627 = vpack.c.b16 %v2583, %v2581
        %v2628 = vpack.c.b16 %v2584, %v2582
        %v2629 = vpack.c.b16 %v2587, %v2585
        %v2630 = vpack.c.b16 %v2588, %v2586
        %v2631 = vpack.c.b16 %v2591, %v2589
        %v2632 = vpack.c.b16 %v2592, %v2590
        %v2633 = vpack.c.b16 %v2595, %v2593
        %v2634 = vpack.c.b16 %v2596, %v2594
        %v2635 = vpack.c.b16 %v2599, %v2597
        %v2636 = vpack.c.b16 %v2600, %v2598
        %v2637 = vpack.c.b16 %v2603, %v2601
        %v2638 = vpack.c.b16 %v2604, %v2602
        %v2639 = vpack.c.b16 %v2607, %v2605
        %v2640 = vpack.c.b16 %v2608, %v2606
        %2673 = vmatprep.subr.bf16.mxu0 %v2610
        %2674 = vmatpush1.bf16.msra.mxu0 %v2609
        %2675 = vmatprep.subr.bf16.mxu0 %v2612
        %2676 = vmatpush1.bf16.msra.mxu0 %v2611
        %2677 = vmatprep.subr.bf16.mxu0 %v2614
        %2678 = vmatpush1.bf16.msra.mxu0 %v2613
        %2679 = vmatprep.subr.bf16.mxu0 %v2616
        %2680 = vmatpush1.bf16.msra.mxu0 %v2615
        %2681 = vmatprep.subr.bf16.mxu0 %v2618
        %2682 = vmatpush1.bf16.msra.mxu0 %v2617
        %2683 = vmatprep.subr.bf16.mxu0 %v2620
        %2684 = vmatpush1.bf16.msra.mxu0 %v2619
        %2685 = vmatprep.subr.bf16.mxu0 %v2622
        %2686 = vmatpush1.bf16.msra.mxu0 %v2621
        %2687 = vmatprep.subr.bf16.mxu0 %v2624
        %2688 = vmatpush1.bf16.msra.mxu0 %v2623
        %2689 = vmatprep.subr.bf16.mxu0 %v2626
        %2690 = vmatpush1.bf16.msra.mxu0 %v2625
        %2691 = vmatprep.subr.bf16.mxu0 %v2628
        %2692 = vmatpush1.bf16.msra.mxu0 %v2627
        %2693 = vmatprep.subr.bf16.mxu0 %v2630
        %2694 = vmatpush1.bf16.msra.mxu0 %v2629
        %2695 = vmatprep.subr.bf16.mxu0 %v2632
        %2696 = vmatpush1.bf16.msra.mxu0 %v2631
        %2697 = vmatprep.subr.bf16.mxu0 %v2634
        %2698 = vmatpush1.bf16.msra.mxu0 %v2633
        %2699 = vmatprep.subr.bf16.mxu0 %v2636
        %2700 = vmatpush1.bf16.msra.mxu0 %v2635
        %2701 = vmatprep.subr.bf16.mxu0 %v2638
        %2702 = vmatpush1.bf16.msra.mxu0 %v2637
        %2703 = vmatprep.subr.bf16.mxu0 %v2640
        %2704 = vmatpush1.bf16.msra.mxu0 %v2639
        %2705 = vmatprep.mubr.bf16.mxu0 %v2370
        %2706 = vmatmul.mubr.bf16.gmra.mrb[0].mxu0 %v2353
        %v2707 = vpop.f32.mrb[0].mxu0
        %v2708 = vadd.f32 0.0, %v2707
        %v2709 = vpop.f32.mrb[0].mxu0
        %v2710 = vadd.f32 0.0, %v2709
        %v2711 = vpop.f32.mrb[0].mxu0
        %v2712 = vadd.f32 0.0, %v2711
        %v2713 = vpop.f32.mrb[0].mxu0
        %v2714 = vadd.f32 0.0, %v2713
        %2715 = vmatprep.mubr.bf16.mxu0 %v2388
        %2716 = vmatmul.mubr.bf16.gmra.mrb[0].mxu0 %v2379
        %v2717 = vpop.f32.mrb[0].mxu0
        %v2718 = vadd.f32 0.0, %v2717
        %v2719 = vpop.f32.mrb[0].mxu0
        %v2720 = vadd.f32 0.0, %v2719
        %v2721 = vpop.f32.mrb[0].mxu0
        %v2722 = vadd.f32 0.0, %v2721
        %v2723 = vpop.f32.mrb[0].mxu0
        %v2724 = vadd.f32 0.0, %v2723
        %2725 = vmatprep.mubr.bf16.mxu0 %v2406
        %2726 = vmatmul.mubr.bf16.gmra.mrb[0].mxu0 %v2397
        %v2727 = vpop.f32.mrb[0].mxu0
        %v2728 = vadd.f32 0.0, %v2727
        %v2729 = vpop.f32.mrb[0].mxu0
        %v2730 = vadd.f32 0.0, %v2729
        %v2731 = vpop.f32.mrb[0].mxu0
        %v2732 = vadd.f32 0.0, %v2731
        %v2733 = vpop.f32.mrb[0].mxu0
        %v2734 = vadd.f32 0.0, %v2733
        %2735 = vmatprep.mubr.bf16.mxu0 %v2424
        %2736 = vmatmul.mubr.bf16.gmra.mrb[0].mxu0 %v2415
        %v2737 = vpop.f32.mrb[0].mxu0
        %v2738 = vadd.f32 0.0, %v2737
        %v2739 = vpop.f32.mrb[0].mxu0
        %v2740 = vadd.f32 0.0, %v2739
        %v2741 = vpop.f32.mrb[0].mxu0
        %v2742 = vadd.f32 0.0, %v2741
        %v2743 = vpop.f32.mrb[0].mxu0
        %v2744 = vadd.f32 0.0, %v2743
        %2745 = vmatprep.mubr.bf16.mxu0 %v2442
        %2746 = vmatmul.mubr.bf16.gmra.mrb[0].mxu0 %v2433
        %v2747 = vpop.f32.mrb[0].mxu0
        %v2748 = vadd.f32 0.0, %v2747
        %v2749 = vpop.f32.mrb[0].mxu0
        %v2750 = vadd.f32 0.0, %v2749
        %v2751 = vpop.f32.mrb[0].mxu0
        %v2752 = vadd.f32 0.0, %v2751
        %v2753 = vpop.f32.mrb[0].mxu0
        %v2754 = vadd.f32 0.0, %v2753
        %2755 = vmatprep.mubr.bf16.mxu0 %v2460
        %2756 = vmatmul.mubr.bf16.gmra.mrb[0].mxu0 %v2451
        %v2757 = vpop.f32.mrb[0].mxu0
        %v2758 = vadd.f32 0.0, %v2757
        %v2759 = vpop.f32.mrb[0].mxu0
        %v2760 = vadd.f32 0.0, %v2759
        %v2761 = vpop.f32.mrb[0].mxu0
        %v2762 = vadd.f32 0.0, %v2761
        %v2763 = vpop.f32.mrb[0].mxu0
        %v2764 = vadd.f32 0.0, %v2763
        %2765 = vmatprep.mubr.bf16.mxu0 %v2478
        %2766 = vmatmul.mubr.bf16.gmra.mrb[0].mxu0 %v2469
        %v2767 = vpop.f32.mrb[0].mxu0
        %v2768 = vadd.f32 0.0, %v2767
        %v2769 = vpop.f32.mrb[0].mxu0
        %v2770 = vadd.f32 0.0, %v2769
        %v2771 = vpop.f32.mrb[0].mxu0
        %v2772 = vadd.f32 0.0, %v2771
        %v2773 = vpop.f32.mrb[0].mxu0
        %v2774 = vadd.f32 0.0, %v2773
        %2775 = vmatprep.mubr.bf16.mxu0 %v2496
        %2776 = vmatmul.mubr.bf16.gmra.mrb[0].mxu0 %v2487
        %v2777 = vpop.f32.mrb[0].mxu0
        %v2778 = vadd.f32 0.0, %v2777
        %v2779 = vpop.f32.mrb[0].mxu0
        %v2780 = vadd.f32 0.0, %v2779
        %v2781 = vpop.f32.mrb[0].mxu0
        %v2782 = vadd.f32 0.0, %v2781
        %v2783 = vpop.f32.mrb[0].mxu0
        %v2784 = vadd.f32 0.0, %v2783
        %2785 = vdwg.mxu0
        %v2786 = vadd.f32 %v2203, %v2708
        %v2787 = vadd.f32 %v2204, %v2710
        %v2788 = vadd.f32 %v2205, %v2712
        %v2789 = vadd.f32 %v2206, %v2714
        %v2790 = vadd.f32 %v2207, %v2718
        %v2791 = vadd.f32 %v2208, %v2720
        %v2792 = vadd.f32 %v2209, %v2722
        %v2793 = vadd.f32 %v2210, %v2724
        %v2794 = vadd.f32 %v2211, %v2728
        %v2795 = vadd.f32 %v2212, %v2730
        %v2796 = vadd.f32 %v2213, %v2732
        %v2797 = vadd.f32 %v2214, %v2734
        %v2798 = vadd.f32 %v2215, %v2738
        %v2799 = vadd.f32 %v2216, %v2740
        %v2800 = vadd.f32 %v2217, %v2742
        %v2801 = vadd.f32 %v2218, %v2744
        %v2802 = vadd.f32 %v2219, %v2748
        %v2803 = vadd.f32 %v2220, %v2750
        %v2804 = vadd.f32 %v2221, %v2752
        %v2805 = vadd.f32 %v2222, %v2754
        %v2806 = vadd.f32 %v2223, %v2758
        %v2807 = vadd.f32 %v2224, %v2760
        %v2808 = vadd.f32 %v2225, %v2762
        %v2809 = vadd.f32 %v2226, %v2764
        %v2810 = vadd.f32 %v2227, %v2768
        %v2811 = vadd.f32 %v2228, %v2770
        %v2812 = vadd.f32 %v2229, %v2772
        %v2813 = vadd.f32 %v2230, %v2774
        %v2814 = vadd.f32 %v2231, %v2778
        %v2815 = vadd.f32 %v2232, %v2780
        %v2816 = vadd.f32 %v2233, %v2782
        %v2817 = vadd.f32 %v2234, %v2784
        %2818 = vst [vmem:[#allocation2] sm:$0xff] %v2786
        %2819 = vst [vmem:[#allocation2 + $0x8] sm:$0xff] %v2787
        %2820 = vst [vmem:[#allocation2 + $0x10] sm:$0xff] %v2788
        %2821 = vst [vmem:[#allocation2 + $0x18] sm:$0xff] %v2789
        %2822 = vst [vmem:[#allocation2 + $0x20] sm:$0xff] %v2790
        %2823 = vst [vmem:[#allocation2 + $0x28] sm:$0xff] %v2791
        %2824 = vst [vmem:[#allocation2 + $0x30] sm:$0xff] %v2792
        %2825 = vst [vmem:[#allocation2 + $0x38] sm:$0xff] %v2793
        %2826 = vst [vmem:[#allocation2 + $0x40] sm:$0xff] %v2794
        %2827 = vst [vmem:[#allocation2 + $0x48] sm:$0xff] %v2795
        %2828 = vst [vmem:[#allocation2 + $0x50] sm:$0xff] %v2796
        %2829 = vst [vmem:[#allocation2 + $0x58] sm:$0xff] %v2797
        %2830 = vst [vmem:[#allocation2 + $0x60] sm:$0xff] %v2798
        %2831 = vst [vmem:[#allocation2 + $0x68] sm:$0xff] %v2799
        %2832 = vst [vmem:[#allocation2 + $0x70] sm:$0xff] %v2800
        %2833 = vst [vmem:[#allocation2 + $0x78] sm:$0xff] %v2801
        %2834 = vst [vmem:[#allocation2 + $0x80] sm:$0xff] %v2802
        %2835 = vst [vmem:[#allocation2 + $0x88] sm:$0xff] %v2803
        %2836 = vst [vmem:[#allocation2 + $0x90] sm:$0xff] %v2804
        %2837 = vst [vmem:[#allocation2 + $0x98] sm:$0xff] %v2805
        %2838 = vst [vmem:[#allocation2 + $0xa0] sm:$0xff] %v2806
        %2839 = vst [vmem:[#allocation2 + $0xa8] sm:$0xff] %v2807
        %2840 = vst [vmem:[#allocation2 + $0xb0] sm:$0xff] %v2808
        %2841 = vst [vmem:[#allocation2 + $0xb8] sm:$0xff] %v2809
        %2842 = vst [vmem:[#allocation2 + $0xc0] sm:$0xff] %v2810
        %2843 = vst [vmem:[#allocation2 + $0xc8] sm:$0xff] %v2811
        %2844 = vst [vmem:[#allocation2 + $0xd0] sm:$0xff] %v2812
        %2845 = vst [vmem:[#allocation2 + $0xd8] sm:$0xff] %v2813
        %2846 = vst [vmem:[#allocation2 + $0xe0] sm:$0xff] %v2814
        %2847 = vst [vmem:[#allocation2 + $0xe8] sm:$0xff] %v2815
        %2848 = vst [vmem:[#allocation2 + $0xf0] sm:$0xff] %v2816
        %2849 = vst [vmem:[#allocation2 + $0xf8] sm:$0xff] %v2817
        %s2850 = sadd.s32 %s306, 24
        %s2851 = sshra.s32 %s2850, 3
        %s2852 = sand.u32 %s2850, 7
        %s2853 = smul.u32 %s2851, 2
        %s2854 = smul.addr %s2853, 4
        %s2855 = scalar_lea.vmem [#allocation3], %s2854
        %v2856 = vld [vmem:[%s2855] sm:$0xff]
        %v2857 = vld [vmem:[%s2855 + $0x8] sm:$0xff]
        %v2858 = vld [vmem:[%s2855 + $0x10] sm:$0xff]
        %v2859 = vld [vmem:[%s2855 + $0x18] sm:$0xff]
        %v2860 = vld [vmem:[%s2855 + $0x20] sm:$0xff]
        %v2861 = vld [vmem:[%s2855 + $0x28] sm:$0xff]
        %v2862 = vld [vmem:[%s2855 + $0x30] sm:$0xff]
        %v2863 = vld [vmem:[%s2855 + $0x38] sm:$0xff]
        %v2864 = vld [vmem:[%s2855 + $0x40] sm:$0xff]
        %v2865 = vld [vmem:[%s2855 + $0x48] sm:$0xff]
        %v2866 = vld [vmem:[%s2855 + $0x50] sm:$0xff]
        %v2867 = vld [vmem:[%s2855 + $0x58] sm:$0xff]
        %v2868 = vld [vmem:[%s2855 + $0x60] sm:$0xff]
        %v2869 = vld [vmem:[%s2855 + $0x68] sm:$0xff]
        %v2870 = vld [vmem:[%s2855 + $0x70] sm:$0xff]
        %v2871 = vld [vmem:[%s2855 + $0x78] sm:$0xff]
        %v2872 = vld [vmem:[#allocation2] sm:$0xff]
        %v2873 = vld [vmem:[#allocation2 + $0x8] sm:$0xff]
        %v2874 = vld [vmem:[#allocation2 + $0x10] sm:$0xff]
        %v2875 = vld [vmem:[#allocation2 + $0x18] sm:$0xff]
        %v2876 = vld [vmem:[#allocation2 + $0x20] sm:$0xff]
        %v2877 = vld [vmem:[#allocation2 + $0x28] sm:$0xff]
        %v2878 = vld [vmem:[#allocation2 + $0x30] sm:$0xff]
        %v2879 = vld [vmem:[#allocation2 + $0x38] sm:$0xff]
        %v2880 = vld [vmem:[#allocation2 + $0x40] sm:$0xff]
        %v2881 = vld [vmem:[#allocation2 + $0x48] sm:$0xff]
        %v2882 = vld [vmem:[#allocation2 + $0x50] sm:$0xff]
        %v2883 = vld [vmem:[#allocation2 + $0x58] sm:$0xff]
        %v2884 = vld [vmem:[#allocation2 + $0x60] sm:$0xff]
        %v2885 = vld [vmem:[#allocation2 + $0x68] sm:$0xff]
        %v2886 = vld [vmem:[#allocation2 + $0x70] sm:$0xff]
        %v2887 = vld [vmem:[#allocation2 + $0x78] sm:$0xff]
        %v2888 = vld [vmem:[#allocation2 + $0x80] sm:$0xff]
        %v2889 = vld [vmem:[#allocation2 + $0x88] sm:$0xff]
        %v2890 = vld [vmem:[#allocation2 + $0x90] sm:$0xff]
        %v2891 = vld [vmem:[#allocation2 + $0x98] sm:$0xff]
        %v2892 = vld [vmem:[#allocation2 + $0xa0] sm:$0xff]
        %v2893 = vld [vmem:[#allocation2 + $0xa8] sm:$0xff]
        %v2894 = vld [vmem:[#allocation2 + $0xb0] sm:$0xff]
        %v2895 = vld [vmem:[#allocation2 + $0xb8] sm:$0xff]
        %v2896 = vld [vmem:[#allocation2 + $0xc0] sm:$0xff]
        %v2897 = vld [vmem:[#allocation2 + $0xc8] sm:$0xff]
        %v2898 = vld [vmem:[#allocation2 + $0xd0] sm:$0xff]
        %v2899 = vld [vmem:[#allocation2 + $0xd8] sm:$0xff]
        %v2900 = vld [vmem:[#allocation2 + $0xe0] sm:$0xff]
        %v2901 = vld [vmem:[#allocation2 + $0xe8] sm:$0xff]
        %v2902 = vld [vmem:[#allocation2 + $0xf0] sm:$0xff]
        %v2903 = vld [vmem:[#allocation2 + $0xf8] sm:$0xff]
        %s2904 = scalar_lea.vmem [#allocation6], 1024
        %v2905 = vld [vmem:[%s2904] sm:$0xff]
        %v2906 = vld [vmem:[%s2904 + $0x8] sm:$0xff]
        %v2907 = vld [vmem:[%s2904 + $0x10] sm:$0xff]
        %v2908 = vld [vmem:[%s2904 + $0x18] sm:$0xff]
        %v2909 = vld [vmem:[%s2904 + $0x20] sm:$0xff]
        %v2910 = vld [vmem:[%s2904 + $0x28] sm:$0xff]
        %v2911 = vld [vmem:[%s2904 + $0x30] sm:$0xff]
        %v2912 = vld [vmem:[%s2904 + $0x38] sm:$0xff]
        %v2913 = vld [vmem:[%s2904 + $0x40] sm:$0xff]
        %v2914 = vld [vmem:[%s2904 + $0x48] sm:$0xff]
        %v2915 = vld [vmem:[%s2904 + $0x50] sm:$0xff]
        %v2916 = vld [vmem:[%s2904 + $0x58] sm:$0xff]
        %v2917 = vld [vmem:[%s2904 + $0x60] sm:$0xff]
        %v2918 = vld [vmem:[%s2904 + $0x68] sm:$0xff]
        %v2919 = vld [vmem:[%s2904 + $0x70] sm:$0xff]
        %v2920 = vld [vmem:[%s2904 + $0x78] sm:$0xff]
        %v2921 = vld [vmem:[%s2904 + $0x80] sm:$0xff]
        %v2922 = vld [vmem:[%s2904 + $0x88] sm:$0xff]
        %v2923 = vld [vmem:[%s2904 + $0x90] sm:$0xff]
        %v2924 = vld [vmem:[%s2904 + $0x98] sm:$0xff]
        %v2925 = vld [vmem:[%s2904 + $0xa0] sm:$0xff]
        %v2926 = vld [vmem:[%s2904 + $0xa8] sm:$0xff]
        %v2927 = vld [vmem:[%s2904 + $0xb0] sm:$0xff]
        %v2928 = vld [vmem:[%s2904 + $0xb8] sm:$0xff]
        %v2929 = vld [vmem:[%s2904 + $0xc0] sm:$0xff]
        %v2930 = vld [vmem:[%s2904 + $0xc8] sm:$0xff]
        %v2931 = vld [vmem:[%s2904 + $0xd0] sm:$0xff]
        %v2932 = vld [vmem:[%s2904 + $0xd8] sm:$0xff]
        %v2933 = vld [vmem:[%s2904 + $0xe0] sm:$0xff]
        %v2934 = vld [vmem:[%s2904 + $0xe8] sm:$0xff]
        %v2935 = vld [vmem:[%s2904 + $0xf0] sm:$0xff]
        %v2936 = vld [vmem:[%s2904 + $0xf8] sm:$0xff]
        %v2953 = vunpack.c.l.b16 %v2856
        %v2954 = vunpack.c.h.b16 %v2856
        %v2955 = vunpack.c.l.b16 %v2857
        %v2956 = vunpack.c.h.b16 %v2857
        %v2957 = vunpack.c.l.b16 %v2858
        %v2958 = vunpack.c.h.b16 %v2858
        %v2959 = vunpack.c.l.b16 %v2859
        %v2960 = vunpack.c.h.b16 %v2859
        %v2961 = vunpack.c.l.b16 %v2860
        %v2962 = vunpack.c.h.b16 %v2860
        %v2963 = vunpack.c.l.b16 %v2861
        %v2964 = vunpack.c.h.b16 %v2861
        %v2965 = vunpack.c.l.b16 %v2862
        %v2966 = vunpack.c.h.b16 %v2862
        %v2967 = vunpack.c.l.b16 %v2863
        %v2968 = vunpack.c.h.b16 %v2863
        %v2969 = vunpack.c.l.b16 %v2864
        %v2970 = vunpack.c.h.b16 %v2864
        %v2971 = vunpack.c.l.b16 %v2865
        %v2972 = vunpack.c.h.b16 %v2865
        %v2973 = vunpack.c.l.b16 %v2866
        %v2974 = vunpack.c.h.b16 %v2866
        %v2975 = vunpack.c.l.b16 %v2867
        %v2976 = vunpack.c.h.b16 %v2867
        %v2977 = vunpack.c.l.b16 %v2868
        %v2978 = vunpack.c.h.b16 %v2868
        %v2979 = vunpack.c.l.b16 %v2869
        %v2980 = vunpack.c.h.b16 %v2869
        %v2981 = vunpack.c.l.b16 %v2870
        %v2982 = vunpack.c.h.b16 %v2870
        %v2983 = vunpack.c.l.b16 %v2871
        %v2984 = vunpack.c.h.b16 %v2871
        %v2985 = vpack.c.b16 %v2955, %v2953
        %v2986 = vpack.c.b16 %v2956, %v2954
        %v2987 = vpack.c.b16 %v2959, %v2957
        %v2988 = vpack.c.b16 %v2960, %v2958
        %v2989 = vpack.c.b16 %v2963, %v2961
        %v2990 = vpack.c.b16 %v2964, %v2962
        %v2991 = vpack.c.b16 %v2967, %v2965
        %v2992 = vpack.c.b16 %v2968, %v2966
        %v2993 = vpack.c.b16 %v2971, %v2969
        %v2994 = vpack.c.b16 %v2972, %v2970
        %v2995 = vpack.c.b16 %v2975, %v2973
        %v2996 = vpack.c.b16 %v2976, %v2974
        %v2997 = vpack.c.b16 %v2979, %v2977
        %v2998 = vpack.c.b16 %v2980, %v2978
        %v2999 = vpack.c.b16 %v2983, %v2981
        %v3000 = vpack.c.b16 %v2984, %v2982
        %v3049 = vunpack.c.l.b16 %v2905
        %v3050 = vunpack.c.h.b16 %v2905
        %v3051 = vunpack.c.l.b16 %v2906
        %v3052 = vunpack.c.h.b16 %v2906
        %v3053 = vunpack.c.l.b16 %v2907
        %v3054 = vunpack.c.h.b16 %v2907
        %v3055 = vunpack.c.l.b16 %v2908
        %v3056 = vunpack.c.h.b16 %v2908
        %v3057 = vunpack.c.l.b16 %v2909
        %v3058 = vunpack.c.h.b16 %v2909
        %v3059 = vunpack.c.l.b16 %v2910
        %v3060 = vunpack.c.h.b16 %v2910
        %v3061 = vunpack.c.l.b16 %v2911
        %v3062 = vunpack.c.h.b16 %v2911
        %v3063 = vunpack.c.l.b16 %v2912
        %v3064 = vunpack.c.h.b16 %v2912
        %v3065 = vunpack.c.l.b16 %v2913
        %v3066 = vunpack.c.h.b16 %v2913
        %v3067 = vunpack.c.l.b16 %v2914
        %v3068 = vunpack.c.h.b16 %v2914
        %v3069 = vunpack.c.l.b16 %v2915
        %v3070 = vunpack.c.h.b16 %v2915
        %v3071 = vunpack.c.l.b16 %v2916
        %v3072 = vunpack.c.h.b16 %v2916
        %v3073 = vunpack.c.l.b16 %v2917
        %v3074 = vunpack.c.h.b16 %v2917
        %v3075 = vunpack.c.l.b16 %v2918
        %v3076 = vunpack.c.h.b16 %v2918
        %v3077 = vunpack.c.l.b16 %v2919
        %v3078 = vunpack.c.h.b16 %v2919
        %v3079 = vunpack.c.l.b16 %v2920
        %v3080 = vunpack.c.h.b16 %v2920
        %v3081 = vunpack.c.l.b16 %v2921
        %v3082 = vunpack.c.h.b16 %v2921
        %v3083 = vunpack.c.l.b16 %v2922
        %v3084 = vunpack.c.h.b16 %v2922
        %v3085 = vunpack.c.l.b16 %v2923
        %v3086 = vunpack.c.h.b16 %v2923
        %v3087 = vunpack.c.l.b16 %v2924
        %v3088 = vunpack.c.h.b16 %v2924
        %v3089 = vunpack.c.l.b16 %v2925
        %v3090 = vunpack.c.h.b16 %v2925
        %v3091 = vunpack.c.l.b16 %v2926
        %v3092 = vunpack.c.h.b16 %v2926
        %v3093 = vunpack.c.l.b16 %v2927
        %v3094 = vunpack.c.h.b16 %v2927
        %v3095 = vunpack.c.l.b16 %v2928
        %v3096 = vunpack.c.h.b16 %v2928
        %v3097 = vunpack.c.l.b16 %v2929
        %v3098 = vunpack.c.h.b16 %v2929
        %v3099 = vunpack.c.l.b16 %v2930
        %v3100 = vunpack.c.h.b16 %v2930
        %v3101 = vunpack.c.l.b16 %v2931
        %v3102 = vunpack.c.h.b16 %v2931
        %v3103 = vunpack.c.l.b16 %v2932
        %v3104 = vunpack.c.h.b16 %v2932
        %v3105 = vunpack.c.l.b16 %v2933
        %v3106 = vunpack.c.h.b16 %v2933
        %v3107 = vunpack.c.l.b16 %v2934
        %v3108 = vunpack.c.h.b16 %v2934
        %v3109 = vunpack.c.l.b16 %v2935
        %v3110 = vunpack.c.h.b16 %v2935
        %v3111 = vunpack.c.l.b16 %v2936
        %v3112 = vunpack.c.h.b16 %v2936
        %v3113 = vpack.c.b16 %v3051, %v3049
        %v3114 = vpack.c.b16 %v3052, %v3050
        %v3115 = vpack.c.b16 %v3055, %v3053
        %v3116 = vpack.c.b16 %v3056, %v3054
        %v3117 = vpack.c.b16 %v3059, %v3057
        %v3118 = vpack.c.b16 %v3060, %v3058
        %v3119 = vpack.c.b16 %v3063, %v3061
        %v3120 = vpack.c.b16 %v3064, %v3062
        %v3121 = vpack.c.b16 %v3067, %v3065
        %v3122 = vpack.c.b16 %v3068, %v3066
        %v3123 = vpack.c.b16 %v3071, %v3069
        %v3124 = vpack.c.b16 %v3072, %v3070
        %v3125 = vpack.c.b16 %v3075, %v3073
        %v3126 = vpack.c.b16 %v3076, %v3074
        %v3127 = vpack.c.b16 %v3079, %v3077
        %v3128 = vpack.c.b16 %v3080, %v3078
        %v3129 = vpack.c.b16 %v3083, %v3081
        %v3130 = vpack.c.b16 %v3084, %v3082
        %v3131 = vpack.c.b16 %v3087, %v3085
        %v3132 = vpack.c.b16 %v3088, %v3086
        %v3133 = vpack.c.b16 %v3091, %v3089
        %v3134 = vpack.c.b16 %v3092, %v3090
        %v3135 = vpack.c.b16 %v3095, %v3093
        %v3136 = vpack.c.b16 %v3096, %v3094
        %v3137 = vpack.c.b16 %v3099, %v3097
        %v3138 = vpack.c.b16 %v3100, %v3098
        %v3139 = vpack.c.b16 %v3103, %v3101
        %v3140 = vpack.c.b16 %v3104, %v3102
        %v3141 = vpack.c.b16 %v3107, %v3105
        %v3142 = vpack.c.b16 %v3108, %v3106
        %v3143 = vpack.c.b16 %v3111, %v3109
        %v3144 = vpack.c.b16 %v3112, %v3110
        %3177 = vmatprep.subr.bf16.mxu0 %v3114
        %3178 = vmatpush1.bf16.msra.mxu0 %v3113
        %3179 = vmatprep.subr.bf16.mxu0 %v3116
        %3180 = vmatpush1.bf16.msra.mxu0 %v3115
        %3181 = vmatprep.subr.bf16.mxu0 %v3118
        %3182 = vmatpush1.bf16.msra.mxu0 %v3117
        %3183 = vmatprep.subr.bf16.mxu0 %v3120
        %3184 = vmatpush1.bf16.msra.mxu0 %v3119
        %3185 = vmatprep.subr.bf16.mxu0 %v3122
        %3186 = vmatpush1.bf16.msra.mxu0 %v3121
        %3187 = vmatprep.subr.bf16.mxu0 %v3124
        %3188 = vmatpush1.bf16.msra.mxu0 %v3123
        %3189 = vmatprep.subr.bf16.mxu0 %v3126
        %3190 = vmatpush1.bf16.msra.mxu0 %v3125
        %3191 = vmatprep.subr.bf16.mxu0 %v3128
        %3192 = vmatpush1.bf16.msra.mxu0 %v3127
        %3193 = vmatprep.subr.bf16.mxu0 %v3130
        %3194 = vmatpush1.bf16.msra.mxu0 %v3129
        %3195 = vmatprep.subr.bf16.mxu0 %v3132
        %3196 = vmatpush1.bf16.msra.mxu0 %v3131
        %3197 = vmatprep.subr.bf16.mxu0 %v3134
        %3198 = vmatpush1.bf16.msra.mxu0 %v3133
        %3199 = vmatprep.subr.bf16.mxu0 %v3136
        %3200 = vmatpush1.bf16.msra.mxu0 %v3135
        %3201 = vmatprep.subr.bf16.mxu0 %v3138
        %3202 = vmatpush1.bf16.msra.mxu0 %v3137
        %3203 = vmatprep.subr.bf16.mxu0 %v3140
        %3204 = vmatpush1.bf16.msra.mxu0 %v3139
        %3205 = vmatprep.subr.bf16.mxu0 %v3142
        %3206 = vmatpush1.bf16.msra.mxu0 %v3141
        %3207 = vmatprep.subr.bf16.mxu0 %v3144
        %3208 = vmatpush1.bf16.msra.mxu0 %v3143
        %3209 = vmatprep.mubr.bf16.mxu0 %v2986
        %3210 = vmatmul.mubr.bf16.gmra.mrb[0].mxu0 %v2985
        %v3211 = vpop.f32.mrb[0].mxu0
        %v3212 = vadd.f32 0.0, %v3211
        %v3213 = vpop.f32.mrb[0].mxu0
        %v3214 = vadd.f32 0.0, %v3213
        %v3215 = vpop.f32.mrb[0].mxu0
        %v3216 = vadd.f32 0.0, %v3215
        %v3217 = vpop.f32.mrb[0].mxu0
        %v3218 = vadd.f32 0.0, %v3217
        %3219 = vmatprep.mubr.bf16.mxu0 %v2988
        %3220 = vmatmul.mubr.bf16.gmra.mrb[0].mxu0 %v2987
        %v3221 = vpop.f32.mrb[0].mxu0
        %v3222 = vadd.f32 0.0, %v3221
        %v3223 = vpop.f32.mrb[0].mxu0
        %v3224 = vadd.f32 0.0, %v3223
        %v3225 = vpop.f32.mrb[0].mxu0
        %v3226 = vadd.f32 0.0, %v3225
        %v3227 = vpop.f32.mrb[0].mxu0
        %v3228 = vadd.f32 0.0, %v3227
        %3229 = vmatprep.mubr.bf16.mxu0 %v2990
        %3230 = vmatmul.mubr.bf16.gmra.mrb[0].mxu0 %v2989
        %v3231 = vpop.f32.mrb[0].mxu0
        %v3232 = vadd.f32 0.0, %v3231
        %v3233 = vpop.f32.mrb[0].mxu0
        %v3234 = vadd.f32 0.0, %v3233
        %v3235 = vpop.f32.mrb[0].mxu0
        %v3236 = vadd.f32 0.0, %v3235
        %v3237 = vpop.f32.mrb[0].mxu0
        %v3238 = vadd.f32 0.0, %v3237
        %3239 = vmatprep.mubr.bf16.mxu0 %v2992
        %3240 = vmatmul.mubr.bf16.gmra.mrb[0].mxu0 %v2991
        %v3241 = vpop.f32.mrb[0].mxu0
        %v3242 = vadd.f32 0.0, %v3241
        %v3243 = vpop.f32.mrb[0].mxu0
        %v3244 = vadd.f32 0.0, %v3243
        %v3245 = vpop.f32.mrb[0].mxu0
        %v3246 = vadd.f32 0.0, %v3245
        %v3247 = vpop.f32.mrb[0].mxu0
        %v3248 = vadd.f32 0.0, %v3247
        %3249 = vmatprep.mubr.bf16.mxu0 %v2994
        %3250 = vmatmul.mubr.bf16.gmra.mrb[0].mxu0 %v2993
        %v3251 = vpop.f32.mrb[0].mxu0
        %v3252 = vadd.f32 0.0, %v3251
        %v3253 = vpop.f32.mrb[0].mxu0
        %v3254 = vadd.f32 0.0, %v3253
        %v3255 = vpop.f32.mrb[0].mxu0
        %v3256 = vadd.f32 0.0, %v3255
        %v3257 = vpop.f32.mrb[0].mxu0
        %v3258 = vadd.f32 0.0, %v3257
        %3259 = vmatprep.mubr.bf16.mxu0 %v2996
        %3260 = vmatmul.mubr.bf16.gmra.mrb[0].mxu0 %v2995
        %v3261 = vpop.f32.mrb[0].mxu0
        %v3262 = vadd.f32 0.0, %v3261
        %v3263 = vpop.f32.mrb[0].mxu0
        %v3264 = vadd.f32 0.0, %v3263
        %v3265 = vpop.f32.mrb[0].mxu0
        %v3266 = vadd.f32 0.0, %v3265
        %v3267 = vpop.f32.mrb[0].mxu0
        %v3268 = vadd.f32 0.0, %v3267
        %3269 = vmatprep.mubr.bf16.mxu0 %v2998
        %3270 = vmatmul.mubr.bf16.gmra.mrb[0].mxu0 %v2997
        %v3271 = vpop.f32.mrb[0].mxu0
        %v3272 = vadd.f32 0.0, %v3271
        %v3273 = vpop.f32.mrb[0].mxu0
        %v3274 = vadd.f32 0.0, %v3273
        %v3275 = vpop.f32.mrb[0].mxu0
        %v3276 = vadd.f32 0.0, %v3275
        %v3277 = vpop.f32.mrb[0].mxu0
        %v3278 = vadd.f32 0.0, %v3277
        %3279 = vmatprep.mubr.bf16.mxu0 %v3000
        %3280 = vmatmul.mubr.bf16.gmra.mrb[0].mxu0 %v2999
        %v3281 = vpop.f32.mrb[0].mxu0
        %v3282 = vadd.f32 0.0, %v3281
        %v3283 = vpop.f32.mrb[0].mxu0
        %v3284 = vadd.f32 0.0, %v3283
        %v3285 = vpop.f32.mrb[0].mxu0
        %v3286 = vadd.f32 0.0, %v3285
        %v3287 = vpop.f32.mrb[0].mxu0
        %v3288 = vadd.f32 0.0, %v3287
        %3289 = vdwg.mxu0
        %v3290 = vadd.f32 %v2872, %v3212
        %v3291 = vadd.f32 %v2873, %v3214
        %v3292 = vadd.f32 %v2874, %v3216
        %v3293 = vadd.f32 %v2875, %v3218
        %v3294 = vadd.f32 %v2876, %v3222
        %v3295 = vadd.f32 %v2877, %v3224
        %v3296 = vadd.f32 %v2878, %v3226
        %v3297 = vadd.f32 %v2879, %v3228
        %v3298 = vadd.f32 %v2880, %v3232
        %v3299 = vadd.f32 %v2881, %v3234
        %v3300 = vadd.f32 %v2882, %v3236
        %v3301 = vadd.f32 %v2883, %v3238
        %v3302 = vadd.f32 %v2884, %v3242
        %v3303 = vadd.f32 %v2885, %v3244
        %v3304 = vadd.f32 %v2886, %v3246
        %v3305 = vadd.f32 %v2887, %v3248
        %v3306 = vadd.f32 %v2888, %v3252
        %v3307 = vadd.f32 %v2889, %v3254
        %v3308 = vadd.f32 %v2890, %v3256
        %v3309 = vadd.f32 %v2891, %v3258
        %v3310 = vadd.f32 %v2892, %v3262
        %v3311 = vadd.f32 %v2893, %v3264
        %v3312 = vadd.f32 %v2894, %v3266
        %v3313 = vadd.f32 %v2895, %v3268
        %v3314 = vadd.f32 %v2896, %v3272
        %v3315 = vadd.f32 %v2897, %v3274
        %v3316 = vadd.f32 %v2898, %v3276
        %v3317 = vadd.f32 %v2899, %v3278
        %v3318 = vadd.f32 %v2900, %v3282
        %v3319 = vadd.f32 %v2901, %v3284
        %v3320 = vadd.f32 %v2902, %v3286
        %v3321 = vadd.f32 %v2903, %v3288
        %3322 = vst [vmem:[#allocation2] sm:$0xff] %v3290
        %3323 = vst [vmem:[#allocation2 + $0x8] sm:$0xff] %v3291
        %3324 = vst [vmem:[#allocation2 + $0x10] sm:$0xff] %v3292
        %3325 = vst [vmem:[#allocation2 + $0x18] sm:$0xff] %v3293
        %3326 = vst [vmem:[#allocation2 + $0x20] sm:$0xff] %v3294
        %3327 = vst [vmem:[#allocation2 + $0x28] sm:$0xff] %v3295
        %3328 = vst [vmem:[#allocation2 + $0x30] sm:$0xff] %v3296
        %3329 = vst [vmem:[#allocation2 + $0x38] sm:$0xff] %v3297
        %3330 = vst [vmem:[#allocation2 + $0x40] sm:$0xff] %v3298
        %3331 = vst [vmem:[#allocation2 + $0x48] sm:$0xff] %v3299
        %3332 = vst [vmem:[#allocation2 + $0x50] sm:$0xff] %v3300
        %3333 = vst [vmem:[#allocation2 + $0x58] sm:$0xff] %v3301
        %3334 = vst [vmem:[#allocation2 + $0x60] sm:$0xff] %v3302
        %3335 = vst [vmem:[#allocation2 + $0x68] sm:$0xff] %v3303
        %3336 = vst [vmem:[#allocation2 + $0x70] sm:$0xff] %v3304
        %3337 = vst [vmem:[#allocation2 + $0x78] sm:$0xff] %v3305
        %3338 = vst [vmem:[#allocation2 + $0x80] sm:$0xff] %v3306
        %3339 = vst [vmem:[#allocation2 + $0x88] sm:$0xff] %v3307
        %3340 = vst [vmem:[#allocation2 + $0x90] sm:$0xff] %v3308
        %3341 = vst [vmem:[#allocation2 + $0x98] sm:$0xff] %v3309
        %3342 = vst [vmem:[#allocation2 + $0xa0] sm:$0xff] %v3310
        %3343 = vst [vmem:[#allocation2 + $0xa8] sm:$0xff] %v3311
        %3344 = vst [vmem:[#allocation2 + $0xb0] sm:$0xff] %v3312
        %3345 = vst [vmem:[#allocation2 + $0xb8] sm:$0xff] %v3313
        %3346 = vst [vmem:[#allocation2 + $0xc0] sm:$0xff] %v3314
        %3347 = vst [vmem:[#allocation2 + $0xc8] sm:$0xff] %v3315
        %3348 = vst [vmem:[#allocation2 + $0xd0] sm:$0xff] %v3316
        %3349 = vst [vmem:[#allocation2 + $0xd8] sm:$0xff] %v3317
        %3350 = vst [vmem:[#allocation2 + $0xe0] sm:$0xff] %v3318
        %3351 = vst [vmem:[#allocation2 + $0xe8] sm:$0xff] %v3319
        %3352 = vst [vmem:[#allocation2 + $0xf0] sm:$0xff] %v3320
        %3353 = vst [vmem:[#allocation2 + $0xf8] sm:$0xff] %v3321
        %v3354 = vld [vmem:[%s2855] sm:$0xff]
        %v3355 = vld [vmem:[%s2855 + $0x8] sm:$0xff]
        %v3356 = vld [vmem:[%s2855 + $0x10] sm:$0xff]
        %v3357 = vld [vmem:[%s2855 + $0x18] sm:$0xff]
        %v3358 = vld [vmem:[%s2855 + $0x20] sm:$0xff]
        %v3359 = vld [vmem:[%s2855 + $0x28] sm:$0xff]
        %v3360 = vld [vmem:[%s2855 + $0x30] sm:$0xff]
        %v3361 = vld [vmem:[%s2855 + $0x38] sm:$0xff]
        %v3362 = vld [vmem:[%s2855 + $0x40] sm:$0xff]
        %v3363 = vld [vmem:[%s2855 + $0x48] sm:$0xff]
        %v3364 = vld [vmem:[%s2855 + $0x50] sm:$0xff]
        %v3365 = vld [vmem:[%s2855 + $0x58] sm:$0xff]
        %v3366 = vld [vmem:[%s2855 + $0x60] sm:$0xff]
        %v3367 = vld [vmem:[%s2855 + $0x68] sm:$0xff]
        %v3368 = vld [vmem:[%s2855 + $0x70] sm:$0xff]
        %v3369 = vld [vmem:[%s2855 + $0x78] sm:$0xff]
        %v3370 = vld [vmem:[%s2855 + $0x80] sm:$0xff]
        %v3371 = vld [vmem:[#allocation2] sm:$0xff]
        %v3372 = vld [vmem:[#allocation2 + $0x8] sm:$0xff]
        %v3373 = vld [vmem:[#allocation2 + $0x10] sm:$0xff]
        %v3374 = vld [vmem:[#allocation2 + $0x18] sm:$0xff]
        %v3375 = vld [vmem:[#allocation2 + $0x20] sm:$0xff]
        %v3376 = vld [vmem:[#allocation2 + $0x28] sm:$0xff]
        %v3377 = vld [vmem:[#allocation2 + $0x30] sm:$0xff]
        %v3378 = vld [vmem:[#allocation2 + $0x38] sm:$0xff]
        %v3379 = vld [vmem:[#allocation2 + $0x40] sm:$0xff]
        %v3380 = vld [vmem:[#allocation2 + $0x48] sm:$0xff]
        %v3381 = vld [vmem:[#allocation2 + $0x50] sm:$0xff]
        %v3382 = vld [vmem:[#allocation2 + $0x58] sm:$0xff]
        %v3383 = vld [vmem:[#allocation2 + $0x60] sm:$0xff]
        %v3384 = vld [vmem:[#allocation2 + $0x68] sm:$0xff]
        %v3385 = vld [vmem:[#allocation2 + $0x70] sm:$0xff]
        %v3386 = vld [vmem:[#allocation2 + $0x78] sm:$0xff]
        %v3387 = vld [vmem:[#allocation2 + $0x80] sm:$0xff]
        %v3388 = vld [vmem:[#allocation2 + $0x88] sm:$0xff]
        %v3389 = vld [vmem:[#allocation2 + $0x90] sm:$0xff]
        %v3390 = vld [vmem:[#allocation2 + $0x98] sm:$0xff]
        %v3391 = vld [vmem:[#allocation2 + $0xa0] sm:$0xff]
        %v3392 = vld [vmem:[#allocation2 + $0xa8] sm:$0xff]
        %v3393 = vld [vmem:[#allocation2 + $0xb0] sm:$0xff]
        %v3394 = vld [vmem:[#allocation2 + $0xb8] sm:$0xff]
        %v3395 = vld [vmem:[#allocation2 + $0xc0] sm:$0xff]
        %v3396 = vld [vmem:[#allocation2 + $0xc8] sm:$0xff]
        %v3397 = vld [vmem:[#allocation2 + $0xd0] sm:$0xff]
        %v3398 = vld [vmem:[#allocation2 + $0xd8] sm:$0xff]
        %v3399 = vld [vmem:[#allocation2 + $0xe0] sm:$0xff]
        %v3400 = vld [vmem:[#allocation2 + $0xe8] sm:$0xff]
        %v3401 = vld [vmem:[#allocation2 + $0xf0] sm:$0xff]
        %v3402 = vld [vmem:[#allocation2 + $0xf8] sm:$0xff]
        %s3403 = scalar_lea.vmem [#allocation6], 1280
        %v3404 = vld [vmem:[%s3403] sm:$0xff]
        %v3405 = vld [vmem:[%s3403 + $0x8] sm:$0xff]
        %v3406 = vld [vmem:[%s3403 + $0x10] sm:$0xff]
        %v3407 = vld [vmem:[%s3403 + $0x18] sm:$0xff]
        %v3408 = vld [vmem:[%s3403 + $0x20] sm:$0xff]
        %v3409 = vld [vmem:[%s3403 + $0x28] sm:$0xff]
        %v3410 = vld [vmem:[%s3403 + $0x30] sm:$0xff]
        %v3411 = vld [vmem:[%s3403 + $0x38] sm:$0xff]
        %v3412 = vld [vmem:[%s3403 + $0x40] sm:$0xff]
        %v3413 = vld [vmem:[%s3403 + $0x48] sm:$0xff]
        %v3414 = vld [vmem:[%s3403 + $0x50] sm:$0xff]
        %v3415 = vld [vmem:[%s3403 + $0x58] sm:$0xff]
        %v3416 = vld [vmem:[%s3403 + $0x60] sm:$0xff]
        %v3417 = vld [vmem:[%s3403 + $0x68] sm:$0xff]
        %v3418 = vld [vmem:[%s3403 + $0x70] sm:$0xff]
        %v3419 = vld [vmem:[%s3403 + $0x78] sm:$0xff]
        %v3420 = vld [vmem:[%s3403 + $0x80] sm:$0xff]
        %v3421 = vld [vmem:[%s3403 + $0x88] sm:$0xff]
        %v3422 = vld [vmem:[%s3403 + $0x90] sm:$0xff]
        %v3423 = vld [vmem:[%s3403 + $0x98] sm:$0xff]
        %v3424 = vld [vmem:[%s3403 + $0xa0] sm:$0xff]
        %v3425 = vld [vmem:[%s3403 + $0xa8] sm:$0xff]
        %v3426 = vld [vmem:[%s3403 + $0xb0] sm:$0xff]
        %v3427 = vld [vmem:[%s3403 + $0xb8] sm:$0xff]
        %v3428 = vld [vmem:[%s3403 + $0xc0] sm:$0xff]
        %v3429 = vld [vmem:[%s3403 + $0xc8] sm:$0xff]
        %v3430 = vld [vmem:[%s3403 + $0xd0] sm:$0xff]
        %v3431 = vld [vmem:[%s3403 + $0xd8] sm:$0xff]
        %v3432 = vld [vmem:[%s3403 + $0xe0] sm:$0xff]
        %v3433 = vld [vmem:[%s3403 + $0xe8] sm:$0xff]
        %v3434 = vld [vmem:[%s3403 + $0xf0] sm:$0xff]
        %v3435 = vld [vmem:[%s3403 + $0xf8] sm:$0xff]
        %v3453 = vunpack.c.l.b16 %v3354
        %v3454 = vunpack.c.h.b16 %v3354
        %v3455 = vunpack.c.l.b16 %v3355
        %v3456 = vunpack.c.h.b16 %v3355
        %v3457 = vunpack.c.l.b16 %v3356
        %v3458 = vunpack.c.h.b16 %v3356
        %v3459 = vunpack.c.l.b16 %v3357
        %v3460 = vunpack.c.h.b16 %v3357
        %v3461 = vunpack.c.l.b16 %v3358
        %v3462 = vunpack.c.h.b16 %v3358
        %v3463 = vunpack.c.l.b16 %v3359
        %v3464 = vunpack.c.h.b16 %v3359
        %v3465 = vunpack.c.l.b16 %v3360
        %v3466 = vunpack.c.h.b16 %v3360
        %v3467 = vunpack.c.l.b16 %v3361
        %v3468 = vunpack.c.h.b16 %v3361
        %v3469 = vunpack.c.l.b16 %v3362
        %v3470 = vunpack.c.h.b16 %v3362
        %v3471 = vunpack.c.l.b16 %v3363
        %v3472 = vunpack.c.h.b16 %v3363
        %v3473 = vunpack.c.l.b16 %v3364
        %v3474 = vunpack.c.h.b16 %v3364
        %v3475 = vunpack.c.l.b16 %v3365
        %v3476 = vunpack.c.h.b16 %v3365
        %v3477 = vunpack.c.l.b16 %v3366
        %v3478 = vunpack.c.h.b16 %v3366
        %v3479 = vunpack.c.l.b16 %v3367
        %v3480 = vunpack.c.h.b16 %v3367
        %v3481 = vunpack.c.l.b16 %v3368
        %v3482 = vunpack.c.h.b16 %v3368
        %v3483 = vunpack.c.l.b16 %v3369
        %v3484 = vunpack.c.h.b16 %v3369
        %v3485 = vunpack.c.l.b16 %v3370
        %v3486 = vunpack.c.h.b16 %v3370
        %v3487 = vpack.c.b16 %v3455, %v3453
        %v3488 = vpack.c.b16 %v3456, %v3454
        %v3489 = vpack.c.b16 %v3459, %v3457
        %v3490 = vpack.c.b16 %v3460, %v3458
        %v3491 = vpack.c.b16 %v3463, %v3461
        %v3492 = vpack.c.b16 %v3464, %v3462
        %v3493 = vpack.c.b16 %v3467, %v3465
        %v3494 = vpack.c.b16 %v3468, %v3466
        %v3495 = vpack.c.b16 %v3471, %v3469
        %v3496 = vpack.c.b16 %v3472, %v3470
        %v3497 = vpack.c.b16 %v3475, %v3473
        %v3498 = vpack.c.b16 %v3476, %v3474
        %v3499 = vpack.c.b16 %v3479, %v3477
        %v3500 = vpack.c.b16 %v3480, %v3478
        %v3501 = vpack.c.b16 %v3483, %v3481
        %v3502 = vpack.c.b16 %v3484, %v3482
        %v3503 = vpack.c.b16 %v3485, %v3485
        %v3504 = vpack.c.b16 %v3486, %v3486
        %vm3505 = vsmask.f32 7424
        %v3507 = vshrl.u32 %v3487, 16
        %v3509 = vshll.u32 %v3487, 16
        %v3511 = vrot.slane %v3509, 1
        %v3512 = vor.u32 %v3507, %v3511
        %v3514 = vshll.u32 %v3489, 16
        %v3516 = vrot.slane %v3514, 1
        %v3517 = vsel %vm3505, %v3512, %v3516
        %v3519 = vshrl.u32 %v3488, 16
        %v3521 = vshll.u32 %v3488, 16
        %v3523 = vrot.slane %v3521, 1
        %v3524 = vor.u32 %v3519, %v3523
        %v3526 = vshll.u32 %v3490, 16
        %v3528 = vrot.slane %v3526, 1
        %v3529 = vsel %vm3505, %v3524, %v3528
        %v3530 = vshrl.u32 %v3489, 16
        %v3532 = vor.u32 %v3530, %v3516
        %v3534 = vshll.u32 %v3491, 16
        %v3536 = vrot.slane %v3534, 1
        %v3537 = vsel %vm3505, %v3532, %v3536
        %v3538 = vshrl.u32 %v3490, 16
        %v3540 = vor.u32 %v3538, %v3528
        %v3542 = vshll.u32 %v3492, 16
        %v3544 = vrot.slane %v3542, 1
        %v3545 = vsel %vm3505, %v3540, %v3544
        %v3546 = vshrl.u32 %v3491, 16
        %v3548 = vor.u32 %v3546, %v3536
        %v3550 = vshll.u32 %v3493, 16
        %v3552 = vrot.slane %v3550, 1
        %v3553 = vsel %vm3505, %v3548, %v3552
        %v3554 = vshrl.u32 %v3492, 16
        %v3556 = vor.u32 %v3554, %v3544
        %v3558 = vshll.u32 %v3494, 16
        %v3560 = vrot.slane %v3558, 1
        %v3561 = vsel %vm3505, %v3556, %v3560
        %v3562 = vshrl.u32 %v3493, 16
        %v3564 = vor.u32 %v3562, %v3552
        %v3566 = vshll.u32 %v3495, 16
        %v3568 = vrot.slane %v3566, 1
        %v3569 = vsel %vm3505, %v3564, %v3568
        %v3570 = vshrl.u32 %v3494, 16
        %v3572 = vor.u32 %v3570, %v3560
        %v3574 = vshll.u32 %v3496, 16
        %v3576 = vrot.slane %v3574, 1
        %v3577 = vsel %vm3505, %v3572, %v3576
        %v3578 = vshrl.u32 %v3495, 16
        %v3580 = vor.u32 %v3578, %v3568
        %v3582 = vshll.u32 %v3497, 16
        %v3584 = vrot.slane %v3582, 1
        %v3585 = vsel %vm3505, %v3580, %v3584
        %v3586 = vshrl.u32 %v3496, 16
        %v3588 = vor.u32 %v3586, %v3576
        %v3590 = vshll.u32 %v3498, 16
        %v3592 = vrot.slane %v3590, 1
        %v3593 = vsel %vm3505, %v3588, %v3592
        %v3594 = vshrl.u32 %v3497, 16
        %v3596 = vor.u32 %v3594, %v3584
        %v3598 = vshll.u32 %v3499, 16
        %v3600 = vrot.slane %v3598, 1
        %v3601 = vsel %vm3505, %v3596, %v3600
        %v3602 = vshrl.u32 %v3498, 16
        %v3604 = vor.u32 %v3602, %v3592
        %v3606 = vshll.u32 %v3500, 16
        %v3608 = vrot.slane %v3606, 1
        %v3609 = vsel %vm3505, %v3604, %v3608
        %v3610 = vshrl.u32 %v3499, 16
        %v3612 = vor.u32 %v3610, %v3600
        %v3614 = vshll.u32 %v3501, 16
        %v3616 = vrot.slane %v3614, 1
        %v3617 = vsel %vm3505, %v3612, %v3616
        %v3618 = vshrl.u32 %v3500, 16
        %v3620 = vor.u32 %v3618, %v3608
        %v3622 = vshll.u32 %v3502, 16
        %v3624 = vrot.slane %v3622, 1
        %v3625 = vsel %vm3505, %v3620, %v3624
        %v3626 = vshrl.u32 %v3501, 16
        %v3628 = vor.u32 %v3626, %v3616
        %v3630 = vshll.u32 %v3503, 16
        %v3632 = vrot.slane %v3630, 1
        %v3633 = vsel %vm3505, %v3628, %v3632
        %v3634 = vshrl.u32 %v3502, 16
        %v3636 = vor.u32 %v3634, %v3624
        %v3638 = vshll.u32 %v3504, 16
        %v3640 = vrot.slane %v3638, 1
        %v3641 = vsel %vm3505, %v3636, %v3640
        %v3690 = vunpack.c.l.b16 %v3404
        %v3691 = vunpack.c.h.b16 %v3404
        %v3692 = vunpack.c.l.b16 %v3405
        %v3693 = vunpack.c.h.b16 %v3405
        %v3694 = vunpack.c.l.b16 %v3406
        %v3695 = vunpack.c.h.b16 %v3406
        %v3696 = vunpack.c.l.b16 %v3407
        %v3697 = vunpack.c.h.b16 %v3407
        %v3698 = vunpack.c.l.b16 %v3408
        %v3699 = vunpack.c.h.b16 %v3408
        %v3700 = vunpack.c.l.b16 %v3409
        %v3701 = vunpack.c.h.b16 %v3409
        %v3702 = vunpack.c.l.b16 %v3410
        %v3703 = vunpack.c.h.b16 %v3410
        %v3704 = vunpack.c.l.b16 %v3411
        %v3705 = vunpack.c.h.b16 %v3411
        %v3706 = vunpack.c.l.b16 %v3412
        %v3707 = vunpack.c.h.b16 %v3412
        %v3708 = vunpack.c.l.b16 %v3413
        %v3709 = vunpack.c.h.b16 %v3413
        %v3710 = vunpack.c.l.b16 %v3414
        %v3711 = vunpack.c.h.b16 %v3414
        %v3712 = vunpack.c.l.b16 %v3415
        %v3713 = vunpack.c.h.b16 %v3415
        %v3714 = vunpack.c.l.b16 %v3416
        %v3715 = vunpack.c.h.b16 %v3416
        %v3716 = vunpack.c.l.b16 %v3417
        %v3717 = vunpack.c.h.b16 %v3417
        %v3718 = vunpack.c.l.b16 %v3418
        %v3719 = vunpack.c.h.b16 %v3418
        %v3720 = vunpack.c.l.b16 %v3419
        %v3721 = vunpack.c.h.b16 %v3419
        %v3722 = vunpack.c.l.b16 %v3420
        %v3723 = vunpack.c.h.b16 %v3420
        %v3724 = vunpack.c.l.b16 %v3421
        %v3725 = vunpack.c.h.b16 %v3421
        %v3726 = vunpack.c.l.b16 %v3422
        %v3727 = vunpack.c.h.b16 %v3422
        %v3728 = vunpack.c.l.b16 %v3423
        %v3729 = vunpack.c.h.b16 %v3423
        %v3730 = vunpack.c.l.b16 %v3424
        %v3731 = vunpack.c.h.b16 %v3424
        %v3732 = vunpack.c.l.b16 %v3425
        %v3733 = vunpack.c.h.b16 %v3425
        %v3734 = vunpack.c.l.b16 %v3426
        %v3735 = vunpack.c.h.b16 %v3426
        %v3736 = vunpack.c.l.b16 %v3427
        %v3737 = vunpack.c.h.b16 %v3427
        %v3738 = vunpack.c.l.b16 %v3428
        %v3739 = vunpack.c.h.b16 %v3428
        %v3740 = vunpack.c.l.b16 %v3429
        %v3741 = vunpack.c.h.b16 %v3429
        %v3742 = vunpack.c.l.b16 %v3430
        %v3743 = vunpack.c.h.b16 %v3430
        %v3744 = vunpack.c.l.b16 %v3431
        %v3745 = vunpack.c.h.b16 %v3431
        %v3746 = vunpack.c.l.b16 %v3432
        %v3747 = vunpack.c.h.b16 %v3432
        %v3748 = vunpack.c.l.b16 %v3433
        %v3749 = vunpack.c.h.b16 %v3433
        %v3750 = vunpack.c.l.b16 %v3434
        %v3751 = vunpack.c.h.b16 %v3434
        %v3752 = vunpack.c.l.b16 %v3435
        %v3753 = vunpack.c.h.b16 %v3435
        %v3754 = vpack.c.b16 %v3692, %v3690
        %v3755 = vpack.c.b16 %v3693, %v3691
        %v3756 = vpack.c.b16 %v3696, %v3694
        %v3757 = vpack.c.b16 %v3697, %v3695
        %v3758 = vpack.c.b16 %v3700, %v3698
        %v3759 = vpack.c.b16 %v3701, %v3699
        %v3760 = vpack.c.b16 %v3704, %v3702
        %v3761 = vpack.c.b16 %v3705, %v3703
        %v3762 = vpack.c.b16 %v3708, %v3706
        %v3763 = vpack.c.b16 %v3709, %v3707
        %v3764 = vpack.c.b16 %v3712, %v3710
        %v3765 = vpack.c.b16 %v3713, %v3711
        %v3766 = vpack.c.b16 %v3716, %v3714
        %v3767 = vpack.c.b16 %v3717, %v3715
        %v3768 = vpack.c.b16 %v3720, %v3718
        %v3769 = vpack.c.b16 %v3721, %v3719
        %v3770 = vpack.c.b16 %v3724, %v3722
        %v3771 = vpack.c.b16 %v3725, %v3723
        %v3772 = vpack.c.b16 %v3728, %v3726
        %v3773 = vpack.c.b16 %v3729, %v3727
        %v3774 = vpack.c.b16 %v3732, %v3730
        %v3775 = vpack.c.b16 %v3733, %v3731
        %v3776 = vpack.c.b16 %v3736, %v3734
        %v3777 = vpack.c.b16 %v3737, %v3735
        %v3778 = vpack.c.b16 %v3740, %v3738
        %v3779 = vpack.c.b16 %v3741, %v3739
        %v3780 = vpack.c.b16 %v3744, %v3742
        %v3781 = vpack.c.b16 %v3745, %v3743
        %v3782 = vpack.c.b16 %v3748, %v3746
        %v3783 = vpack.c.b16 %v3749, %v3747
        %v3784 = vpack.c.b16 %v3752, %v3750
        %v3785 = vpack.c.b16 %v3753, %v3751
        %3818 = vmatprep.subr.bf16.mxu0 %v3755
        %3819 = vmatpush1.bf16.msra.mxu0 %v3754
        %3820 = vmatprep.subr.bf16.mxu0 %v3757
        %3821 = vmatpush1.bf16.msra.mxu0 %v3756
        %3822 = vmatprep.subr.bf16.mxu0 %v3759
        %3823 = vmatpush1.bf16.msra.mxu0 %v3758
        %3824 = vmatprep.subr.bf16.mxu0 %v3761
        %3825 = vmatpush1.bf16.msra.mxu0 %v3760
        %3826 = vmatprep.subr.bf16.mxu0 %v3763
        %3827 = vmatpush1.bf16.msra.mxu0 %v3762
        %3828 = vmatprep.subr.bf16.mxu0 %v3765
        %3829 = vmatpush1.bf16.msra.mxu0 %v3764
        %3830 = vmatprep.subr.bf16.mxu0 %v3767
        %3831 = vmatpush1.bf16.msra.mxu0 %v3766
        %3832 = vmatprep.subr.bf16.mxu0 %v3769
        %3833 = vmatpush1.bf16.msra.mxu0 %v3768
        %3834 = vmatprep.subr.bf16.mxu0 %v3771
        %3835 = vmatpush1.bf16.msra.mxu0 %v3770
        %3836 = vmatprep.subr.bf16.mxu0 %v3773
        %3837 = vmatpush1.bf16.msra.mxu0 %v3772
        %3838 = vmatprep.subr.bf16.mxu0 %v3775
        %3839 = vmatpush1.bf16.msra.mxu0 %v3774
        %3840 = vmatprep.subr.bf16.mxu0 %v3777
        %3841 = vmatpush1.bf16.msra.mxu0 %v3776
        %3842 = vmatprep.subr.bf16.mxu0 %v3779
        %3843 = vmatpush1.bf16.msra.mxu0 %v3778
        %3844 = vmatprep.subr.bf16.mxu0 %v3781
        %3845 = vmatpush1.bf16.msra.mxu0 %v3780
        %3846 = vmatprep.subr.bf16.mxu0 %v3783
        %3847 = vmatpush1.bf16.msra.mxu0 %v3782
        %3848 = vmatprep.subr.bf16.mxu0 %v3785
        %3849 = vmatpush1.bf16.msra.mxu0 %v3784
        %3850 = vmatprep.mubr.bf16.mxu0 %v3529
        %3851 = vmatmul.mubr.bf16.gmra.mrb[0].mxu0 %v3517
        %v3852 = vpop.f32.mrb[0].mxu0
        %v3853 = vadd.f32 0.0, %v3852
        %v3854 = vpop.f32.mrb[0].mxu0
        %v3855 = vadd.f32 0.0, %v3854
        %v3856 = vpop.f32.mrb[0].mxu0
        %v3857 = vadd.f32 0.0, %v3856
        %v3858 = vpop.f32.mrb[0].mxu0
        %v3859 = vadd.f32 0.0, %v3858
        %3860 = vmatprep.mubr.bf16.mxu0 %v3545
        %3861 = vmatmul.mubr.bf16.gmra.mrb[0].mxu0 %v3537
        %v3862 = vpop.f32.mrb[0].mxu0
        %v3863 = vadd.f32 0.0, %v3862
        %v3864 = vpop.f32.mrb[0].mxu0
        %v3865 = vadd.f32 0.0, %v3864
        %v3866 = vpop.f32.mrb[0].mxu0
        %v3867 = vadd.f32 0.0, %v3866
        %v3868 = vpop.f32.mrb[0].mxu0
        %v3869 = vadd.f32 0.0, %v3868
        %3870 = vmatprep.mubr.bf16.mxu0 %v3561
        %3871 = vmatmul.mubr.bf16.gmra.mrb[0].mxu0 %v3553
        %v3872 = vpop.f32.mrb[0].mxu0
        %v3873 = vadd.f32 0.0, %v3872
        %v3874 = vpop.f32.mrb[0].mxu0
        %v3875 = vadd.f32 0.0, %v3874
        %v3876 = vpop.f32.mrb[0].mxu0
        %v3877 = vadd.f32 0.0, %v3876
        %v3878 = vpop.f32.mrb[0].mxu0
        %v3879 = vadd.f32 0.0, %v3878
        %3880 = vmatprep.mubr.bf16.mxu0 %v3577
        %3881 = vmatmul.mubr.bf16.gmra.mrb[0].mxu0 %v3569
        %v3882 = vpop.f32.mrb[0].mxu0
        %v3883 = vadd.f32 0.0, %v3882
        %v3884 = vpop.f32.mrb[0].mxu0
        %v3885 = vadd.f32 0.0, %v3884
        %v3886 = vpop.f32.mrb[0].mxu0
        %v3887 = vadd.f32 0.0, %v3886
        %v3888 = vpop.f32.mrb[0].mxu0
        %v3889 = vadd.f32 0.0, %v3888
        %3890 = vmatprep.mubr.bf16.mxu0 %v3593
        %3891 = vmatmul.mubr.bf16.gmra.mrb[0].mxu0 %v3585
        %v3892 = vpop.f32.mrb[0].mxu0
        %v3893 = vadd.f32 0.0, %v3892
        %v3894 = vpop.f32.mrb[0].mxu0
        %v3895 = vadd.f32 0.0, %v3894
        %v3896 = vpop.f32.mrb[0].mxu0
        %v3897 = vadd.f32 0.0, %v3896
        %v3898 = vpop.f32.mrb[0].mxu0
        %v3899 = vadd.f32 0.0, %v3898
        %3900 = vmatprep.mubr.bf16.mxu0 %v3609
        %3901 = vmatmul.mubr.bf16.gmra.mrb[0].mxu0 %v3601
        %v3902 = vpop.f32.mrb[0].mxu0
        %v3903 = vadd.f32 0.0, %v3902
        %v3904 = vpop.f32.mrb[0].mxu0
        %v3905 = vadd.f32 0.0, %v3904
        %v3906 = vpop.f32.mrb[0].mxu0
        %v3907 = vadd.f32 0.0, %v3906
        %v3908 = vpop.f32.mrb[0].mxu0
        %v3909 = vadd.f32 0.0, %v3908
        %3910 = vmatprep.mubr.bf16.mxu0 %v3625
        %3911 = vmatmul.mubr.bf16.gmra.mrb[0].mxu0 %v3617
        %v3912 = vpop.f32.mrb[0].mxu0
        %v3913 = vadd.f32 0.0, %v3912
        %v3914 = vpop.f32.mrb[0].mxu0
        %v3915 = vadd.f32 0.0, %v3914
        %v3916 = vpop.f32.mrb[0].mxu0
        %v3917 = vadd.f32 0.0, %v3916
        %v3918 = vpop.f32.mrb[0].mxu0
        %v3919 = vadd.f32 0.0, %v3918
        %3920 = vmatprep.mubr.bf16.mxu0 %v3641
        %3921 = vmatmul.mubr.bf16.gmra.mrb[0].mxu0 %v3633
        %v3922 = vpop.f32.mrb[0].mxu0
        %v3923 = vadd.f32 0.0, %v3922
        %v3924 = vpop.f32.mrb[0].mxu0
        %v3925 = vadd.f32 0.0, %v3924
        %v3926 = vpop.f32.mrb[0].mxu0
        %v3927 = vadd.f32 0.0, %v3926
        %v3928 = vpop.f32.mrb[0].mxu0
        %v3929 = vadd.f32 0.0, %v3928
        %3930 = vdwg.mxu0
        %v3931 = vadd.f32 %v3371, %v3853
        %v3932 = vadd.f32 %v3372, %v3855
        %v3933 = vadd.f32 %v3373, %v3857
        %v3934 = vadd.f32 %v3374, %v3859
        %v3935 = vadd.f32 %v3375, %v3863
        %v3936 = vadd.f32 %v3376, %v3865
        %v3937 = vadd.f32 %v3377, %v3867
        %v3938 = vadd.f32 %v3378, %v3869
        %v3939 = vadd.f32 %v3379, %v3873
        %v3940 = vadd.f32 %v3380, %v3875
        %v3941 = vadd.f32 %v3381, %v3877
        %v3942 = vadd.f32 %v3382, %v3879
        %v3943 = vadd.f32 %v3383, %v3883
        %v3944 = vadd.f32 %v3384, %v3885
        %v3945 = vadd.f32 %v3385, %v3887
        %v3946 = vadd.f32 %v3386, %v3889
        %v3947 = vadd.f32 %v3387, %v3893
        %v3948 = vadd.f32 %v3388, %v3895
        %v3949 = vadd.f32 %v3389, %v3897
        %v3950 = vadd.f32 %v3390, %v3899
        %v3951 = vadd.f32 %v3391, %v3903
        %v3952 = vadd.f32 %v3392, %v3905
        %v3953 = vadd.f32 %v3393, %v3907
        %v3954 = vadd.f32 %v3394, %v3909
        %v3955 = vadd.f32 %v3395, %v3913
        %v3956 = vadd.f32 %v3396, %v3915
        %v3957 = vadd.f32 %v3397, %v3917
        %v3958 = vadd.f32 %v3398, %v3919
        %v3959 = vadd.f32 %v3399, %v3923
        %v3960 = vadd.f32 %v3400, %v3925
        %v3961 = vadd.f32 %v3401, %v3927
        %v3962 = vadd.f32 %v3402, %v3929
        %3963 = vst [vmem:[#allocation2] sm:$0xff] %v3931
        %3964 = vst [vmem:[#allocation2 + $0x8] sm:$0xff] %v3932
        %3965 = vst [vmem:[#allocation2 + $0x10] sm:$0xff] %v3933
        %3966 = vst [vmem:[#allocation2 + $0x18] sm:$0xff] %v3934
        %3967 = vst [vmem:[#allocation2 + $0x20] sm:$0xff] %v3935
        %3968 = vst [vmem:[#allocation2 + $0x28] sm:$0xff] %v3936
        %3969 = vst [vmem:[#allocation2 + $0x30] sm:$0xff] %v3937
        %3970 = vst [vmem:[#allocation2 + $0x38] sm:$0xff] %v3938
        %3971 = vst [vmem:[#allocation2 + $0x40] sm:$0xff] %v3939
        %3972 = vst [vmem:[#allocation2 + $0x48] sm:$0xff] %v3940
        %3973 = vst [vmem:[#allocation2 + $0x50] sm:$0xff] %v3941
        %3974 = vst [vmem:[#allocation2 + $0x58] sm:$0xff] %v3942
        %3975 = vst [vmem:[#allocation2 + $0x60] sm:$0xff] %v3943
        %3976 = vst [vmem:[#allocation2 + $0x68] sm:$0xff] %v3944
        %3977 = vst [vmem:[#allocation2 + $0x70] sm:$0xff] %v3945
        %3978 = vst [vmem:[#allocation2 + $0x78] sm:$0xff] %v3946
        %3979 = vst [vmem:[#allocation2 + $0x80] sm:$0xff] %v3947
        %3980 = vst [vmem:[#allocation2 + $0x88] sm:$0xff] %v3948
        %3981 = vst [vmem:[#allocation2 + $0x90] sm:$0xff] %v3949
        %3982 = vst [vmem:[#allocation2 + $0x98] sm:$0xff] %v3950
        %3983 = vst [vmem:[#allocation2 + $0xa0] sm:$0xff] %v3951
        %3984 = vst [vmem:[#allocation2 + $0xa8] sm:$0xff] %v3952
        %3985 = vst [vmem:[#allocation2 + $0xb0] sm:$0xff] %v3953
        %3986 = vst [vmem:[#allocation2 + $0xb8] sm:$0xff] %v3954
        %3987 = vst [vmem:[#allocation2 + $0xc0] sm:$0xff] %v3955
        %3988 = vst [vmem:[#allocation2 + $0xc8] sm:$0xff] %v3956
        %3989 = vst [vmem:[#allocation2 + $0xd0] sm:$0xff] %v3957
        %3990 = vst [vmem:[#allocation2 + $0xd8] sm:$0xff] %v3958
        %3991 = vst [vmem:[#allocation2 + $0xe0] sm:$0xff] %v3959
        %3992 = vst [vmem:[#allocation2 + $0xe8] sm:$0xff] %v3960
        %3993 = vst [vmem:[#allocation2 + $0xf0] sm:$0xff] %v3961
        %3994 = vst [vmem:[#allocation2 + $0xf8] sm:$0xff] %v3962
        %s3995 = sadd.s32 %s306, 40
        %s3996 = sshra.s32 %s3995, 3
        %s3997 = sand.u32 %s3995, 7
        %s3998 = smul.u32 %s3996, 2
        %s3999 = smul.addr %s3998, 4
        %s4000 = scalar_lea.vmem [#allocation3], %s3999
        %v4001 = vld [vmem:[%s4000] sm:$0xff]
        %v4002 = vld [vmem:[%s4000 + $0x8] sm:$0xff]
        %v4003 = vld [vmem:[%s4000 + $0x10] sm:$0xff]
        %v4004 = vld [vmem:[%s4000 + $0x18] sm:$0xff]
        %v4005 = vld [vmem:[%s4000 + $0x20] sm:$0xff]
        %v4006 = vld [vmem:[%s4000 + $0x28] sm:$0xff]
        %v4007 = vld [vmem:[%s4000 + $0x30] sm:$0xff]
        %v4008 = vld [vmem:[%s4000 + $0x38] sm:$0xff]
        %v4009 = vld [vmem:[%s4000 + $0x40] sm:$0xff]
        %v4010 = vld [vmem:[%s4000 + $0x48] sm:$0xff]
        %v4011 = vld [vmem:[%s4000 + $0x50] sm:$0xff]
        %v4012 = vld [vmem:[%s4000 + $0x58] sm:$0xff]
        %v4013 = vld [vmem:[%s4000 + $0x60] sm:$0xff]
        %v4014 = vld [vmem:[%s4000 + $0x68] sm:$0xff]
        %v4015 = vld [vmem:[%s4000 + $0x70] sm:$0xff]
        %v4016 = vld [vmem:[%s4000 + $0x78] sm:$0xff]
        %v4017 = vld [vmem:[%s4000 + $0x80] sm:$0xff]
        %v4018 = vld [vmem:[#allocation2] sm:$0xff]
        %v4019 = vld [vmem:[#allocation2 + $0x8] sm:$0xff]
        %v4020 = vld [vmem:[#allocation2 + $0x10] sm:$0xff]
        %v4021 = vld [vmem:[#allocation2 + $0x18] sm:$0xff]
        %v4022 = vld [vmem:[#allocation2 + $0x20] sm:$0xff]
        %v4023 = vld [vmem:[#allocation2 + $0x28] sm:$0xff]
        %v4024 = vld [vmem:[#allocation2 + $0x30] sm:$0xff]
        %v4025 = vld [vmem:[#allocation2 + $0x38] sm:$0xff]
        %v4026 = vld [vmem:[#allocation2 + $0x40] sm:$0xff]
        %v4027 = vld [vmem:[#allocation2 + $0x48] sm:$0xff]
        %v4028 = vld [vmem:[#allocation2 + $0x50] sm:$0xff]
        %v4029 = vld [vmem:[#allocation2 + $0x58] sm:$0xff]
        %v4030 = vld [vmem:[#allocation2 + $0x60] sm:$0xff]
        %v4031 = vld [vmem:[#allocation2 + $0x68] sm:$0xff]
        %v4032 = vld [vmem:[#allocation2 + $0x70] sm:$0xff]
        %v4033 = vld [vmem:[#allocation2 + $0x78] sm:$0xff]
        %v4034 = vld [vmem:[#allocation2 + $0x80] sm:$0xff]
        %v4035 = vld [vmem:[#allocation2 + $0x88] sm:$0xff]
        %v4036 = vld [vmem:[#allocation2 + $0x90] sm:$0xff]
        %v4037 = vld [vmem:[#allocation2 + $0x98] sm:$0xff]
        %v4038 = vld [vmem:[#allocation2 + $0xa0] sm:$0xff]
        %v4039 = vld [vmem:[#allocation2 + $0xa8] sm:$0xff]
        %v4040 = vld [vmem:[#allocation2 + $0xb0] sm:$0xff]
        %v4041 = vld [vmem:[#allocation2 + $0xb8] sm:$0xff]
        %v4042 = vld [vmem:[#allocation2 + $0xc0] sm:$0xff]
        %v4043 = vld [vmem:[#allocation2 + $0xc8] sm:$0xff]
        %v4044 = vld [vmem:[#allocation2 + $0xd0] sm:$0xff]
        %v4045 = vld [vmem:[#allocation2 + $0xd8] sm:$0xff]
        %v4046 = vld [vmem:[#allocation2 + $0xe0] sm:$0xff]
        %v4047 = vld [vmem:[#allocation2 + $0xe8] sm:$0xff]
        %v4048 = vld [vmem:[#allocation2 + $0xf0] sm:$0xff]
        %v4049 = vld [vmem:[#allocation2 + $0xf8] sm:$0xff]
        %s4050 = scalar_lea.vmem [#allocation6], 1536
        %v4051 = vld [vmem:[%s4050] sm:$0xff]
        %v4052 = vld [vmem:[%s4050 + $0x8] sm:$0xff]
        %v4053 = vld [vmem:[%s4050 + $0x10] sm:$0xff]
        %v4054 = vld [vmem:[%s4050 + $0x18] sm:$0xff]
        %v4055 = vld [vmem:[%s4050 + $0x20] sm:$0xff]
        %v4056 = vld [vmem:[%s4050 + $0x28] sm:$0xff]
        %v4057 = vld [vmem:[%s4050 + $0x30] sm:$0xff]
        %v4058 = vld [vmem:[%s4050 + $0x38] sm:$0xff]
        %v4059 = vld [vmem:[%s4050 + $0x40] sm:$0xff]
        %v4060 = vld [vmem:[%s4050 + $0x48] sm:$0xff]
        %v4061 = vld [vmem:[%s4050 + $0x50] sm:$0xff]
        %v4062 = vld [vmem:[%s4050 + $0x58] sm:$0xff]
        %v4063 = vld [vmem:[%s4050 + $0x60] sm:$0xff]
        %v4064 = vld [vmem:[%s4050 + $0x68] sm:$0xff]
        %v4065 = vld [vmem:[%s4050 + $0x70] sm:$0xff]
        %v4066 = vld [vmem:[%s4050 + $0x78] sm:$0xff]
        %v4067 = vld [vmem:[%s4050 + $0x80] sm:$0xff]
        %v4068 = vld [vmem:[%s4050 + $0x88] sm:$0xff]
        %v4069 = vld [vmem:[%s4050 + $0x90] sm:$0xff]
        %v4070 = vld [vmem:[%s4050 + $0x98] sm:$0xff]
        %v4071 = vld [vmem:[%s4050 + $0xa0] sm:$0xff]
        %v4072 = vld [vmem:[%s4050 + $0xa8] sm:$0xff]
        %v4073 = vld [vmem:[%s4050 + $0xb0] sm:$0xff]
        %v4074 = vld [vmem:[%s4050 + $0xb8] sm:$0xff]
        %v4075 = vld [vmem:[%s4050 + $0xc0] sm:$0xff]
        %v4076 = vld [vmem:[%s4050 + $0xc8] sm:$0xff]
        %v4077 = vld [vmem:[%s4050 + $0xd0] sm:$0xff]
        %v4078 = vld [vmem:[%s4050 + $0xd8] sm:$0xff]
        %v4079 = vld [vmem:[%s4050 + $0xe0] sm:$0xff]
        %v4080 = vld [vmem:[%s4050 + $0xe8] sm:$0xff]
        %v4081 = vld [vmem:[%s4050 + $0xf0] sm:$0xff]
        %v4082 = vld [vmem:[%s4050 + $0xf8] sm:$0xff]
        %v4100 = vunpack.c.l.b16 %v4001
        %v4101 = vunpack.c.h.b16 %v4001
        %v4102 = vunpack.c.l.b16 %v4002
        %v4103 = vunpack.c.h.b16 %v4002
        %v4104 = vunpack.c.l.b16 %v4003
        %v4105 = vunpack.c.h.b16 %v4003
        %v4106 = vunpack.c.l.b16 %v4004
        %v4107 = vunpack.c.h.b16 %v4004
        %v4108 = vunpack.c.l.b16 %v4005
        %v4109 = vunpack.c.h.b16 %v4005
        %v4110 = vunpack.c.l.b16 %v4006
        %v4111 = vunpack.c.h.b16 %v4006
        %v4112 = vunpack.c.l.b16 %v4007
        %v4113 = vunpack.c.h.b16 %v4007
        %v4114 = vunpack.c.l.b16 %v4008
        %v4115 = vunpack.c.h.b16 %v4008
        %v4116 = vunpack.c.l.b16 %v4009
        %v4117 = vunpack.c.h.b16 %v4009
        %v4118 = vunpack.c.l.b16 %v4010
        %v4119 = vunpack.c.h.b16 %v4010
        %v4120 = vunpack.c.l.b16 %v4011
        %v4121 = vunpack.c.h.b16 %v4011
        %v4122 = vunpack.c.l.b16 %v4012
        %v4123 = vunpack.c.h.b16 %v4012
        %v4124 = vunpack.c.l.b16 %v4013
        %v4125 = vunpack.c.h.b16 %v4013
        %v4126 = vunpack.c.l.b16 %v4014
        %v4127 = vunpack.c.h.b16 %v4014
        %v4128 = vunpack.c.l.b16 %v4015
        %v4129 = vunpack.c.h.b16 %v4015
        %v4130 = vunpack.c.l.b16 %v4016
        %v4131 = vunpack.c.h.b16 %v4016
        %v4132 = vunpack.c.l.b16 %v4017
        %v4133 = vunpack.c.h.b16 %v4017
        %v4134 = vpack.c.b16 %v4102, %v4100
        %v4135 = vpack.c.b16 %v4103, %v4101
        %v4136 = vpack.c.b16 %v4106, %v4104
        %v4137 = vpack.c.b16 %v4107, %v4105
        %v4138 = vpack.c.b16 %v4110, %v4108
        %v4139 = vpack.c.b16 %v4111, %v4109
        %v4140 = vpack.c.b16 %v4114, %v4112
        %v4141 = vpack.c.b16 %v4115, %v4113
        %v4142 = vpack.c.b16 %v4118, %v4116
        %v4143 = vpack.c.b16 %v4119, %v4117
        %v4144 = vpack.c.b16 %v4122, %v4120
        %v4145 = vpack.c.b16 %v4123, %v4121
        %v4146 = vpack.c.b16 %v4126, %v4124
        %v4147 = vpack.c.b16 %v4127, %v4125
        %v4148 = vpack.c.b16 %v4130, %v4128
        %v4149 = vpack.c.b16 %v4131, %v4129
        %v4150 = vpack.c.b16 %v4132, %v4132
        %v4151 = vpack.c.b16 %v4133, %v4133
        %v4153 = vshrl.u32 %v4134, 16
        %v4155 = vshll.u32 %v4134, 16
        %v4157 = vrot.slane %v4155, 1
        %v4158 = vor.u32 %v4153, %v4157
        %v4160 = vshll.u32 %v4136, 16
        %v4162 = vrot.slane %v4160, 1
        %v4163 = vsel %vm3505, %v4158, %v4162
        %v4165 = vshrl.u32 %v4135, 16
        %v4167 = vshll.u32 %v4135, 16
        %v4169 = vrot.slane %v4167, 1
        %v4170 = vor.u32 %v4165, %v4169
        %v4172 = vshll.u32 %v4137, 16
        %v4174 = vrot.slane %v4172, 1
        %v4175 = vsel %vm3505, %v4170, %v4174
        %v4176 = vshrl.u32 %v4136, 16
        %v4178 = vor.u32 %v4176, %v4162
        %v4180 = vshll.u32 %v4138, 16
        %v4182 = vrot.slane %v4180, 1
        %v4183 = vsel %vm3505, %v4178, %v4182
        %v4184 = vshrl.u32 %v4137, 16
        %v4186 = vor.u32 %v4184, %v4174
        %v4188 = vshll.u32 %v4139, 16
        %v4190 = vrot.slane %v4188, 1
        %v4191 = vsel %vm3505, %v4186, %v4190
        %v4192 = vshrl.u32 %v4138, 16
        %v4194 = vor.u32 %v4192, %v4182
        %v4196 = vshll.u32 %v4140, 16
        %v4198 = vrot.slane %v4196, 1
        %v4199 = vsel %vm3505, %v4194, %v4198
        %v4200 = vshrl.u32 %v4139, 16
        %v4202 = vor.u32 %v4200, %v4190
        %v4204 = vshll.u32 %v4141, 16
        %v4206 = vrot.slane %v4204, 1
        %v4207 = vsel %vm3505, %v4202, %v4206
        %v4208 = vshrl.u32 %v4140, 16
        %v4210 = vor.u32 %v4208, %v4198
        %v4212 = vshll.u32 %v4142, 16
        %v4214 = vrot.slane %v4212, 1
        %v4215 = vsel %vm3505, %v4210, %v4214
        %v4216 = vshrl.u32 %v4141, 16
        %v4218 = vor.u32 %v4216, %v4206
        %v4220 = vshll.u32 %v4143, 16
        %v4222 = vrot.slane %v4220, 1
        %v4223 = vsel %vm3505, %v4218, %v4222
        %v4224 = vshrl.u32 %v4142, 16
        %v4226 = vor.u32 %v4224, %v4214
        %v4228 = vshll.u32 %v4144, 16
        %v4230 = vrot.slane %v4228, 1
        %v4231 = vsel %vm3505, %v4226, %v4230
        %v4232 = vshrl.u32 %v4143, 16
        %v4234 = vor.u32 %v4232, %v4222
        %v4236 = vshll.u32 %v4145, 16
        %v4238 = vrot.slane %v4236, 1
        %v4239 = vsel %vm3505, %v4234, %v4238
        %v4240 = vshrl.u32 %v4144, 16
        %v4242 = vor.u32 %v4240, %v4230
        %v4244 = vshll.u32 %v4146, 16
        %v4246 = vrot.slane %v4244, 1
        %v4247 = vsel %vm3505, %v4242, %v4246
        %v4248 = vshrl.u32 %v4145, 16
        %v4250 = vor.u32 %v4248, %v4238
        %v4252 = vshll.u32 %v4147, 16
        %v4254 = vrot.slane %v4252, 1
        %v4255 = vsel %vm3505, %v4250, %v4254
        %v4256 = vshrl.u32 %v4146, 16
        %v4258 = vor.u32 %v4256, %v4246
        %v4260 = vshll.u32 %v4148, 16
        %v4262 = vrot.slane %v4260, 1
        %v4263 = vsel %vm3505, %v4258, %v4262
        %v4264 = vshrl.u32 %v4147, 16
        %v4266 = vor.u32 %v4264, %v4254
        %v4268 = vshll.u32 %v4149, 16
        %v4270 = vrot.slane %v4268, 1
        %v4271 = vsel %vm3505, %v4266, %v4270
        %v4272 = vshrl.u32 %v4148, 16
        %v4274 = vor.u32 %v4272, %v4262
        %v4276 = vshll.u32 %v4150, 16
        %v4278 = vrot.slane %v4276, 1
        %v4279 = vsel %vm3505, %v4274, %v4278
        %v4280 = vshrl.u32 %v4149, 16
        %v4282 = vor.u32 %v4280, %v4270
        %v4284 = vshll.u32 %v4151, 16
        %v4286 = vrot.slane %v4284, 1
        %v4287 = vsel %vm3505, %v4282, %v4286
        %v4336 = vunpack.c.l.b16 %v4051
        %v4337 = vunpack.c.h.b16 %v4051
        %v4338 = vunpack.c.l.b16 %v4052
        %v4339 = vunpack.c.h.b16 %v4052
        %v4340 = vunpack.c.l.b16 %v4053
        %v4341 = vunpack.c.h.b16 %v4053
        %v4342 = vunpack.c.l.b16 %v4054
        %v4343 = vunpack.c.h.b16 %v4054
        %v4344 = vunpack.c.l.b16 %v4055
        %v4345 = vunpack.c.h.b16 %v4055
        %v4346 = vunpack.c.l.b16 %v4056
        %v4347 = vunpack.c.h.b16 %v4056
        %v4348 = vunpack.c.l.b16 %v4057
        %v4349 = vunpack.c.h.b16 %v4057
        %v4350 = vunpack.c.l.b16 %v4058
        %v4351 = vunpack.c.h.b16 %v4058
        %v4352 = vunpack.c.l.b16 %v4059
        %v4353 = vunpack.c.h.b16 %v4059
        %v4354 = vunpack.c.l.b16 %v4060
        %v4355 = vunpack.c.h.b16 %v4060
        %v4356 = vunpack.c.l.b16 %v4061
        %v4357 = vunpack.c.h.b16 %v4061
        %v4358 = vunpack.c.l.b16 %v4062
        %v4359 = vunpack.c.h.b16 %v4062
        %v4360 = vunpack.c.l.b16 %v4063
        %v4361 = vunpack.c.h.b16 %v4063
        %v4362 = vunpack.c.l.b16 %v4064
        %v4363 = vunpack.c.h.b16 %v4064
        %v4364 = vunpack.c.l.b16 %v4065
        %v4365 = vunpack.c.h.b16 %v4065
        %v4366 = vunpack.c.l.b16 %v4066
        %v4367 = vunpack.c.h.b16 %v4066
        %v4368 = vunpack.c.l.b16 %v4067
        %v4369 = vunpack.c.h.b16 %v4067
        %v4370 = vunpack.c.l.b16 %v4068
        %v4371 = vunpack.c.h.b16 %v4068
        %v4372 = vunpack.c.l.b16 %v4069
        %v4373 = vunpack.c.h.b16 %v4069
        %v4374 = vunpack.c.l.b16 %v4070
        %v4375 = vunpack.c.h.b16 %v4070
        %v4376 = vunpack.c.l.b16 %v4071
        %v4377 = vunpack.c.h.b16 %v4071
        %v4378 = vunpack.c.l.b16 %v4072
        %v4379 = vunpack.c.h.b16 %v4072
        %v4380 = vunpack.c.l.b16 %v4073
        %v4381 = vunpack.c.h.b16 %v4073
        %v4382 = vunpack.c.l.b16 %v4074
        %v4383 = vunpack.c.h.b16 %v4074
        %v4384 = vunpack.c.l.b16 %v4075
        %v4385 = vunpack.c.h.b16 %v4075
        %v4386 = vunpack.c.l.b16 %v4076
        %v4387 = vunpack.c.h.b16 %v4076
        %v4388 = vunpack.c.l.b16 %v4077
        %v4389 = vunpack.c.h.b16 %v4077
        %v4390 = vunpack.c.l.b16 %v4078
        %v4391 = vunpack.c.h.b16 %v4078
        %v4392 = vunpack.c.l.b16 %v4079
        %v4393 = vunpack.c.h.b16 %v4079
        %v4394 = vunpack.c.l.b16 %v4080
        %v4395 = vunpack.c.h.b16 %v4080
        %v4396 = vunpack.c.l.b16 %v4081
        %v4397 = vunpack.c.h.b16 %v4081
        %v4398 = vunpack.c.l.b16 %v4082
        %v4399 = vunpack.c.h.b16 %v4082
        %v4400 = vpack.c.b16 %v4338, %v4336
        %v4401 = vpack.c.b16 %v4339, %v4337
        %v4402 = vpack.c.b16 %v4342, %v4340
        %v4403 = vpack.c.b16 %v4343, %v4341
        %v4404 = vpack.c.b16 %v4346, %v4344
        %v4405 = vpack.c.b16 %v4347, %v4345
        %v4406 = vpack.c.b16 %v4350, %v4348
        %v4407 = vpack.c.b16 %v4351, %v4349
        %v4408 = vpack.c.b16 %v4354, %v4352
        %v4409 = vpack.c.b16 %v4355, %v4353
        %v4410 = vpack.c.b16 %v4358, %v4356
        %v4411 = vpack.c.b16 %v4359, %v4357
        %v4412 = vpack.c.b16 %v4362, %v4360
        %v4413 = vpack.c.b16 %v4363, %v4361
        %v4414 = vpack.c.b16 %v4366, %v4364
        %v4415 = vpack.c.b16 %v4367, %v4365
        %v4416 = vpack.c.b16 %v4370, %v4368
        %v4417 = vpack.c.b16 %v4371, %v4369
        %v4418 = vpack.c.b16 %v4374, %v4372
        %v4419 = vpack.c.b16 %v4375, %v4373
        %v4420 = vpack.c.b16 %v4378, %v4376
        %v4421 = vpack.c.b16 %v4379, %v4377
        %v4422 = vpack.c.b16 %v4382, %v4380
        %v4423 = vpack.c.b16 %v4383, %v4381
        %v4424 = vpack.c.b16 %v4386, %v4384
        %v4425 = vpack.c.b16 %v4387, %v4385
        %v4426 = vpack.c.b16 %v4390, %v4388
        %v4427 = vpack.c.b16 %v4391, %v4389
        %v4428 = vpack.c.b16 %v4394, %v4392
        %v4429 = vpack.c.b16 %v4395, %v4393
        %v4430 = vpack.c.b16 %v4398, %v4396
        %v4431 = vpack.c.b16 %v4399, %v4397
        %4464 = vmatprep.subr.bf16.mxu0 %v4401
        %4465 = vmatpush1.bf16.msra.mxu0 %v4400
        %4466 = vmatprep.subr.bf16.mxu0 %v4403
        %4467 = vmatpush1.bf16.msra.mxu0 %v4402
        %4468 = vmatprep.subr.bf16.mxu0 %v4405
        %4469 = vmatpush1.bf16.msra.mxu0 %v4404
        %4470 = vmatprep.subr.bf16.mxu0 %v4407
        %4471 = vmatpush1.bf16.msra.mxu0 %v4406
        %4472 = vmatprep.subr.bf16.mxu0 %v4409
        %4473 = vmatpush1.bf16.msra.mxu0 %v4408
        %4474 = vmatprep.subr.bf16.mxu0 %v4411
        %4475 = vmatpush1.bf16.msra.mxu0 %v4410
        %4476 = vmatprep.subr.bf16.mxu0 %v4413
        %4477 = vmatpush1.bf16.msra.mxu0 %v4412
        %4478 = vmatprep.subr.bf16.mxu0 %v4415
        %4479 = vmatpush1.bf16.msra.mxu0 %v4414
        %4480 = vmatprep.subr.bf16.mxu0 %v4417
        %4481 = vmatpush1.bf16.msra.mxu0 %v4416
        %4482 = vmatprep.subr.bf16.mxu0 %v4419
        %4483 = vmatpush1.bf16.msra.mxu0 %v4418
        %4484 = vmatprep.subr.bf16.mxu0 %v4421
        %4485 = vmatpush1.bf16.msra.mxu0 %v4420
        %4486 = vmatprep.subr.bf16.mxu0 %v4423
        %4487 = vmatpush1.bf16.msra.mxu0 %v4422
        %4488 = vmatprep.subr.bf16.mxu0 %v4425
        %4489 = vmatpush1.bf16.msra.mxu0 %v4424
        %4490 = vmatprep.subr.bf16.mxu0 %v4427
        %4491 = vmatpush1.bf16.msra.mxu0 %v4426
        %4492 = vmatprep.subr.bf16.mxu0 %v4429
        %4493 = vmatpush1.bf16.msra.mxu0 %v4428
        %4494 = vmatprep.subr.bf16.mxu0 %v4431
        %4495 = vmatpush1.bf16.msra.mxu0 %v4430
        %4496 = vmatprep.mubr.bf16.mxu0 %v4175
        %4497 = vmatmul.mubr.bf16.gmra.mrb[0].mxu0 %v4163
        %v4498 = vpop.f32.mrb[0].mxu0
        %v4499 = vadd.f32 0.0, %v4498
        %v4500 = vpop.f32.mrb[0].mxu0
        %v4501 = vadd.f32 0.0, %v4500
        %v4502 = vpop.f32.mrb[0].mxu0
        %v4503 = vadd.f32 0.0, %v4502
        %v4504 = vpop.f32.mrb[0].mxu0
        %v4505 = vadd.f32 0.0, %v4504
        %4506 = vmatprep.mubr.bf16.mxu0 %v4191
        %4507 = vmatmul.mubr.bf16.gmra.mrb[0].mxu0 %v4183
        %v4508 = vpop.f32.mrb[0].mxu0
        %v4509 = vadd.f32 0.0, %v4508
        %v4510 = vpop.f32.mrb[0].mxu0
        %v4511 = vadd.f32 0.0, %v4510
        %v4512 = vpop.f32.mrb[0].mxu0
        %v4513 = vadd.f32 0.0, %v4512
        %v4514 = vpop.f32.mrb[0].mxu0
        %v4515 = vadd.f32 0.0, %v4514
        %4516 = vmatprep.mubr.bf16.mxu0 %v4207
        %4517 = vmatmul.mubr.bf16.gmra.mrb[0].mxu0 %v4199
        %v4518 = vpop.f32.mrb[0].mxu0
        %v4519 = vadd.f32 0.0, %v4518
        %v4520 = vpop.f32.mrb[0].mxu0
        %v4521 = vadd.f32 0.0, %v4520
        %v4522 = vpop.f32.mrb[0].mxu0
        %v4523 = vadd.f32 0.0, %v4522
        %v4524 = vpop.f32.mrb[0].mxu0
        %v4525 = vadd.f32 0.0, %v4524
        %4526 = vmatprep.mubr.bf16.mxu0 %v4223
        %4527 = vmatmul.mubr.bf16.gmra.mrb[0].mxu0 %v4215
        %v4528 = vpop.f32.mrb[0].mxu0
        %v4529 = vadd.f32 0.0, %v4528
        %v4530 = vpop.f32.mrb[0].mxu0
        %v4531 = vadd.f32 0.0, %v4530
        %v4532 = vpop.f32.mrb[0].mxu0
        %v4533 = vadd.f32 0.0, %v4532
        %v4534 = vpop.f32.mrb[0].mxu0
        %v4535 = vadd.f32 0.0, %v4534
        %4536 = vmatprep.mubr.bf16.mxu0 %v4239
        %4537 = vmatmul.mubr.bf16.gmra.mrb[0].mxu0 %v4231
        %v4538 = vpop.f32.mrb[0].mxu0
        %v4539 = vadd.f32 0.0, %v4538
        %v4540 = vpop.f32.mrb[0].mxu0
        %v4541 = vadd.f32 0.0, %v4540
        %v4542 = vpop.f32.mrb[0].mxu0
        %v4543 = vadd.f32 0.0, %v4542
        %v4544 = vpop.f32.mrb[0].mxu0
        %v4545 = vadd.f32 0.0, %v4544
        %4546 = vmatprep.mubr.bf16.mxu0 %v4255
        %4547 = vmatmul.mubr.bf16.gmra.mrb[0].mxu0 %v4247
        %v4548 = vpop.f32.mrb[0].mxu0
        %v4549 = vadd.f32 0.0, %v4548
        %v4550 = vpop.f32.mrb[0].mxu0
        %v4551 = vadd.f32 0.0, %v4550
        %v4552 = vpop.f32.mrb[0].mxu0
        %v4553 = vadd.f32 0.0, %v4552
        %v4554 = vpop.f32.mrb[0].mxu0
        %v4555 = vadd.f32 0.0, %v4554
        %4556 = vmatprep.mubr.bf16.mxu0 %v4271
        %4557 = vmatmul.mubr.bf16.gmra.mrb[0].mxu0 %v4263
        %v4558 = vpop.f32.mrb[0].mxu0
        %v4559 = vadd.f32 0.0, %v4558
        %v4560 = vpop.f32.mrb[0].mxu0
        %v4561 = vadd.f32 0.0, %v4560
        %v4562 = vpop.f32.mrb[0].mxu0
        %v4563 = vadd.f32 0.0, %v4562
        %v4564 = vpop.f32.mrb[0].mxu0
        %v4565 = vadd.f32 0.0, %v4564
        %4566 = vmatprep.mubr.bf16.mxu0 %v4287
        %4567 = vmatmul.mubr.bf16.gmra.mrb[0].mxu0 %v4279
        %v4568 = vpop.f32.mrb[0].mxu0
        %v4569 = vadd.f32 0.0, %v4568
        %v4570 = vpop.f32.mrb[0].mxu0
        %v4571 = vadd.f32 0.0, %v4570
        %v4572 = vpop.f32.mrb[0].mxu0
        %v4573 = vadd.f32 0.0, %v4572
        %v4574 = vpop.f32.mrb[0].mxu0
        %v4575 = vadd.f32 0.0, %v4574
        %4576 = vdwg.mxu0
        %v4577 = vadd.f32 %v4018, %v4499
        %v4578 = vadd.f32 %v4019, %v4501
        %v4579 = vadd.f32 %v4020, %v4503
        %v4580 = vadd.f32 %v4021, %v4505
        %v4581 = vadd.f32 %v4022, %v4509
        %v4582 = vadd.f32 %v4023, %v4511
        %v4583 = vadd.f32 %v4024, %v4513
        %v4584 = vadd.f32 %v4025, %v4515
        %v4585 = vadd.f32 %v4026, %v4519
        %v4586 = vadd.f32 %v4027, %v4521
        %v4587 = vadd.f32 %v4028, %v4523
        %v4588 = vadd.f32 %v4029, %v4525
        %v4589 = vadd.f32 %v4030, %v4529
        %v4590 = vadd.f32 %v4031, %v4531
        %v4591 = vadd.f32 %v4032, %v4533
        %v4592 = vadd.f32 %v4033, %v4535
        %v4593 = vadd.f32 %v4034, %v4539
        %v4594 = vadd.f32 %v4035, %v4541
        %v4595 = vadd.f32 %v4036, %v4543
        %v4596 = vadd.f32 %v4037, %v4545
        %v4597 = vadd.f32 %v4038, %v4549
        %v4598 = vadd.f32 %v4039, %v4551
        %v4599 = vadd.f32 %v4040, %v4553
        %v4600 = vadd.f32 %v4041, %v4555
        %v4601 = vadd.f32 %v4042, %v4559
        %v4602 = vadd.f32 %v4043, %v4561
        %v4603 = vadd.f32 %v4044, %v4563
        %v4604 = vadd.f32 %v4045, %v4565
        %v4605 = vadd.f32 %v4046, %v4569
        %v4606 = vadd.f32 %v4047, %v4571
        %v4607 = vadd.f32 %v4048, %v4573
        %v4608 = vadd.f32 %v4049, %v4575
        %4609 = vst [vmem:[#allocation2] sm:$0xff] %v4577
        %4610 = vst [vmem:[#allocation2 + $0x8] sm:$0xff] %v4578
        %4611 = vst [vmem:[#allocation2 + $0x10] sm:$0xff] %v4579
        %4612 = vst [vmem:[#allocation2 + $0x18] sm:$0xff] %v4580
        %4613 = vst [vmem:[#allocation2 + $0x20] sm:$0xff] %v4581
        %4614 = vst [vmem:[#allocation2 + $0x28] sm:$0xff] %v4582
        %4615 = vst [vmem:[#allocation2 + $0x30] sm:$0xff] %v4583
        %4616 = vst [vmem:[#allocation2 + $0x38] sm:$0xff] %v4584
        %4617 = vst [vmem:[#allocation2 + $0x40] sm:$0xff] %v4585
        %4618 = vst [vmem:[#allocation2 + $0x48] sm:$0xff] %v4586
        %4619 = vst [vmem:[#allocation2 + $0x50] sm:$0xff] %v4587
        %4620 = vst [vmem:[#allocation2 + $0x58] sm:$0xff] %v4588
        %4621 = vst [vmem:[#allocation2 + $0x60] sm:$0xff] %v4589
        %4622 = vst [vmem:[#allocation2 + $0x68] sm:$0xff] %v4590
        %4623 = vst [vmem:[#allocation2 + $0x70] sm:$0xff] %v4591
        %4624 = vst [vmem:[#allocation2 + $0x78] sm:$0xff] %v4592
        %4625 = vst [vmem:[#allocation2 + $0x80] sm:$0xff] %v4593
        %4626 = vst [vmem:[#allocation2 + $0x88] sm:$0xff] %v4594
        %4627 = vst [vmem:[#allocation2 + $0x90] sm:$0xff] %v4595
        %4628 = vst [vmem:[#allocation2 + $0x98] sm:$0xff] %v4596
        %4629 = vst [vmem:[#allocation2 + $0xa0] sm:$0xff] %v4597
        %4630 = vst [vmem:[#allocation2 + $0xa8] sm:$0xff] %v4598
        %4631 = vst [vmem:[#allocation2 + $0xb0] sm:$0xff] %v4599
        %4632 = vst [vmem:[#allocation2 + $0xb8] sm:$0xff] %v4600
        %4633 = vst [vmem:[#allocation2 + $0xc0] sm:$0xff] %v4601
        %4634 = vst [vmem:[#allocation2 + $0xc8] sm:$0xff] %v4602
        %4635 = vst [vmem:[#allocation2 + $0xd0] sm:$0xff] %v4603
        %4636 = vst [vmem:[#allocation2 + $0xd8] sm:$0xff] %v4604
        %4637 = vst [vmem:[#allocation2 + $0xe0] sm:$0xff] %v4605
        %4638 = vst [vmem:[#allocation2 + $0xe8] sm:$0xff] %v4606
        %4639 = vst [vmem:[#allocation2 + $0xf0] sm:$0xff] %v4607
        %4640 = vst [vmem:[#allocation2 + $0xf8] sm:$0xff] %v4608
        %v4641 = vld [vmem:[%s4000] sm:$0xff]
        %v4642 = vld [vmem:[%s4000 + $0x8] sm:$0xff]
        %v4643 = vld [vmem:[%s4000 + $0x10] sm:$0xff]
        %v4644 = vld [vmem:[%s4000 + $0x18] sm:$0xff]
        %v4645 = vld [vmem:[%s4000 + $0x20] sm:$0xff]
        %v4646 = vld [vmem:[%s4000 + $0x28] sm:$0xff]
        %v4647 = vld [vmem:[%s4000 + $0x30] sm:$0xff]
        %v4648 = vld [vmem:[%s4000 + $0x38] sm:$0xff]
        %v4649 = vld [vmem:[%s4000 + $0x40] sm:$0xff]
        %v4650 = vld [vmem:[%s4000 + $0x48] sm:$0xff]
        %v4651 = vld [vmem:[%s4000 + $0x50] sm:$0xff]
        %v4652 = vld [vmem:[%s4000 + $0x58] sm:$0xff]
        %v4653 = vld [vmem:[%s4000 + $0x60] sm:$0xff]
        %v4654 = vld [vmem:[%s4000 + $0x68] sm:$0xff]
        %v4655 = vld [vmem:[%s4000 + $0x70] sm:$0xff]
        %v4656 = vld [vmem:[%s4000 + $0x78] sm:$0xff]
        %v4657 = vld [vmem:[%s4000 + $0x80] sm:$0xff]
        %v4658 = vld [vmem:[#allocation2] sm:$0xff]
        %v4659 = vld [vmem:[#allocation2 + $0x8] sm:$0xff]
        %v4660 = vld [vmem:[#allocation2 + $0x10] sm:$0xff]
        %v4661 = vld [vmem:[#allocation2 + $0x18] sm:$0xff]
        %v4662 = vld [vmem:[#allocation2 + $0x20] sm:$0xff]
        %v4663 = vld [vmem:[#allocation2 + $0x28] sm:$0xff]
        %v4664 = vld [vmem:[#allocation2 + $0x30] sm:$0xff]
        %v4665 = vld [vmem:[#allocation2 + $0x38] sm:$0xff]
        %v4666 = vld [vmem:[#allocation2 + $0x40] sm:$0xff]
        %v4667 = vld [vmem:[#allocation2 + $0x48] sm:$0xff]
        %v4668 = vld [vmem:[#allocation2 + $0x50] sm:$0xff]
        %v4669 = vld [vmem:[#allocation2 + $0x58] sm:$0xff]
        %v4670 = vld [vmem:[#allocation2 + $0x60] sm:$0xff]
        %v4671 = vld [vmem:[#allocation2 + $0x68] sm:$0xff]
        %v4672 = vld [vmem:[#allocation2 + $0x70] sm:$0xff]
        %v4673 = vld [vmem:[#allocation2 + $0x78] sm:$0xff]
        %v4674 = vld [vmem:[#allocation2 + $0x80] sm:$0xff]
        %v4675 = vld [vmem:[#allocation2 + $0x88] sm:$0xff]
        %v4676 = vld [vmem:[#allocation2 + $0x90] sm:$0xff]
        %v4677 = vld [vmem:[#allocation2 + $0x98] sm:$0xff]
        %v4678 = vld [vmem:[#allocation2 + $0xa0] sm:$0xff]
        %v4679 = vld [vmem:[#allocation2 + $0xa8] sm:$0xff]
        %v4680 = vld [vmem:[#allocation2 + $0xb0] sm:$0xff]
        %v4681 = vld [vmem:[#allocation2 + $0xb8] sm:$0xff]
        %v4682 = vld [vmem:[#allocation2 + $0xc0] sm:$0xff]
        %v4683 = vld [vmem:[#allocation2 + $0xc8] sm:$0xff]
        %v4684 = vld [vmem:[#allocation2 + $0xd0] sm:$0xff]
        %v4685 = vld [vmem:[#allocation2 + $0xd8] sm:$0xff]
        %v4686 = vld [vmem:[#allocation2 + $0xe0] sm:$0xff]
        %v4687 = vld [vmem:[#allocation2 + $0xe8] sm:$0xff]
        %v4688 = vld [vmem:[#allocation2 + $0xf0] sm:$0xff]
        %v4689 = vld [vmem:[#allocation2 + $0xf8] sm:$0xff]
        %s4690 = scalar_lea.vmem [#allocation6], 1792
        %v4691 = vld [vmem:[%s4690] sm:$0xff]
        %v4692 = vld [vmem:[%s4690 + $0x8] sm:$0xff]
        %v4693 = vld [vmem:[%s4690 + $0x10] sm:$0xff]
        %v4694 = vld [vmem:[%s4690 + $0x18] sm:$0xff]
        %v4695 = vld [vmem:[%s4690 + $0x20] sm:$0xff]
        %v4696 = vld [vmem:[%s4690 + $0x28] sm:$0xff]
        %v4697 = vld [vmem:[%s4690 + $0x30] sm:$0xff]
        %v4698 = vld [vmem:[%s4690 + $0x38] sm:$0xff]
        %v4699 = vld [vmem:[%s4690 + $0x40] sm:$0xff]
        %v4700 = vld [vmem:[%s4690 + $0x48] sm:$0xff]
        %v4701 = vld [vmem:[%s4690 + $0x50] sm:$0xff]
        %v4702 = vld [vmem:[%s4690 + $0x58] sm:$0xff]
        %v4703 = vld [vmem:[%s4690 + $0x60] sm:$0xff]
        %v4704 = vld [vmem:[%s4690 + $0x68] sm:$0xff]
        %v4705 = vld [vmem:[%s4690 + $0x70] sm:$0xff]
        %v4706 = vld [vmem:[%s4690 + $0x78] sm:$0xff]
        %v4707 = vld [vmem:[%s4690 + $0x80] sm:$0xff]
        %v4708 = vld [vmem:[%s4690 + $0x88] sm:$0xff]
        %v4709 = vld [vmem:[%s4690 + $0x90] sm:$0xff]
        %v4710 = vld [vmem:[%s4690 + $0x98] sm:$0xff]
        %v4711 = vld [vmem:[%s4690 + $0xa0] sm:$0xff]
        %v4712 = vld [vmem:[%s4690 + $0xa8] sm:$0xff]
        %v4713 = vld [vmem:[%s4690 + $0xb0] sm:$0xff]
        %v4714 = vld [vmem:[%s4690 + $0xb8] sm:$0xff]
        %v4715 = vld [vmem:[%s4690 + $0xc0] sm:$0xff]
        %v4716 = vld [vmem:[%s4690 + $0xc8] sm:$0xff]
        %v4717 = vld [vmem:[%s4690 + $0xd0] sm:$0xff]
        %v4718 = vld [vmem:[%s4690 + $0xd8] sm:$0xff]
        %v4719 = vld [vmem:[%s4690 + $0xe0] sm:$0xff]
        %v4720 = vld [vmem:[%s4690 + $0xe8] sm:$0xff]
        %v4721 = vld [vmem:[%s4690 + $0xf0] sm:$0xff]
        %v4722 = vld [vmem:[%s4690 + $0xf8] sm:$0xff]
        %v4740 = vunpack.c.l.b16 %v4641
        %v4741 = vunpack.c.h.b16 %v4641
        %v4742 = vunpack.c.l.b16 %v4642
        %v4743 = vunpack.c.h.b16 %v4642
        %v4744 = vunpack.c.l.b16 %v4643
        %v4745 = vunpack.c.h.b16 %v4643
        %v4746 = vunpack.c.l.b16 %v4644
        %v4747 = vunpack.c.h.b16 %v4644
        %v4748 = vunpack.c.l.b16 %v4645
        %v4749 = vunpack.c.h.b16 %v4645
        %v4750 = vunpack.c.l.b16 %v4646
        %v4751 = vunpack.c.h.b16 %v4646
        %v4752 = vunpack.c.l.b16 %v4647
        %v4753 = vunpack.c.h.b16 %v4647
        %v4754 = vunpack.c.l.b16 %v4648
        %v4755 = vunpack.c.h.b16 %v4648
        %v4756 = vunpack.c.l.b16 %v4649
        %v4757 = vunpack.c.h.b16 %v4649
        %v4758 = vunpack.c.l.b16 %v4650
        %v4759 = vunpack.c.h.b16 %v4650
        %v4760 = vunpack.c.l.b16 %v4651
        %v4761 = vunpack.c.h.b16 %v4651
        %v4762 = vunpack.c.l.b16 %v4652
        %v4763 = vunpack.c.h.b16 %v4652
        %v4764 = vunpack.c.l.b16 %v4653
        %v4765 = vunpack.c.h.b16 %v4653
        %v4766 = vunpack.c.l.b16 %v4654
        %v4767 = vunpack.c.h.b16 %v4654
        %v4768 = vunpack.c.l.b16 %v4655
        %v4769 = vunpack.c.h.b16 %v4655
        %v4770 = vunpack.c.l.b16 %v4656
        %v4771 = vunpack.c.h.b16 %v4656
        %v4772 = vunpack.c.l.b16 %v4657
        %v4773 = vunpack.c.h.b16 %v4657
        %v4774 = vpack.c.b16 %v4742, %v4740
        %v4775 = vpack.c.b16 %v4743, %v4741
        %v4776 = vpack.c.b16 %v4746, %v4744
        %v4777 = vpack.c.b16 %v4747, %v4745
        %v4778 = vpack.c.b16 %v4750, %v4748
        %v4779 = vpack.c.b16 %v4751, %v4749
        %v4780 = vpack.c.b16 %v4754, %v4752
        %v4781 = vpack.c.b16 %v4755, %v4753
        %v4782 = vpack.c.b16 %v4758, %v4756
        %v4783 = vpack.c.b16 %v4759, %v4757
        %v4784 = vpack.c.b16 %v4762, %v4760
        %v4785 = vpack.c.b16 %v4763, %v4761
        %v4786 = vpack.c.b16 %v4766, %v4764
        %v4787 = vpack.c.b16 %v4767, %v4765
        %v4788 = vpack.c.b16 %v4770, %v4768
        %v4789 = vpack.c.b16 %v4771, %v4769
        %v4790 = vpack.c.b16 %v4772, %v4772
        %v4791 = vpack.c.b16 %v4773, %v4773
        %vm4792 = vcmask 1046528
        %v4793 = vrot.slane %v4774, 1
        %v4794 = vrot.slane %v4776, 1
        %v4795 = vsel %vm4792, %v4793, %v4794
        %v4796 = vrot.slane %v4775, 1
        %v4797 = vrot.slane %v4777, 1
        %v4798 = vsel %vm4792, %v4796, %v4797
        %v4799 = vrot.slane %v4778, 1
        %v4800 = vsel %vm4792, %v4794, %v4799
        %v4801 = vrot.slane %v4779, 1
        %v4802 = vsel %vm4792, %v4797, %v4801
        %v4803 = vrot.slane %v4780, 1
        %v4804 = vsel %vm4792, %v4799, %v4803
        %v4805 = vrot.slane %v4781, 1
        %v4806 = vsel %vm4792, %v4801, %v4805
        %v4807 = vrot.slane %v4782, 1
        %v4808 = vsel %vm4792, %v4803, %v4807
        %v4809 = vrot.slane %v4783, 1
        %v4810 = vsel %vm4792, %v4805, %v4809
        %v4811 = vrot.slane %v4784, 1
        %v4812 = vsel %vm4792, %v4807, %v4811
        %v4813 = vrot.slane %v4785, 1
        %v4814 = vsel %vm4792, %v4809, %v4813
        %v4815 = vrot.slane %v4786, 1
        %v4816 = vsel %vm4792, %v4811, %v4815
        %v4817 = vrot.slane %v4787, 1
        %v4818 = vsel %vm4792, %v4813, %v4817
        %v4819 = vrot.slane %v4788, 1
        %v4820 = vsel %vm4792, %v4815, %v4819
        %v4821 = vrot.slane %v4789, 1
        %v4822 = vsel %vm4792, %v4817, %v4821
        %v4823 = vrot.slane %v4790, 1
        %v4824 = vsel %vm4792, %v4819, %v4823
        %v4825 = vrot.slane %v4791, 1
        %v4826 = vsel %vm4792, %v4821, %v4825
        %v4875 = vunpack.c.l.b16 %v4691
        %v4876 = vunpack.c.h.b16 %v4691
        %v4877 = vunpack.c.l.b16 %v4692
        %v4878 = vunpack.c.h.b16 %v4692
        %v4879 = vunpack.c.l.b16 %v4693
        %v4880 = vunpack.c.h.b16 %v4693
        %v4881 = vunpack.c.l.b16 %v4694
        %v4882 = vunpack.c.h.b16 %v4694
        %v4883 = vunpack.c.l.b16 %v4695
        %v4884 = vunpack.c.h.b16 %v4695
        %v4885 = vunpack.c.l.b16 %v4696
        %v4886 = vunpack.c.h.b16 %v4696
        %v4887 = vunpack.c.l.b16 %v4697
        %v4888 = vunpack.c.h.b16 %v4697
        %v4889 = vunpack.c.l.b16 %v4698
        %v4890 = vunpack.c.h.b16 %v4698
        %v4891 = vunpack.c.l.b16 %v4699
        %v4892 = vunpack.c.h.b16 %v4699
        %v4893 = vunpack.c.l.b16 %v4700
        %v4894 = vunpack.c.h.b16 %v4700
        %v4895 = vunpack.c.l.b16 %v4701
        %v4896 = vunpack.c.h.b16 %v4701
        %v4897 = vunpack.c.l.b16 %v4702
        %v4898 = vunpack.c.h.b16 %v4702
        %v4899 = vunpack.c.l.b16 %v4703
        %v4900 = vunpack.c.h.b16 %v4703
        %v4901 = vunpack.c.l.b16 %v4704
        %v4902 = vunpack.c.h.b16 %v4704
        %v4903 = vunpack.c.l.b16 %v4705
        %v4904 = vunpack.c.h.b16 %v4705
        %v4905 = vunpack.c.l.b16 %v4706
        %v4906 = vunpack.c.h.b16 %v4706
        %v4907 = vunpack.c.l.b16 %v4707
        %v4908 = vunpack.c.h.b16 %v4707
        %v4909 = vunpack.c.l.b16 %v4708
        %v4910 = vunpack.c.h.b16 %v4708
        %v4911 = vunpack.c.l.b16 %v4709
        %v4912 = vunpack.c.h.b16 %v4709
        %v4913 = vunpack.c.l.b16 %v4710
        %v4914 = vunpack.c.h.b16 %v4710
        %v4915 = vunpack.c.l.b16 %v4711
        %v4916 = vunpack.c.h.b16 %v4711
        %v4917 = vunpack.c.l.b16 %v4712
        %v4918 = vunpack.c.h.b16 %v4712
        %v4919 = vunpack.c.l.b16 %v4713
        %v4920 = vunpack.c.h.b16 %v4713
        %v4921 = vunpack.c.l.b16 %v4714
        %v4922 = vunpack.c.h.b16 %v4714
        %v4923 = vunpack.c.l.b16 %v4715
        %v4924 = vunpack.c.h.b16 %v4715
        %v4925 = vunpack.c.l.b16 %v4716
        %v4926 = vunpack.c.h.b16 %v4716
        %v4927 = vunpack.c.l.b16 %v4717
        %v4928 = vunpack.c.h.b16 %v4717
        %v4929 = vunpack.c.l.b16 %v4718
        %v4930 = vunpack.c.h.b16 %v4718
        %v4931 = vunpack.c.l.b16 %v4719
        %v4932 = vunpack.c.h.b16 %v4719
        %v4933 = vunpack.c.l.b16 %v4720
        %v4934 = vunpack.c.h.b16 %v4720
        %v4935 = vunpack.c.l.b16 %v4721
        %v4936 = vunpack.c.h.b16 %v4721
        %v4937 = vunpack.c.l.b16 %v4722
        %v4938 = vunpack.c.h.b16 %v4722
        %v4939 = vpack.c.b16 %v4877, %v4875
        %v4940 = vpack.c.b16 %v4878, %v4876
        %v4941 = vpack.c.b16 %v4881, %v4879
        %v4942 = vpack.c.b16 %v4882, %v4880
        %v4943 = vpack.c.b16 %v4885, %v4883
        %v4944 = vpack.c.b16 %v4886, %v4884
        %v4945 = vpack.c.b16 %v4889, %v4887
        %v4946 = vpack.c.b16 %v4890, %v4888
        %v4947 = vpack.c.b16 %v4893, %v4891
        %v4948 = vpack.c.b16 %v4894, %v4892
        %v4949 = vpack.c.b16 %v4897, %v4895
        %v4950 = vpack.c.b16 %v4898, %v4896
        %v4951 = vpack.c.b16 %v4901, %v4899
        %v4952 = vpack.c.b16 %v4902, %v4900
        %v4953 = vpack.c.b16 %v4905, %v4903
        %v4954 = vpack.c.b16 %v4906, %v4904
        %v4955 = vpack.c.b16 %v4909, %v4907
        %v4956 = vpack.c.b16 %v4910, %v4908
        %v4957 = vpack.c.b16 %v4913, %v4911
        %v4958 = vpack.c.b16 %v4914, %v4912
        %v4959 = vpack.c.b16 %v4917, %v4915
        %v4960 = vpack.c.b16 %v4918, %v4916
        %v4961 = vpack.c.b16 %v4921, %v4919
        %v4962 = vpack.c.b16 %v4922, %v4920
        %v4963 = vpack.c.b16 %v4925, %v4923
        %v4964 = vpack.c.b16 %v4926, %v4924
        %v4965 = vpack.c.b16 %v4929, %v4927
        %v4966 = vpack.c.b16 %v4930, %v4928
        %v4967 = vpack.c.b16 %v4933, %v4931
        %v4968 = vpack.c.b16 %v4934, %v4932
        %v4969 = vpack.c.b16 %v4937, %v4935
        %v4970 = vpack.c.b16 %v4938, %v4936
        %5003 = vmatprep.subr.bf16.mxu0 %v4940
        %5004 = vmatpush1.bf16.msra.mxu0 %v4939
        %5005 = vmatprep.subr.bf16.mxu0 %v4942
        %5006 = vmatpush1.bf16.msra.mxu0 %v4941
        %5007 = vmatprep.subr.bf16.mxu0 %v4944
        %5008 = vmatpush1.bf16.msra.mxu0 %v4943
        %5009 = vmatprep.subr.bf16.mxu0 %v4946
        %5010 = vmatpush1.bf16.msra.mxu0 %v4945
        %5011 = vmatprep.subr.bf16.mxu0 %v4948
        %5012 = vmatpush1.bf16.msra.mxu0 %v4947
        %5013 = vmatprep.subr.bf16.mxu0 %v4950
        %5014 = vmatpush1.bf16.msra.mxu0 %v4949
        %5015 = vmatprep.subr.bf16.mxu0 %v4952
        %5016 = vmatpush1.bf16.msra.mxu0 %v4951
        %5017 = vmatprep.subr.bf16.mxu0 %v4954
        %5018 = vmatpush1.bf16.msra.mxu0 %v4953
        %5019 = vmatprep.subr.bf16.mxu0 %v4956
        %5020 = vmatpush1.bf16.msra.mxu0 %v4955
        %5021 = vmatprep.subr.bf16.mxu0 %v4958
        %5022 = vmatpush1.bf16.msra.mxu0 %v4957
        %5023 = vmatprep.subr.bf16.mxu0 %v4960
        %5024 = vmatpush1.bf16.msra.mxu0 %v4959
        %5025 = vmatprep.subr.bf16.mxu0 %v4962
        %5026 = vmatpush1.bf16.msra.mxu0 %v4961
        %5027 = vmatprep.subr.bf16.mxu0 %v4964
        %5028 = vmatpush1.bf16.msra.mxu0 %v4963
        %5029 = vmatprep.subr.bf16.mxu0 %v4966
        %5030 = vmatpush1.bf16.msra.mxu0 %v4965
        %5031 = vmatprep.subr.bf16.mxu0 %v4968
        %5032 = vmatpush1.bf16.msra.mxu0 %v4967
        %5033 = vmatprep.subr.bf16.mxu0 %v4970
        %5034 = vmatpush1.bf16.msra.mxu0 %v4969
        %5035 = vmatprep.mubr.bf16.mxu0 %v4798
        %5036 = vmatmul.mubr.bf16.gmra.mrb[0].mxu0 %v4795
        %v5037 = vpop.f32.mrb[0].mxu0
        %v5038 = vadd.f32 0.0, %v5037
        %v5039 = vpop.f32.mrb[0].mxu0
        %v5040 = vadd.f32 0.0, %v5039
        %v5041 = vpop.f32.mrb[0].mxu0
        %v5042 = vadd.f32 0.0, %v5041
        %v5043 = vpop.f32.mrb[0].mxu0
        %v5044 = vadd.f32 0.0, %v5043
        %5045 = vmatprep.mubr.bf16.mxu0 %v4802
        %5046 = vmatmul.mubr.bf16.gmra.mrb[0].mxu0 %v4800
        %v5047 = vpop.f32.mrb[0].mxu0
        %v5048 = vadd.f32 0.0, %v5047
        %v5049 = vpop.f32.mrb[0].mxu0
        %v5050 = vadd.f32 0.0, %v5049
        %v5051 = vpop.f32.mrb[0].mxu0
        %v5052 = vadd.f32 0.0, %v5051
        %v5053 = vpop.f32.mrb[0].mxu0
        %v5054 = vadd.f32 0.0, %v5053
        %5055 = vmatprep.mubr.bf16.mxu0 %v4806
        %5056 = vmatmul.mubr.bf16.gmra.mrb[0].mxu0 %v4804
        %v5057 = vpop.f32.mrb[0].mxu0
        %v5058 = vadd.f32 0.0, %v5057
        %v5059 = vpop.f32.mrb[0].mxu0
        %v5060 = vadd.f32 0.0, %v5059
        %v5061 = vpop.f32.mrb[0].mxu0
        %v5062 = vadd.f32 0.0, %v5061
        %v5063 = vpop.f32.mrb[0].mxu0
        %v5064 = vadd.f32 0.0, %v5063
        %5065 = vmatprep.mubr.bf16.mxu0 %v4810
        %5066 = vmatmul.mubr.bf16.gmra.mrb[0].mxu0 %v4808
        %v5067 = vpop.f32.mrb[0].mxu0
        %v5068 = vadd.f32 0.0, %v5067
        %v5069 = vpop.f32.mrb[0].mxu0
        %v5070 = vadd.f32 0.0, %v5069
        %v5071 = vpop.f32.mrb[0].mxu0
        %v5072 = vadd.f32 0.0, %v5071
        %v5073 = vpop.f32.mrb[0].mxu0
        %v5074 = vadd.f32 0.0, %v5073
        %5075 = vmatprep.mubr.bf16.mxu0 %v4814
        %5076 = vmatmul.mubr.bf16.gmra.mrb[0].mxu0 %v4812
        %v5077 = vpop.f32.mrb[0].mxu0
        %v5078 = vadd.f32 0.0, %v5077
        %v5079 = vpop.f32.mrb[0].mxu0
        %v5080 = vadd.f32 0.0, %v5079
        %v5081 = vpop.f32.mrb[0].mxu0
        %v5082 = vadd.f32 0.0, %v5081
        %v5083 = vpop.f32.mrb[0].mxu0
        %v5084 = vadd.f32 0.0, %v5083
        %5085 = vmatprep.mubr.bf16.mxu0 %v4818
        %5086 = vmatmul.mubr.bf16.gmra.mrb[0].mxu0 %v4816
        %v5087 = vpop.f32.mrb[0].mxu0
        %v5088 = vadd.f32 0.0, %v5087
        %v5089 = vpop.f32.mrb[0].mxu0
        %v5090 = vadd.f32 0.0, %v5089
        %v5091 = vpop.f32.mrb[0].mxu0
        %v5092 = vadd.f32 0.0, %v5091
        %v5093 = vpop.f32.mrb[0].mxu0
        %v5094 = vadd.f32 0.0, %v5093
        %5095 = vmatprep.mubr.bf16.mxu0 %v4822
        %5096 = vmatmul.mubr.bf16.gmra.mrb[0].mxu0 %v4820
        %v5097 = vpop.f32.mrb[0].mxu0
        %v5098 = vadd.f32 0.0, %v5097
        %v5099 = vpop.f32.mrb[0].mxu0
        %v5100 = vadd.f32 0.0, %v5099
        %v5101 = vpop.f32.mrb[0].mxu0
        %v5102 = vadd.f32 0.0, %v5101
        %v5103 = vpop.f32.mrb[0].mxu0
        %v5104 = vadd.f32 0.0, %v5103
        %5105 = vmatprep.mubr.bf16.mxu0 %v4826
        %5106 = vmatmul.mubr.bf16.gmra.mrb[0].mxu0 %v4824
        %v5107 = vpop.f32.mrb[0].mxu0
        %v5108 = vadd.f32 0.0, %v5107
        %v5109 = vpop.f32.mrb[0].mxu0
        %v5110 = vadd.f32 0.0, %v5109
        %v5111 = vpop.f32.mrb[0].mxu0
        %v5112 = vadd.f32 0.0, %v5111
        %v5113 = vpop.f32.mrb[0].mxu0
        %v5114 = vadd.f32 0.0, %v5113
        %5115 = vdwg.mxu0
        %v5116 = vadd.f32 %v4658, %v5038
        %v5117 = vadd.f32 %v4659, %v5040
        %v5118 = vadd.f32 %v4660, %v5042
        %v5119 = vadd.f32 %v4661, %v5044
        %v5120 = vadd.f32 %v4662, %v5048
        %v5121 = vadd.f32 %v4663, %v5050
        %v5122 = vadd.f32 %v4664, %v5052
        %v5123 = vadd.f32 %v4665, %v5054
        %v5124 = vadd.f32 %v4666, %v5058
        %v5125 = vadd.f32 %v4667, %v5060
        %v5126 = vadd.f32 %v4668, %v5062
        %v5127 = vadd.f32 %v4669, %v5064
        %v5128 = vadd.f32 %v4670, %v5068
        %v5129 = vadd.f32 %v4671, %v5070
        %v5130 = vadd.f32 %v4672, %v5072
        %v5131 = vadd.f32 %v4673, %v5074
        %v5132 = vadd.f32 %v4674, %v5078
        %v5133 = vadd.f32 %v4675, %v5080
        %v5134 = vadd.f32 %v4676, %v5082
        %v5135 = vadd.f32 %v4677, %v5084
        %v5136 = vadd.f32 %v4678, %v5088
        %v5137 = vadd.f32 %v4679, %v5090
        %v5138 = vadd.f32 %v4680, %v5092
        %v5139 = vadd.f32 %v4681, %v5094
        %v5140 = vadd.f32 %v4682, %v5098
        %v5141 = vadd.f32 %v4683, %v5100
        %v5142 = vadd.f32 %v4684, %v5102
        %v5143 = vadd.f32 %v4685, %v5104
        %v5144 = vadd.f32 %v4686, %v5108
        %v5145 = vadd.f32 %v4687, %v5110
        %v5146 = vadd.f32 %v4688, %v5112
        %v5147 = vadd.f32 %v4689, %v5114
        %5148 = vst [vmem:[#allocation2] sm:$0xff] %v5116
        %5149 = vst [vmem:[#allocation2 + $0x8] sm:$0xff] %v5117
        %5150 = vst [vmem:[#allocation2 + $0x10] sm:$0xff] %v5118
        %5151 = vst [vmem:[#allocation2 + $0x18] sm:$0xff] %v5119
        %5152 = vst [vmem:[#allocation2 + $0x20] sm:$0xff] %v5120
        %5153 = vst [vmem:[#allocation2 + $0x28] sm:$0xff] %v5121
        %5154 = vst [vmem:[#allocation2 + $0x30] sm:$0xff] %v5122
        %5155 = vst [vmem:[#allocation2 + $0x38] sm:$0xff] %v5123
        %5156 = vst [vmem:[#allocation2 + $0x40] sm:$0xff] %v5124
        %5157 = vst [vmem:[#allocation2 + $0x48] sm:$0xff] %v5125
        %5158 = vst [vmem:[#allocation2 + $0x50] sm:$0xff] %v5126
        %5159 = vst [vmem:[#allocation2 + $0x58] sm:$0xff] %v5127
        %5160 = vst [vmem:[#allocation2 + $0x60] sm:$0xff] %v5128
        %5161 = vst [vmem:[#allocation2 + $0x68] sm:$0xff] %v5129
        %5162 = vst [vmem:[#allocation2 + $0x70] sm:$0xff] %v5130
        %5163 = vst [vmem:[#allocation2 + $0x78] sm:$0xff] %v5131
        %5164 = vst [vmem:[#allocation2 + $0x80] sm:$0xff] %v5132
        %5165 = vst [vmem:[#allocation2 + $0x88] sm:$0xff] %v5133
        %5166 = vst [vmem:[#allocation2 + $0x90] sm:$0xff] %v5134
        %5167 = vst [vmem:[#allocation2 + $0x98] sm:$0xff] %v5135
        %5168 = vst [vmem:[#allocation2 + $0xa0] sm:$0xff] %v5136
        %5169 = vst [vmem:[#allocation2 + $0xa8] sm:$0xff] %v5137
        %5170 = vst [vmem:[#allocation2 + $0xb0] sm:$0xff] %v5138
        %5171 = vst [vmem:[#allocation2 + $0xb8] sm:$0xff] %v5139
        %5172 = vst [vmem:[#allocation2 + $0xc0] sm:$0xff] %v5140
        %5173 = vst [vmem:[#allocation2 + $0xc8] sm:$0xff] %v5141
        %5174 = vst [vmem:[#allocation2 + $0xd0] sm:$0xff] %v5142
        %5175 = vst [vmem:[#allocation2 + $0xd8] sm:$0xff] %v5143
        %5176 = vst [vmem:[#allocation2 + $0xe0] sm:$0xff] %v5144
        %5177 = vst [vmem:[#allocation2 + $0xe8] sm:$0xff] %v5145
        %5178 = vst [vmem:[#allocation2 + $0xf0] sm:$0xff] %v5146
        %5179 = vst [vmem:[#allocation2 + $0xf8] sm:$0xff] %v5147
        %v5180 = vld [vmem:[%s4000] sm:$0xff]
        %v5181 = vld [vmem:[%s4000 + $0x8] sm:$0xff]
        %v5182 = vld [vmem:[%s4000 + $0x10] sm:$0xff]
        %v5183 = vld [vmem:[%s4000 + $0x18] sm:$0xff]
        %v5184 = vld [vmem:[%s4000 + $0x20] sm:$0xff]
        %v5185 = vld [vmem:[%s4000 + $0x28] sm:$0xff]
        %v5186 = vld [vmem:[%s4000 + $0x30] sm:$0xff]
        %v5187 = vld [vmem:[%s4000 + $0x38] sm:$0xff]
        %v5188 = vld [vmem:[%s4000 + $0x40] sm:$0xff]
        %v5189 = vld [vmem:[%s4000 + $0x48] sm:$0xff]
        %v5190 = vld [vmem:[%s4000 + $0x50] sm:$0xff]
        %v5191 = vld [vmem:[%s4000 + $0x58] sm:$0xff]
        %v5192 = vld [vmem:[%s4000 + $0x60] sm:$0xff]
        %v5193 = vld [vmem:[%s4000 + $0x68] sm:$0xff]
        %v5194 = vld [vmem:[%s4000 + $0x70] sm:$0xff]
        %v5195 = vld [vmem:[%s4000 + $0x78] sm:$0xff]
        %v5196 = vld [vmem:[%s4000 + $0x80] sm:$0xff]
        %v5197 = vld [vmem:[#allocation2] sm:$0xff]
        %v5198 = vld [vmem:[#allocation2 + $0x8] sm:$0xff]
        %v5199 = vld [vmem:[#allocation2 + $0x10] sm:$0xff]
        %v5200 = vld [vmem:[#allocation2 + $0x18] sm:$0xff]
        %v5201 = vld [vmem:[#allocation2 + $0x20] sm:$0xff]
        %v5202 = vld [vmem:[#allocation2 + $0x28] sm:$0xff]
        %v5203 = vld [vmem:[#allocation2 + $0x30] sm:$0xff]
        %v5204 = vld [vmem:[#allocation2 + $0x38] sm:$0xff]
        %v5205 = vld [vmem:[#allocation2 + $0x40] sm:$0xff]
        %v5206 = vld [vmem:[#allocation2 + $0x48] sm:$0xff]
        %v5207 = vld [vmem:[#allocation2 + $0x50] sm:$0xff]
        %v5208 = vld [vmem:[#allocation2 + $0x58] sm:$0xff]
        %v5209 = vld [vmem:[#allocation2 + $0x60] sm:$0xff]
        %v5210 = vld [vmem:[#allocation2 + $0x68] sm:$0xff]
        %v5211 = vld [vmem:[#allocation2 + $0x70] sm:$0xff]
        %v5212 = vld [vmem:[#allocation2 + $0x78] sm:$0xff]
        %v5213 = vld [vmem:[#allocation2 + $0x80] sm:$0xff]
        %v5214 = vld [vmem:[#allocation2 + $0x88] sm:$0xff]
        %v5215 = vld [vmem:[#allocation2 + $0x90] sm:$0xff]
        %v5216 = vld [vmem:[#allocation2 + $0x98] sm:$0xff]
        %v5217 = vld [vmem:[#allocation2 + $0xa0] sm:$0xff]
        %v5218 = vld [vmem:[#allocation2 + $0xa8] sm:$0xff]
        %v5219 = vld [vmem:[#allocation2 + $0xb0] sm:$0xff]
        %v5220 = vld [vmem:[#allocation2 + $0xb8] sm:$0xff]
        %v5221 = vld [vmem:[#allocation2 + $0xc0] sm:$0xff]
        %v5222 = vld [vmem:[#allocation2 + $0xc8] sm:$0xff]
        %v5223 = vld [vmem:[#allocation2 + $0xd0] sm:$0xff]
        %v5224 = vld [vmem:[#allocation2 + $0xd8] sm:$0xff]
        %v5225 = vld [vmem:[#allocation2 + $0xe0] sm:$0xff]
        %v5226 = vld [vmem:[#allocation2 + $0xe8] sm:$0xff]
        %v5227 = vld [vmem:[#allocation2 + $0xf0] sm:$0xff]
        %v5228 = vld [vmem:[#allocation2 + $0xf8] sm:$0xff]
        %s5229 = scalar_lea.vmem [#allocation6], 2048
        %v5230 = vld [vmem:[%s5229] sm:$0xff]
        %v5231 = vld [vmem:[%s5229 + $0x8] sm:$0xff]
        %v5232 = vld [vmem:[%s5229 + $0x10] sm:$0xff]
        %v5233 = vld [vmem:[%s5229 + $0x18] sm:$0xff]
        %v5234 = vld [vmem:[%s5229 + $0x20] sm:$0xff]
        %v5235 = vld [vmem:[%s5229 + $0x28] sm:$0xff]
        %v5236 = vld [vmem:[%s5229 + $0x30] sm:$0xff]
        %v5237 = vld [vmem:[%s5229 + $0x38] sm:$0xff]
        %v5238 = vld [vmem:[%s5229 + $0x40] sm:$0xff]
        %v5239 = vld [vmem:[%s5229 + $0x48] sm:$0xff]
        %v5240 = vld [vmem:[%s5229 + $0x50] sm:$0xff]
        %v5241 = vld [vmem:[%s5229 + $0x58] sm:$0xff]
        %v5242 = vld [vmem:[%s5229 + $0x60] sm:$0xff]
        %v5243 = vld [vmem:[%s5229 + $0x68] sm:$0xff]
        %v5244 = vld [vmem:[%s5229 + $0x70] sm:$0xff]
        %v5245 = vld [vmem:[%s5229 + $0x78] sm:$0xff]
        %v5246 = vld [vmem:[%s5229 + $0x80] sm:$0xff]
        %v5247 = vld [vmem:[%s5229 + $0x88] sm:$0xff]
        %v5248 = vld [vmem:[%s5229 + $0x90] sm:$0xff]
        %v5249 = vld [vmem:[%s5229 + $0x98] sm:$0xff]
        %v5250 = vld [vmem:[%s5229 + $0xa0] sm:$0xff]
        %v5251 = vld [vmem:[%s5229 + $0xa8] sm:$0xff]
        %v5252 = vld [vmem:[%s5229 + $0xb0] sm:$0xff]
        %v5253 = vld [vmem:[%s5229 + $0xb8] sm:$0xff]
        %v5254 = vld [vmem:[%s5229 + $0xc0] sm:$0xff]
        %v5255 = vld [vmem:[%s5229 + $0xc8] sm:$0xff]
        %v5256 = vld [vmem:[%s5229 + $0xd0] sm:$0xff]
        %v5257 = vld [vmem:[%s5229 + $0xd8] sm:$0xff]
        %v5258 = vld [vmem:[%s5229 + $0xe0] sm:$0xff]
        %v5259 = vld [vmem:[%s5229 + $0xe8] sm:$0xff]
        %v5260 = vld [vmem:[%s5229 + $0xf0] sm:$0xff]
        %v5261 = vld [vmem:[%s5229 + $0xf8] sm:$0xff]
        %v5279 = vunpack.c.l.b16 %v5180
        %v5280 = vunpack.c.h.b16 %v5180
        %v5281 = vunpack.c.l.b16 %v5181
        %v5282 = vunpack.c.h.b16 %v5181
        %v5283 = vunpack.c.l.b16 %v5182
        %v5284 = vunpack.c.h.b16 %v5182
        %v5285 = vunpack.c.l.b16 %v5183
        %v5286 = vunpack.c.h.b16 %v5183
        %v5287 = vunpack.c.l.b16 %v5184
        %v5288 = vunpack.c.h.b16 %v5184
        %v5289 = vunpack.c.l.b16 %v5185
        %v5290 = vunpack.c.h.b16 %v5185
        %v5291 = vunpack.c.l.b16 %v5186
        %v5292 = vunpack.c.h.b16 %v5186
        %v5293 = vunpack.c.l.b16 %v5187
        %v5294 = vunpack.c.h.b16 %v5187
        %v5295 = vunpack.c.l.b16 %v5188
        %v5296 = vunpack.c.h.b16 %v5188
        %v5297 = vunpack.c.l.b16 %v5189
        %v5298 = vunpack.c.h.b16 %v5189
        %v5299 = vunpack.c.l.b16 %v5190
        %v5300 = vunpack.c.h.b16 %v5190
        %v5301 = vunpack.c.l.b16 %v5191
        %v5302 = vunpack.c.h.b16 %v5191
        %v5303 = vunpack.c.l.b16 %v5192
        %v5304 = vunpack.c.h.b16 %v5192
        %v5305 = vunpack.c.l.b16 %v5193
        %v5306 = vunpack.c.h.b16 %v5193
        %v5307 = vunpack.c.l.b16 %v5194
        %v5308 = vunpack.c.h.b16 %v5194
        %v5309 = vunpack.c.l.b16 %v5195
        %v5310 = vunpack.c.h.b16 %v5195
        %v5311 = vunpack.c.l.b16 %v5196
        %v5312 = vunpack.c.h.b16 %v5196
        %v5313 = vpack.c.b16 %v5281, %v5279
        %v5314 = vpack.c.b16 %v5282, %v5280
        %v5315 = vpack.c.b16 %v5285, %v5283
        %v5316 = vpack.c.b16 %v5286, %v5284
        %v5317 = vpack.c.b16 %v5289, %v5287
        %v5318 = vpack.c.b16 %v5290, %v5288
        %v5319 = vpack.c.b16 %v5293, %v5291
        %v5320 = vpack.c.b16 %v5294, %v5292
        %v5321 = vpack.c.b16 %v5297, %v5295
        %v5322 = vpack.c.b16 %v5298, %v5296
        %v5323 = vpack.c.b16 %v5301, %v5299
        %v5324 = vpack.c.b16 %v5302, %v5300
        %v5325 = vpack.c.b16 %v5305, %v5303
        %v5326 = vpack.c.b16 %v5306, %v5304
        %v5327 = vpack.c.b16 %v5309, %v5307
        %v5328 = vpack.c.b16 %v5310, %v5308
        %v5329 = vpack.c.b16 %v5311, %v5311
        %v5330 = vpack.c.b16 %v5312, %v5312
        %vm5331 = vsmask.f32 6400
        %v5333 = vshrl.u32 %v5313, 16
        %v5335 = vrot.slane %v5333, 1
        %v5336 = vshll.u32 %v5313, 16
        %v5338 = vrot.slane %v5336, 2
        %v5339 = vor.u32 %v5335, %v5338
        %v5341 = vshrl.u32 %v5315, 16
        %v5343 = vrot.slane %v5341, 1
        %v5344 = vshll.u32 %v5315, 16
        %v5346 = vrot.slane %v5344, 2
        %v5347 = vor.u32 %v5343, %v5346
        %v5348 = vsel %vm5331, %v5339, %v5347
        %v5350 = vshrl.u32 %v5314, 16
        %v5352 = vrot.slane %v5350, 1
        %v5353 = vshll.u32 %v5314, 16
        %v5355 = vrot.slane %v5353, 2
        %v5356 = vor.u32 %v5352, %v5355
        %v5358 = vshrl.u32 %v5316, 16
        %v5360 = vrot.slane %v5358, 1
        %v5361 = vshll.u32 %v5316, 16
        %v5363 = vrot.slane %v5361, 2
        %v5364 = vor.u32 %v5360, %v5363
        %v5365 = vsel %vm5331, %v5356, %v5364
        %v5367 = vshrl.u32 %v5317, 16
        %v5369 = vrot.slane %v5367, 1
        %v5370 = vshll.u32 %v5317, 16
        %v5372 = vrot.slane %v5370, 2
        %v5373 = vor.u32 %v5369, %v5372
        %v5374 = vsel %vm5331, %v5347, %v5373
        %v5376 = vshrl.u32 %v5318, 16
        %v5378 = vrot.slane %v5376, 1
        %v5379 = vshll.u32 %v5318, 16
        %v5381 = vrot.slane %v5379, 2
        %v5382 = vor.u32 %v5378, %v5381
        %v5383 = vsel %vm5331, %v5364, %v5382
        %v5385 = vshrl.u32 %v5319, 16
        %v5387 = vrot.slane %v5385, 1
        %v5388 = vshll.u32 %v5319, 16
        %v5390 = vrot.slane %v5388, 2
        %v5391 = vor.u32 %v5387, %v5390
        %v5392 = vsel %vm5331, %v5373, %v5391
        %v5394 = vshrl.u32 %v5320, 16
        %v5396 = vrot.slane %v5394, 1
        %v5397 = vshll.u32 %v5320, 16
        %v5399 = vrot.slane %v5397, 2
        %v5400 = vor.u32 %v5396, %v5399
        %v5401 = vsel %vm5331, %v5382, %v5400
        %v5403 = vshrl.u32 %v5321, 16
        %v5405 = vrot.slane %v5403, 1
        %v5406 = vshll.u32 %v5321, 16
        %v5408 = vrot.slane %v5406, 2
        %v5409 = vor.u32 %v5405, %v5408
        %v5410 = vsel %vm5331, %v5391, %v5409
        %v5412 = vshrl.u32 %v5322, 16
        %v5414 = vrot.slane %v5412, 1
        %v5415 = vshll.u32 %v5322, 16
        %v5417 = vrot.slane %v5415, 2
        %v5418 = vor.u32 %v5414, %v5417
        %v5419 = vsel %vm5331, %v5400, %v5418
        %v5421 = vshrl.u32 %v5323, 16
        %v5423 = vrot.slane %v5421, 1
        %v5424 = vshll.u32 %v5323, 16
        %v5426 = vrot.slane %v5424, 2
        %v5427 = vor.u32 %v5423, %v5426
        %v5428 = vsel %vm5331, %v5409, %v5427
        %v5430 = vshrl.u32 %v5324, 16
        %v5432 = vrot.slane %v5430, 1
        %v5433 = vshll.u32 %v5324, 16
        %v5435 = vrot.slane %v5433, 2
        %v5436 = vor.u32 %v5432, %v5435
        %v5437 = vsel %vm5331, %v5418, %v5436
        %v5439 = vshrl.u32 %v5325, 16
        %v5441 = vrot.slane %v5439, 1
        %v5442 = vshll.u32 %v5325, 16
        %v5444 = vrot.slane %v5442, 2
        %v5445 = vor.u32 %v5441, %v5444
        %v5446 = vsel %vm5331, %v5427, %v5445
        %v5448 = vshrl.u32 %v5326, 16
        %v5450 = vrot.slane %v5448, 1
        %v5451 = vshll.u32 %v5326, 16
        %v5453 = vrot.slane %v5451, 2
        %v5454 = vor.u32 %v5450, %v5453
        %v5455 = vsel %vm5331, %v5436, %v5454
        %v5457 = vshrl.u32 %v5327, 16
        %v5459 = vrot.slane %v5457, 1
        %v5460 = vshll.u32 %v5327, 16
        %v5462 = vrot.slane %v5460, 2
        %v5463 = vor.u32 %v5459, %v5462
        %v5464 = vsel %vm5331, %v5445, %v5463
        %v5466 = vshrl.u32 %v5328, 16
        %v5468 = vrot.slane %v5466, 1
        %v5469 = vshll.u32 %v5328, 16
        %v5471 = vrot.slane %v5469, 2
        %v5472 = vor.u32 %v5468, %v5471
        %v5473 = vsel %vm5331, %v5454, %v5472
        %v5475 = vshrl.u32 %v5329, 16
        %v5477 = vrot.slane %v5475, 1
        %v5478 = vshll.u32 %v5329, 16
        %v5480 = vrot.slane %v5478, 2
        %v5481 = vor.u32 %v5477, %v5480
        %v5482 = vsel %vm5331, %v5463, %v5481
        %v5484 = vshrl.u32 %v5330, 16
        %v5486 = vrot.slane %v5484, 1
        %v5487 = vshll.u32 %v5330, 16
        %v5489 = vrot.slane %v5487, 2
        %v5490 = vor.u32 %v5486, %v5489
        %v5491 = vsel %vm5331, %v5472, %v5490
        %v5540 = vunpack.c.l.b16 %v5230
        %v5541 = vunpack.c.h.b16 %v5230
        %v5542 = vunpack.c.l.b16 %v5231
        %v5543 = vunpack.c.h.b16 %v5231
        %v5544 = vunpack.c.l.b16 %v5232
        %v5545 = vunpack.c.h.b16 %v5232
        %v5546 = vunpack.c.l.b16 %v5233
        %v5547 = vunpack.c.h.b16 %v5233
        %v5548 = vunpack.c.l.b16 %v5234
        %v5549 = vunpack.c.h.b16 %v5234
        %v5550 = vunpack.c.l.b16 %v5235
        %v5551 = vunpack.c.h.b16 %v5235
        %v5552 = vunpack.c.l.b16 %v5236
        %v5553 = vunpack.c.h.b16 %v5236
        %v5554 = vunpack.c.l.b16 %v5237
        %v5555 = vunpack.c.h.b16 %v5237
        %v5556 = vunpack.c.l.b16 %v5238
        %v5557 = vunpack.c.h.b16 %v5238
        %v5558 = vunpack.c.l.b16 %v5239
        %v5559 = vunpack.c.h.b16 %v5239
        %v5560 = vunpack.c.l.b16 %v5240
        %v5561 = vunpack.c.h.b16 %v5240
        %v5562 = vunpack.c.l.b16 %v5241
        %v5563 = vunpack.c.h.b16 %v5241
        %v5564 = vunpack.c.l.b16 %v5242
        %v5565 = vunpack.c.h.b16 %v5242
        %v5566 = vunpack.c.l.b16 %v5243
        %v5567 = vunpack.c.h.b16 %v5243
        %v5568 = vunpack.c.l.b16 %v5244
        %v5569 = vunpack.c.h.b16 %v5244
        %v5570 = vunpack.c.l.b16 %v5245
        %v5571 = vunpack.c.h.b16 %v5245
        %v5572 = vunpack.c.l.b16 %v5246
        %v5573 = vunpack.c.h.b16 %v5246
        %v5574 = vunpack.c.l.b16 %v5247
        %v5575 = vunpack.c.h.b16 %v5247
        %v5576 = vunpack.c.l.b16 %v5248
        %v5577 = vunpack.c.h.b16 %v5248
        %v5578 = vunpack.c.l.b16 %v5249
        %v5579 = vunpack.c.h.b16 %v5249
        %v5580 = vunpack.c.l.b16 %v5250
        %v5581 = vunpack.c.h.b16 %v5250
        %v5582 = vunpack.c.l.b16 %v5251
        %v5583 = vunpack.c.h.b16 %v5251
        %v5584 = vunpack.c.l.b16 %v5252
        %v5585 = vunpack.c.h.b16 %v5252
        %v5586 = vunpack.c.l.b16 %v5253
        %v5587 = vunpack.c.h.b16 %v5253
        %v5588 = vunpack.c.l.b16 %v5254
        %v5589 = vunpack.c.h.b16 %v5254
        %v5590 = vunpack.c.l.b16 %v5255
        %v5591 = vunpack.c.h.b16 %v5255
        %v5592 = vunpack.c.l.b16 %v5256
        %v5593 = vunpack.c.h.b16 %v5256
        %v5594 = vunpack.c.l.b16 %v5257
        %v5595 = vunpack.c.h.b16 %v5257
        %v5596 = vunpack.c.l.b16 %v5258
        %v5597 = vunpack.c.h.b16 %v5258
        %v5598 = vunpack.c.l.b16 %v5259
        %v5599 = vunpack.c.h.b16 %v5259
        %v5600 = vunpack.c.l.b16 %v5260
        %v5601 = vunpack.c.h.b16 %v5260
        %v5602 = vunpack.c.l.b16 %v5261
        %v5603 = vunpack.c.h.b16 %v5261
        %v5604 = vpack.c.b16 %v5542, %v5540
        %v5605 = vpack.c.b16 %v5543, %v5541
        %v5606 = vpack.c.b16 %v5546, %v5544
        %v5607 = vpack.c.b16 %v5547, %v5545
        %v5608 = vpack.c.b16 %v5550, %v5548
        %v5609 = vpack.c.b16 %v5551, %v5549
        %v5610 = vpack.c.b16 %v5554, %v5552
        %v5611 = vpack.c.b16 %v5555, %v5553
        %v5612 = vpack.c.b16 %v5558, %v5556
        %v5613 = vpack.c.b16 %v5559, %v5557
        %v5614 = vpack.c.b16 %v5562, %v5560
        %v5615 = vpack.c.b16 %v5563, %v5561
        %v5616 = vpack.c.b16 %v5566, %v5564
        %v5617 = vpack.c.b16 %v5567, %v5565
        %v5618 = vpack.c.b16 %v5570, %v5568
        %v5619 = vpack.c.b16 %v5571, %v5569
        %v5620 = vpack.c.b16 %v5574, %v5572
        %v5621 = vpack.c.b16 %v5575, %v5573
        %v5622 = vpack.c.b16 %v5578, %v5576
        %v5623 = vpack.c.b16 %v5579, %v5577
        %v5624 = vpack.c.b16 %v5582, %v5580
        %v5625 = vpack.c.b16 %v5583, %v5581
        %v5626 = vpack.c.b16 %v5586, %v5584
        %v5627 = vpack.c.b16 %v5587, %v5585
        %v5628 = vpack.c.b16 %v5590, %v5588
        %v5629 = vpack.c.b16 %v5591, %v5589
        %v5630 = vpack.c.b16 %v5594, %v5592
        %v5631 = vpack.c.b16 %v5595, %v5593
        %v5632 = vpack.c.b16 %v5598, %v5596
        %v5633 = vpack.c.b16 %v5599, %v5597
        %v5634 = vpack.c.b16 %v5602, %v5600
        %v5635 = vpack.c.b16 %v5603, %v5601
        %5668 = vmatprep.subr.bf16.mxu0 %v5605
        %5669 = vmatpush1.bf16.msra.mxu0 %v5604
        %5670 = vmatprep.subr.bf16.mxu0 %v5607
        %5671 = vmatpush1.bf16.msra.mxu0 %v5606
        %5672 = vmatprep.subr.bf16.mxu0 %v5609
        %5673 = vmatpush1.bf16.msra.mxu0 %v5608
        %5674 = vmatprep.subr.bf16.mxu0 %v5611
        %5675 = vmatpush1.bf16.msra.mxu0 %v5610
        %5676 = vmatprep.subr.bf16.mxu0 %v5613
        %5677 = vmatpush1.bf16.msra.mxu0 %v5612
        %5678 = vmatprep.subr.bf16.mxu0 %v5615
        %5679 = vmatpush1.bf16.msra.mxu0 %v5614
        %5680 = vmatprep.subr.bf16.mxu0 %v5617
        %5681 = vmatpush1.bf16.msra.mxu0 %v5616
        %5682 = vmatprep.subr.bf16.mxu0 %v5619
        %5683 = vmatpush1.bf16.msra.mxu0 %v5618
        %5684 = vmatprep.subr.bf16.mxu0 %v5621
        %5685 = vmatpush1.bf16.msra.mxu0 %v5620
        %5686 = vmatprep.subr.bf16.mxu0 %v5623
        %5687 = vmatpush1.bf16.msra.mxu0 %v5622
        %5688 = vmatprep.subr.bf16.mxu0 %v5625
        %5689 = vmatpush1.bf16.msra.mxu0 %v5624
        %5690 = vmatprep.subr.bf16.mxu0 %v5627
        %5691 = vmatpush1.bf16.msra.mxu0 %v5626
        %5692 = vmatprep.subr.bf16.mxu0 %v5629
        %5693 = vmatpush1.bf16.msra.mxu0 %v5628
        %5694 = vmatprep.subr.bf16.mxu0 %v5631
        %5695 = vmatpush1.bf16.msra.mxu0 %v5630
        %5696 = vmatprep.subr.bf16.mxu0 %v5633
        %5697 = vmatpush1.bf16.msra.mxu0 %v5632
        %5698 = vmatprep.subr.bf16.mxu0 %v5635
        %5699 = vmatpush1.bf16.msra.mxu0 %v5634
        %5700 = vmatprep.mubr.bf16.mxu0 %v5365
        %5701 = vmatmul.mubr.bf16.gmra.mrb[0].mxu0 %v5348
        %v5702 = vpop.f32.mrb[0].mxu0
        %v5703 = vadd.f32 0.0, %v5702
        %v5704 = vpop.f32.mrb[0].mxu0
        %v5705 = vadd.f32 0.0, %v5704
        %v5706 = vpop.f32.mrb[0].mxu0
        %v5707 = vadd.f32 0.0, %v5706
        %v5708 = vpop.f32.mrb[0].mxu0
        %v5709 = vadd.f32 0.0, %v5708
        %5710 = vmatprep.mubr.bf16.mxu0 %v5383
        %5711 = vmatmul.mubr.bf16.gmra.mrb[0].mxu0 %v5374
        %v5712 = vpop.f32.mrb[0].mxu0
        %v5713 = vadd.f32 0.0, %v5712
        %v5714 = vpop.f32.mrb[0].mxu0
        %v5715 = vadd.f32 0.0, %v5714
        %v5716 = vpop.f32.mrb[0].mxu0
        %v5717 = vadd.f32 0.0, %v5716
        %v5718 = vpop.f32.mrb[0].mxu0
        %v5719 = vadd.f32 0.0, %v5718
        %5720 = vmatprep.mubr.bf16.mxu0 %v5401
        %5721 = vmatmul.mubr.bf16.gmra.mrb[0].mxu0 %v5392
        %v5722 = vpop.f32.mrb[0].mxu0
        %v5723 = vadd.f32 0.0, %v5722
        %v5724 = vpop.f32.mrb[0].mxu0
        %v5725 = vadd.f32 0.0, %v5724
        %v5726 = vpop.f32.mrb[0].mxu0
        %v5727 = vadd.f32 0.0, %v5726
        %v5728 = vpop.f32.mrb[0].mxu0
        %v5729 = vadd.f32 0.0, %v5728
        %5730 = vmatprep.mubr.bf16.mxu0 %v5419
        %5731 = vmatmul.mubr.bf16.gmra.mrb[0].mxu0 %v5410
        %v5732 = vpop.f32.mrb[0].mxu0
        %v5733 = vadd.f32 0.0, %v5732
        %v5734 = vpop.f32.mrb[0].mxu0
        %v5735 = vadd.f32 0.0, %v5734
        %v5736 = vpop.f32.mrb[0].mxu0
        %v5737 = vadd.f32 0.0, %v5736
        %v5738 = vpop.f32.mrb[0].mxu0
        %v5739 = vadd.f32 0.0, %v5738
        %5740 = vmatprep.mubr.bf16.mxu0 %v5437
        %5741 = vmatmul.mubr.bf16.gmra.mrb[0].mxu0 %v5428
        %v5742 = vpop.f32.mrb[0].mxu0
        %v5743 = vadd.f32 0.0, %v5742
        %v5744 = vpop.f32.mrb[0].mxu0
        %v5745 = vadd.f32 0.0, %v5744
        %v5746 = vpop.f32.mrb[0].mxu0
        %v5747 = vadd.f32 0.0, %v5746
        %v5748 = vpop.f32.mrb[0].mxu0
        %v5749 = vadd.f32 0.0, %v5748
        %5750 = vmatprep.mubr.bf16.mxu0 %v5455
        %5751 = vmatmul.mubr.bf16.gmra.mrb[0].mxu0 %v5446
        %v5752 = vpop.f32.mrb[0].mxu0
        %v5753 = vadd.f32 0.0, %v5752
        %v5754 = vpop.f32.mrb[0].mxu0
        %v5755 = vadd.f32 0.0, %v5754
        %v5756 = vpop.f32.mrb[0].mxu0
        %v5757 = vadd.f32 0.0, %v5756
        %v5758 = vpop.f32.mrb[0].mxu0
        %v5759 = vadd.f32 0.0, %v5758
        %5760 = vmatprep.mubr.bf16.mxu0 %v5473
        %5761 = vmatmul.mubr.bf16.gmra.mrb[0].mxu0 %v5464
        %v5762 = vpop.f32.mrb[0].mxu0
        %v5763 = vadd.f32 0.0, %v5762
        %v5764 = vpop.f32.mrb[0].mxu0
        %v5765 = vadd.f32 0.0, %v5764
        %v5766 = vpop.f32.mrb[0].mxu0
        %v5767 = vadd.f32 0.0, %v5766
        %v5768 = vpop.f32.mrb[0].mxu0
        %v5769 = vadd.f32 0.0, %v5768
        %5770 = vmatprep.mubr.bf16.mxu0 %v5491
        %5771 = vmatmul.mubr.bf16.gmra.mrb[0].mxu0 %v5482
        %v5772 = vpop.f32.mrb[0].mxu0
        %v5773 = vadd.f32 0.0, %v5772
        %v5774 = vpop.f32.mrb[0].mxu0
        %v5775 = vadd.f32 0.0, %v5774
        %v5776 = vpop.f32.mrb[0].mxu0
        %v5777 = vadd.f32 0.0, %v5776
        %v5778 = vpop.f32.mrb[0].mxu0
        %v5779 = vadd.f32 0.0, %v5778
        %5780 = vdwg.mxu0
        %v5781 = vadd.f32 %v5197, %v5703
        %v5782 = vadd.f32 %v5198, %v5705
        %v5783 = vadd.f32 %v5199, %v5707
        %v5784 = vadd.f32 %v5200, %v5709
        %v5785 = vadd.f32 %v5201, %v5713
        %v5786 = vadd.f32 %v5202, %v5715
        %v5787 = vadd.f32 %v5203, %v5717
        %v5788 = vadd.f32 %v5204, %v5719
        %v5789 = vadd.f32 %v5205, %v5723
        %v5790 = vadd.f32 %v5206, %v5725
        %v5791 = vadd.f32 %v5207, %v5727
        %v5792 = vadd.f32 %v5208, %v5729
        %v5793 = vadd.f32 %v5209, %v5733
        %v5794 = vadd.f32 %v5210, %v5735
        %v5795 = vadd.f32 %v5211, %v5737
        %v5796 = vadd.f32 %v5212, %v5739
        %v5797 = vadd.f32 %v5213, %v5743
        %v5798 = vadd.f32 %v5214, %v5745
        %v5799 = vadd.f32 %v5215, %v5747
        %v5800 = vadd.f32 %v5216, %v5749
        %v5801 = vadd.f32 %v5217, %v5753
        %v5802 = vadd.f32 %v5218, %v5755
        %v5803 = vadd.f32 %v5219, %v5757
        %v5804 = vadd.f32 %v5220, %v5759
        %v5805 = vadd.f32 %v5221, %v5763
        %v5806 = vadd.f32 %v5222, %v5765
        %v5807 = vadd.f32 %v5223, %v5767
        %v5808 = vadd.f32 %v5224, %v5769
        %v5809 = vadd.f32 %v5225, %v5773
        %v5810 = vadd.f32 %v5226, %v5775
        %v5811 = vadd.f32 %v5227, %v5777
        %v5812 = vadd.f32 %v5228, %v5779
        %5813 = vst [vmem:[#allocation2] sm:$0xff] %v5781
        %5814 = vst [vmem:[#allocation2 + $0x8] sm:$0xff] %v5782
        %5815 = vst [vmem:[#allocation2 + $0x10] sm:$0xff] %v5783
        %5816 = vst [vmem:[#allocation2 + $0x18] sm:$0xff] %v5784
        %5817 = vst [vmem:[#allocation2 + $0x20] sm:$0xff] %v5785
        %5818 = vst [vmem:[#allocation2 + $0x28] sm:$0xff] %v5786
        %5819 = vst [vmem:[#allocation2 + $0x30] sm:$0xff] %v5787
        %5820 = vst [vmem:[#allocation2 + $0x38] sm:$0xff] %v5788
        %5821 = vst [vmem:[#allocation2 + $0x40] sm:$0xff] %v5789
        %5822 = vst [vmem:[#allocation2 + $0x48] sm:$0xff] %v5790
        %5823 = vst [vmem:[#allocation2 + $0x50] sm:$0xff] %v5791
        %5824 = vst [vmem:[#allocation2 + $0x58] sm:$0xff] %v5792
        %5825 = vst [vmem:[#allocation2 + $0x60] sm:$0xff] %v5793
        %5826 = vst [vmem:[#allocation2 + $0x68] sm:$0xff] %v5794
        %5827 = vst [vmem:[#allocation2 + $0x70] sm:$0xff] %v5795
        %5828 = vst [vmem:[#allocation2 + $0x78] sm:$0xff] %v5796
        %5829 = vst [vmem:[#allocation2 + $0x80] sm:$0xff] %v5797
        %5830 = vst [vmem:[#allocation2 + $0x88] sm:$0xff] %v5798
        %5831 = vst [vmem:[#allocation2 + $0x90] sm:$0xff] %v5799
        %5832 = vst [vmem:[#allocation2 + $0x98] sm:$0xff] %v5800
        %5833 = vst [vmem:[#allocation2 + $0xa0] sm:$0xff] %v5801
        %5834 = vst [vmem:[#allocation2 + $0xa8] sm:$0xff] %v5802
        %5835 = vst [vmem:[#allocation2 + $0xb0] sm:$0xff] %v5803
        %5836 = vst [vmem:[#allocation2 + $0xb8] sm:$0xff] %v5804
        %5837 = vst [vmem:[#allocation2 + $0xc0] sm:$0xff] %v5805
        %5838 = vst [vmem:[#allocation2 + $0xc8] sm:$0xff] %v5806
        %5839 = vst [vmem:[#allocation2 + $0xd0] sm:$0xff] %v5807
        %5840 = vst [vmem:[#allocation2 + $0xd8] sm:$0xff] %v5808
        %5841 = vst [vmem:[#allocation2 + $0xe0] sm:$0xff] %v5809
        %5842 = vst [vmem:[#allocation2 + $0xe8] sm:$0xff] %v5810
        %5843 = vst [vmem:[#allocation2 + $0xf0] sm:$0xff] %v5811
        %5844 = vst [vmem:[#allocation2 + $0xf8] sm:$0xff] %v5812
        %v5845 = vld [vmem:[#allocation2] sm:$0xff]
        %v5846 = vld [vmem:[#allocation2 + $0x8] sm:$0xff]
        %v5847 = vld [vmem:[#allocation2 + $0x10] sm:$0xff]
        %v5848 = vld [vmem:[#allocation2 + $0x18] sm:$0xff]
        %v5849 = vld [vmem:[#allocation2 + $0x20] sm:$0xff]
        %v5850 = vld [vmem:[#allocation2 + $0x28] sm:$0xff]
        %v5851 = vld [vmem:[#allocation2 + $0x30] sm:$0xff]
        %v5852 = vld [vmem:[#allocation2 + $0x38] sm:$0xff]
        %v5853 = vld [vmem:[#allocation2 + $0x40] sm:$0xff]
        %v5854 = vld [vmem:[#allocation2 + $0x48] sm:$0xff]
        %v5855 = vld [vmem:[#allocation2 + $0x50] sm:$0xff]
        %v5856 = vld [vmem:[#allocation2 + $0x58] sm:$0xff]
        %v5857 = vld [vmem:[#allocation2 + $0x60] sm:$0xff]
        %v5858 = vld [vmem:[#allocation2 + $0x68] sm:$0xff]
        %v5859 = vld [vmem:[#allocation2 + $0x70] sm:$0xff]
        %v5860 = vld [vmem:[#allocation2 + $0x78] sm:$0xff]
        %v5861 = vld [vmem:[#allocation2 + $0x80] sm:$0xff]
        %v5862 = vld [vmem:[#allocation2 + $0x88] sm:$0xff]
        %v5863 = vld [vmem:[#allocation2 + $0x90] sm:$0xff]
        %v5864 = vld [vmem:[#allocation2 + $0x98] sm:$0xff]
        %v5865 = vld [vmem:[#allocation2 + $0xa0] sm:$0xff]
        %v5866 = vld [vmem:[#allocation2 + $0xa8] sm:$0xff]
        %v5867 = vld [vmem:[#allocation2 + $0xb0] sm:$0xff]
        %v5868 = vld [vmem:[#allocation2 + $0xb8] sm:$0xff]
        %v5869 = vld [vmem:[#allocation2 + $0xc0] sm:$0xff]
        %v5870 = vld [vmem:[#allocation2 + $0xc8] sm:$0xff]
        %v5871 = vld [vmem:[#allocation2 + $0xd0] sm:$0xff]
        %v5872 = vld [vmem:[#allocation2 + $0xd8] sm:$0xff]
        %v5873 = vld [vmem:[#allocation2 + $0xe0] sm:$0xff]
        %v5874 = vld [vmem:[#allocation2 + $0xe8] sm:$0xff]
        %v5875 = vld [vmem:[#allocation2 + $0xf0] sm:$0xff]
        %v5876 = vld [vmem:[#allocation2 + $0xf8] sm:$0xff]
        %v5877 = vld [vmem:[#allocation8] sm:$0x3]
        %v5879 = vlaneseq
        %v5880 = vshrl.u32 %v5879, 7
        %v5881 = vsub.s32 0, %v5880
        %v5882 = vrot.slane %v5877, %v5881
        %v5883 = vlaneseq
        %v5884 = vshrl.u32 %v5883, 7
        %v5885 = vsub.s32 1, %v5884
        %v5886 = vrot.slane %v5877, %v5885
        %v5889 = vadd.f32 %v5845, %v5882
        %v5890 = vadd.f32 %v5846, %v5886
        %v5891 = vadd.f32 %v5847, %v5882
        %v5892 = vadd.f32 %v5848, %v5886
        %v5893 = vadd.f32 %v5849, %v5882
        %v5894 = vadd.f32 %v5850, %v5886
        %v5895 = vadd.f32 %v5851, %v5882
        %v5896 = vadd.f32 %v5852, %v5886
        %v5897 = vadd.f32 %v5853, %v5882
        %v5898 = vadd.f32 %v5854, %v5886
        %v5899 = vadd.f32 %v5855, %v5882
        %v5900 = vadd.f32 %v5856, %v5886
        %v5901 = vadd.f32 %v5857, %v5882
        %v5902 = vadd.f32 %v5858, %v5886
        %v5903 = vadd.f32 %v5859, %v5882
        %v5904 = vadd.f32 %v5860, %v5886
        %v5905 = vadd.f32 %v5861, %v5882
        %v5906 = vadd.f32 %v5862, %v5886
        %v5907 = vadd.f32 %v5863, %v5882
        %v5908 = vadd.f32 %v5864, %v5886
        %v5909 = vadd.f32 %v5865, %v5882
        %v5910 = vadd.f32 %v5866, %v5886
        %v5911 = vadd.f32 %v5867, %v5882
        %v5912 = vadd.f32 %v5868, %v5886
        %v5913 = vadd.f32 %v5869, %v5882
        %v5914 = vadd.f32 %v5870, %v5886
        %v5915 = vadd.f32 %v5871, %v5882
        %v5916 = vadd.f32 %v5872, %v5886
        %v5917 = vadd.f32 %v5873, %v5882
        %v5918 = vadd.f32 %v5874, %v5886
        %v5919 = vadd.f32 %v5875, %v5882
        %v5920 = vadd.f32 %v5876, %v5886
        %v5921 = vmax.f32 %v5889, 0.0
        %v5922 = vmax.f32 %v5890, 0.0
        %v5923 = vmax.f32 %v5891, 0.0
        %v5924 = vmax.f32 %v5892, 0.0
        %v5925 = vmax.f32 %v5893, 0.0
        %v5926 = vmax.f32 %v5894, 0.0
        %v5927 = vmax.f32 %v5895, 0.0
        %v5928 = vmax.f32 %v5896, 0.0
        %v5929 = vmax.f32 %v5897, 0.0
        %v5930 = vmax.f32 %v5898, 0.0
        %v5931 = vmax.f32 %v5899, 0.0
        %v5932 = vmax.f32 %v5900, 0.0
        %v5933 = vmax.f32 %v5901, 0.0
        %v5934 = vmax.f32 %v5902, 0.0
        %v5935 = vmax.f32 %v5903, 0.0
        %v5936 = vmax.f32 %v5904, 0.0
        %v5937 = vmax.f32 %v5905, 0.0
        %v5938 = vmax.f32 %v5906, 0.0
        %v5939 = vmax.f32 %v5907, 0.0
        %v5940 = vmax.f32 %v5908, 0.0
        %v5941 = vmax.f32 %v5909, 0.0
        %v5942 = vmax.f32 %v5910, 0.0
        %v5943 = vmax.f32 %v5911, 0.0
        %v5944 = vmax.f32 %v5912, 0.0
        %v5945 = vmax.f32 %v5913, 0.0
        %v5946 = vmax.f32 %v5914, 0.0
        %v5947 = vmax.f32 %v5915, 0.0
        %v5948 = vmax.f32 %v5916, 0.0
        %v5949 = vmax.f32 %v5917, 0.0
        %v5950 = vmax.f32 %v5918, 0.0
        %v5951 = vmax.f32 %v5919, 0.0
        %v5952 = vmax.f32 %v5920, 0.0
        %v5953 = vpack.c.bf16 %v5923, %v5921
        %v5954 = vpack.c.bf16 %v5924, %v5922
        %v5955 = vpack.c.bf16 %v5927, %v5925
        %v5956 = vpack.c.bf16 %v5928, %v5926
        %v5957 = vpack.c.bf16 %v5931, %v5929
        %v5958 = vpack.c.bf16 %v5932, %v5930
        %v5959 = vpack.c.bf16 %v5935, %v5933
        %v5960 = vpack.c.bf16 %v5936, %v5934
        %v5961 = vpack.c.bf16 %v5939, %v5937
        %v5962 = vpack.c.bf16 %v5940, %v5938
        %v5963 = vpack.c.bf16 %v5943, %v5941
        %v5964 = vpack.c.bf16 %v5944, %v5942
        %v5965 = vpack.c.bf16 %v5947, %v5945
        %v5966 = vpack.c.bf16 %v5948, %v5946
        %v5967 = vpack.c.bf16 %v5951, %v5949
        %v5968 = vpack.c.bf16 %v5952, %v5950
        %v5969 = vld [vmem:[#allocation9] sm:$0xf]
        %v5970 = vld [vmem:[#allocation9 + $0x4] sm:$0xf]
        %v5971 = vld [vmem:[#allocation9 + $0x8] sm:$0xf]
        %v5972 = vld [vmem:[#allocation9 + $0xc] sm:$0xf]
        %v5973 = vld [vmem:[#allocation9 + $0x10] sm:$0xf]
        %v5974 = vld [vmem:[#allocation9 + $0x14] sm:$0xf]
        %v5975 = vld [vmem:[#allocation9 + $0x18] sm:$0xf]
        %v5976 = vld [vmem:[#allocation9 + $0x1c] sm:$0xf]
        %v5977 = vld [vmem:[#allocation9 + $0x20] sm:$0xf]
        %v5978 = vld [vmem:[#allocation9 + $0x24] sm:$0xf]
        %v5979 = vld [vmem:[#allocation9 + $0x28] sm:$0xf]
        %v5980 = vld [vmem:[#allocation9 + $0x2c] sm:$0xf]
        %v5981 = vld [vmem:[#allocation9 + $0x30] sm:$0xf]
        %v5982 = vld [vmem:[#allocation9 + $0x34] sm:$0xf]
        %v5983 = vld [vmem:[#allocation9 + $0x38] sm:$0xf]
        %v5984 = vld [vmem:[#allocation9 + $0x3c] sm:$0xf]
        %v5985 = vld [vmem:[#allocation9 + $0x40] sm:$0xf]
        %v5986 = vld [vmem:[#allocation9 + $0x44] sm:$0xf]
        %v5987 = vld [vmem:[#allocation9 + $0x48] sm:$0xf]
        %v5988 = vld [vmem:[#allocation9 + $0x4c] sm:$0xf]
        %v5989 = vld [vmem:[#allocation9 + $0x50] sm:$0xf]
        %v5990 = vld [vmem:[#allocation9 + $0x54] sm:$0xf]
        %v5991 = vld [vmem:[#allocation9 + $0x58] sm:$0xf]
        %v5992 = vld [vmem:[#allocation9 + $0x5c] sm:$0xf]
        %v5993 = vld [vmem:[#allocation9 + $0x60] sm:$0xf]
        %v5994 = vld [vmem:[#allocation9 + $0x64] sm:$0xf]
        %v5995 = vld [vmem:[#allocation9 + $0x68] sm:$0xf]
        %v5996 = vld [vmem:[#allocation9 + $0x6c] sm:$0xf]
        %v5997 = vld [vmem:[#allocation9 + $0x70] sm:$0xf]
        %v5998 = vld [vmem:[#allocation9 + $0x74] sm:$0xf]
        %v5999 = vld [vmem:[#allocation9 + $0x78] sm:$0xf]
        %v6000 = vld [vmem:[#allocation9 + $0x7c] sm:$0xf]
        %v6001 = vld [vmem:[#allocation11] sm:$0x1]
        %v6003 = vlaneseq
        %v6004 = vshrl.u32 %v6003, 7
        %v6005 = vsub.s32 0, %v6004
        %v6006 = vrot.slane %v6001, %v6005
        %v6040 = vunpack.c.l.b16 %v5969
        %v6041 = vunpack.c.l.b16 %v5970
        %v6042 = vunpack.c.l.b16 %v5971
        %v6043 = vunpack.c.l.b16 %v5972
        %v6044 = vunpack.c.l.b16 %v5973
        %v6045 = vunpack.c.l.b16 %v5974
        %v6046 = vunpack.c.l.b16 %v5975
        %v6047 = vunpack.c.l.b16 %v5976
        %v6048 = vunpack.c.l.b16 %v5977
        %v6049 = vunpack.c.l.b16 %v5978
        %v6050 = vunpack.c.l.b16 %v5979
        %v6051 = vunpack.c.l.b16 %v5980
        %v6052 = vunpack.c.l.b16 %v5981
        %v6053 = vunpack.c.l.b16 %v5982
        %v6054 = vunpack.c.l.b16 %v5983
        %v6055 = vunpack.c.l.b16 %v5984
        %v6056 = vunpack.c.l.b16 %v5985
        %v6057 = vunpack.c.l.b16 %v5986
        %v6058 = vunpack.c.l.b16 %v5987
        %v6059 = vunpack.c.l.b16 %v5988
        %v6060 = vunpack.c.l.b16 %v5989
        %v6061 = vunpack.c.l.b16 %v5990
        %v6062 = vunpack.c.l.b16 %v5991
        %v6063 = vunpack.c.l.b16 %v5992
        %v6064 = vunpack.c.l.b16 %v5993
        %v6065 = vunpack.c.l.b16 %v5994
        %v6066 = vunpack.c.l.b16 %v5995
        %v6067 = vunpack.c.l.b16 %v5996
        %v6068 = vunpack.c.l.b16 %v5997
        %v6069 = vunpack.c.l.b16 %v5998
        %v6070 = vunpack.c.l.b16 %v5999
        %v6071 = vunpack.c.l.b16 %v6000
        %v6072 = vpack.c.b16 %v6041, %v6040
        %v6073 = vpack.c.b16 %v6043, %v6042
        %v6074 = vpack.c.b16 %v6045, %v6044
        %v6075 = vpack.c.b16 %v6047, %v6046
        %v6076 = vpack.c.b16 %v6049, %v6048
        %v6077 = vpack.c.b16 %v6051, %v6050
        %v6078 = vpack.c.b16 %v6053, %v6052
        %v6079 = vpack.c.b16 %v6055, %v6054
        %v6080 = vpack.c.b16 %v6057, %v6056
        %v6081 = vpack.c.b16 %v6059, %v6058
        %v6082 = vpack.c.b16 %v6061, %v6060
        %v6083 = vpack.c.b16 %v6063, %v6062
        %v6084 = vpack.c.b16 %v6065, %v6064
        %v6085 = vpack.c.b16 %v6067, %v6066
        %v6086 = vpack.c.b16 %v6069, %v6068
        %v6087 = vpack.c.b16 %v6071, %v6070
        %6104 = vmatprep.subr.bf16.mxu0 0
        %6105 = vmatpush1.bf16.msra.mxu0 %v6072
        %6106 = vmatprep.subr.bf16.mxu0 0
        %6107 = vmatpush1.bf16.msra.mxu0 %v6073
        %6108 = vmatprep.subr.bf16.mxu0 0
        %6109 = vmatpush1.bf16.msra.mxu0 %v6074
        %6110 = vmatprep.subr.bf16.mxu0 0
        %6111 = vmatpush1.bf16.msra.mxu0 %v6075
        %6112 = vmatprep.subr.bf16.mxu0 0
        %6113 = vmatpush1.bf16.msra.mxu0 %v6076
        %6114 = vmatprep.subr.bf16.mxu0 0
        %6115 = vmatpush1.bf16.msra.mxu0 %v6077
        %6116 = vmatprep.subr.bf16.mxu0 0
        %6117 = vmatpush1.bf16.msra.mxu0 %v6078
        %6118 = vmatprep.subr.bf16.mxu0 0
        %6119 = vmatpush1.bf16.msra.mxu0 %v6079
        %6120 = vmatprep.subr.bf16.mxu0 0
        %6121 = vmatpush1.bf16.msra.mxu0 %v6080
        %6122 = vmatprep.subr.bf16.mxu0 0
        %6123 = vmatpush1.bf16.msra.mxu0 %v6081
        %6124 = vmatprep.subr.bf16.mxu0 0
        %6125 = vmatpush1.bf16.msra.mxu0 %v6082
        %6126 = vmatprep.subr.bf16.mxu0 0
        %6127 = vmatpush1.bf16.msra.mxu0 %v6083
        %6128 = vmatprep.subr.bf16.mxu0 0
        %6129 = vmatpush1.bf16.msra.mxu0 %v6084
        %6130 = vmatprep.subr.bf16.mxu0 0
        %6131 = vmatpush1.bf16.msra.mxu0 %v6085
        %6132 = vmatprep.subr.bf16.mxu0 0
        %6133 = vmatpush1.bf16.msra.mxu0 %v6086
        %6134 = vmatprep.subr.bf16.mxu0 0
        %6135 = vmatpush1.bf16.msra.mxu0 %v6087
        %6136 = vmatprep.mubr.bf16.mxu0 %v5954
        %6137 = vmatmul.mubr.bf16.gmra.mrb[0].mxu0 %v5953
        %v6138 = vpop.f32.mrb[0].mxu0
        %v6139 = vadd.f32 %v6006, %v6138
        %v6140 = vpop.f32.mrb[0].mxu0
        %v6141 = vpop.f32.mrb[0].mxu0
        %v6142 = vadd.f32 %v6006, %v6141
        %v6143 = vpop.f32.mrb[0].mxu0
        %6144 = vmatprep.mubr.bf16.mxu0 %v5956
        %6145 = vmatmul.mubr.bf16.gmra.mrb[0].mxu0 %v5955
        %v6146 = vpop.f32.mrb[0].mxu0
        %v6147 = vadd.f32 %v6006, %v6146
        %v6148 = vpop.f32.mrb[0].mxu0
        %v6149 = vpop.f32.mrb[0].mxu0
        %v6150 = vadd.f32 %v6006, %v6149
        %v6151 = vpop.f32.mrb[0].mxu0
        %6152 = vmatprep.mubr.bf16.mxu0 %v5958
        %6153 = vmatmul.mubr.bf16.gmra.mrb[0].mxu0 %v5957
        %v6154 = vpop.f32.mrb[0].mxu0
        %v6155 = vadd.f32 %v6006, %v6154
        %v6156 = vpop.f32.mrb[0].mxu0
        %v6157 = vpop.f32.mrb[0].mxu0
        %v6158 = vadd.f32 %v6006, %v6157
        %v6159 = vpop.f32.mrb[0].mxu0
        %6160 = vmatprep.mubr.bf16.mxu0 %v5960
        %6161 = vmatmul.mubr.bf16.gmra.mrb[0].mxu0 %v5959
        %v6162 = vpop.f32.mrb[0].mxu0
        %v6163 = vadd.f32 %v6006, %v6162
        %v6164 = vpop.f32.mrb[0].mxu0
        %v6165 = vpop.f32.mrb[0].mxu0
        %v6166 = vadd.f32 %v6006, %v6165
        %v6167 = vpop.f32.mrb[0].mxu0
        %6168 = vmatprep.mubr.bf16.mxu0 %v5962
        %6169 = vmatmul.mubr.bf16.gmra.mrb[0].mxu0 %v5961
        %v6170 = vpop.f32.mrb[0].mxu0
        %v6171 = vadd.f32 %v6006, %v6170
        %v6172 = vpop.f32.mrb[0].mxu0
        %v6173 = vpop.f32.mrb[0].mxu0
        %v6174 = vadd.f32 %v6006, %v6173
        %v6175 = vpop.f32.mrb[0].mxu0
        %6176 = vmatprep.mubr.bf16.mxu0 %v5964
        %6177 = vmatmul.mubr.bf16.gmra.mrb[0].mxu0 %v5963
        %v6178 = vpop.f32.mrb[0].mxu0
        %v6179 = vadd.f32 %v6006, %v6178
        %v6180 = vpop.f32.mrb[0].mxu0
        %v6181 = vpop.f32.mrb[0].mxu0
        %v6182 = vadd.f32 %v6006, %v6181
        %v6183 = vpop.f32.mrb[0].mxu0
        %6184 = vmatprep.mubr.bf16.mxu0 %v5966
        %6185 = vmatmul.mubr.bf16.gmra.mrb[0].mxu0 %v5965
        %v6186 = vpop.f32.mrb[0].mxu0
        %v6187 = vadd.f32 %v6006, %v6186
        %v6188 = vpop.f32.mrb[0].mxu0
        %v6189 = vpop.f32.mrb[0].mxu0
        %v6190 = vadd.f32 %v6006, %v6189
        %v6191 = vpop.f32.mrb[0].mxu0
        %6192 = vmatprep.mubr.bf16.mxu0 %v5968
        %6193 = vmatmul.mubr.bf16.gmra.mrb[0].mxu0 %v5967
        %v6194 = vpop.f32.mrb[0].mxu0
        %v6195 = vadd.f32 %v6006, %v6194
        %v6196 = vpop.f32.mrb[0].mxu0
        %v6197 = vpop.f32.mrb[0].mxu0
        %v6198 = vadd.f32 %v6006, %v6197
        %v6199 = vpop.f32.mrb[0].mxu0
        %6200 = vdwg.mxu0
        %6201 = vst [vmem:[%s271] sm:$0xff] %v6139
        %6202 = vst [vmem:[%s271 + $0x8] sm:$0xff] %v6142
        %6203 = vst [vmem:[%s271 + $0x10] sm:$0xff] %v6147
        %6204 = vst [vmem:[%s271 + $0x18] sm:$0xff] %v6150
        %6205 = vst [vmem:[%s271 + $0x20] sm:$0xff] %v6155
        %6206 = vst [vmem:[%s271 + $0x28] sm:$0xff] %v6158
        %6207 = vst [vmem:[%s271 + $0x30] sm:$0xff] %v6163
        %6208 = vst [vmem:[%s271 + $0x38] sm:$0xff] %v6166
        %6209 = vst [vmem:[%s271 + $0x40] sm:$0xff] %v6171
        %6210 = vst [vmem:[%s271 + $0x48] sm:$0xff] %v6174
        %6211 = vst [vmem:[%s271 + $0x50] sm:$0xff] %v6179
        %6212 = vst [vmem:[%s271 + $0x58] sm:$0xff] %v6182
        %6213 = vst [vmem:[%s271 + $0x60] sm:$0xff] %v6187
        %6214 = vst [vmem:[%s271 + $0x68] sm:$0xff] %v6190
        %6215 = vst [vmem:[%s271 + $0x70] sm:$0xff] %v6195
        %6216 = vst [vmem:[%s271 + $0x78] sm:$0xff] %v6198
        %s6217 = sand.u32 %s135, 1
        %s6218 = scalar_lea.sflag [#allocation5], %s6217
        %s6219 = sand.u32 %s135, 1
        %s6220 = smul.addr %s6219, 128
        %s6221 = scalar_lea.vmem [#allocation12], %s6220
        // Predicated region
        $region61: #{tpu_custom_call.1} parent=39 // pred_check
          %p6222 = pneg %p145
        $region62: #{tpu_custom_call.1} parent=39 // pred_check_branch
          %6224 = sbr.rel (%p6222) target = $region64
        $region63: #{tpu_custom_call.1} parent=39 // pred_region
          %s6225 = smul.u32 16, %s22
          %s6227 = ssub.s32 2048, 2048
          %6228 = vsyncadd %s6218, %s6227
          %s6229 = smul.addr %s6225, 128
          %s6230 = scalar_lea.hbm %s5, %s6229
          %s6231 = sshll.u32 %s6221, 4
          %s6232 = int_to_ptr.vmem [resolvable:$true] %s6231
          %6237 = dma.vmem_to_hbm [thread:$0]  %s6232, 2048, %s6230, %s6218, 128, 128, 8
        $region64: #{tpu_custom_call.1} parent=39 // pred_fallthru
          _
      $region40: #{tpu_custom_call.1} parent=5 // pred_fallthru
        _
      %p6238 = scmp.le.s32.totalorder 2, %s17
      // Predicated region
      $region65: #{tpu_custom_call.1} parent=5 // pred_check
        %p6239 = pneg %p6238
      $region66: #{tpu_custom_call.1} parent=5 // pred_check_branch
        %6241 = sbr.rel (%p6239) target = $region68
      $region67: #{tpu_custom_call.1} parent=5 // pred_region
        %s6242 = ssub.s32 %s17, 2
        // Predicated region
        $region69: #{tpu_custom_call.1} parent=67 // pred_check
          %p6243 = pneg %p151
        $region70: #{tpu_custom_call.1} parent=67 // pred_check_branch
          %6245 = sbr.rel (%p6243) target = $region72
        $region71: #{tpu_custom_call.1} parent=67 // pred_region
          %s6246 = sand.u32 %s136, 1
          %s6247 = scalar_lea.sflag [#allocation5], %s6246
          %s6248 = sand.u32 %s136, 1
          %s6249 = smul.addr %s6248, 128
          %s6250 = scalar_lea.vmem [#allocation12], %s6249
          %6251 = dma.done %s6247, 2048
        $region72: #{tpu_custom_call.1} parent=67 // pred_fallthru
          _
      $region68: #{tpu_custom_call.1} parent=5 // pred_fallthru
        _
    $region6: #{tpu_custom_call.1} parent=1 // loop_footer
      %s21 = sadd.s32 1, %s17
    $region7: #{tpu_custom_call.1} parent=1 // loop_footer_branch
      %16 = sbr.rel target = $region3
    $region8: #{tpu_custom_call.1} parent=1 // loop_exit
      _
    %6252 = vsyncpa [#allocation4], 1
    %s6253 = scalar_lea.sflag [#allocation4], 1
    %6254 = vsyncpa %s6253, 1
    %6255 = vsyncpa [#allocation7], 1
    %6256 = vsyncpa [#allocation10], 1
    %6257 = vsyncpa [#allocation5], 1
    %s6258 = scalar_lea.sflag [#allocation5], 1
    %6259 = vsyncpa %s6258, 1

</llo_original>
